<compile_context>
chip_gen: v6e
topology: v6e:2x2x1
jax: 0.10.0
libtpu: 0.0.40
codegen_flags: <defaults>
</compile_context>

<pallas_src>
import numpy as np

import jax
import jax.numpy as jnp
from jax.experimental import pallas as pl
from jax.experimental.pallas import tpu as pltpu


# ----------------------------------------------------------------------------
# Parameter packing: one (rows, 128) f32 buffer, each param padded to 8 rows.
# ----------------------------------------------------------------------------
def pack_params(named_params):
    offs = {}
    rows = 0
    for name, p in named_params:
        r, c = p.shape
        assert c <= 128
        offs[name] = (rows, r, c)
        rows += -(-r // 8) * 8                       # pad each param to 8-row blocks
    buf = np.zeros((rows, 128), np.float32)
    for name, p in named_params:
        off, r, c = offs[name]
        buf[off:off + r, :c] = np.asarray(p, np.float32)
    return jnp.asarray(buf), offs, rows


# ----------------------------------------------------------------------------
# Fused forward: single pallas_call, grid over batched graph instances.
# ----------------------------------------------------------------------------
def build_forward(N, K, c_in, dim_pe, offs, p_rows):
    SK = 2 * K            # (+x, -x) * K eigenvectors
    R = SK * N            # flattened (sign, k, node) row count

    def param(p_ref, name):
        off, r, c = offs[name]
        return p_ref[off:off + r, 0:c]               # static, sublane-aligned view

    def kernel(a_ref, x_ref, n_ref, p_ref, o_ref):
        a = a_ref[0]                                  # (N, N) = adj + I (self-term folded)
        a_b = jnp.broadcast_to(a, (SK, N, N))         # hoisted; shared across sign/k
        h = x_ref[0]                                  # (SK*N, c_in), rows = (s*K+k)*N + n

        def gin_layer(h_flat, wn1, bn1, wn2, bn2):
            c = h_flat.shape[1]
            h3 = h_flat.reshape(SK, N, c)             # split leading dim (layout-free)
            # GINConv (eps=0): (A + I) @ x per sign/k slice, as one batched matmul.
            agg = jnp.einsum('snm,smc->snc', a_b, h3,
                             preferred_element_type=jnp.float32)
            agg = agg.reshape(R, c)                   # merge leading dims (layout-free)
            z = jnp.dot(agg, param(p_ref, wn1),
                        preferred_element_type=jnp.float32) + param(p_ref, bn1)
            z = jnp.maximum(z, 0.0)
            return jnp.dot(z, param(p_ref, wn2),
                           preferred_element_type=jnp.float32) + param(p_ref, bn2)

        h = gin_layer(h, 'w11', 'b11', 'w12', 'b12')
        h = gin_layer(h, 'w21', 'b21', 'w22', 'b22')
        h = gin_layer(h, 'w31', 'b31', 'w32', 'b32')  # (R, c_out)

        # Masked deep-set sum over (sign, k): mask depends on k only, k < n_nodes[n].
        c_out = h.shape[1]
        h3 = h.reshape(SK, N, c_out)
        j3 = jax.lax.broadcasted_iota(jnp.int32, (SK, N, 1), 0)
        k_of_j = (j3 & (K - 1)) if (K & (K - 1)) == 0 else (j3 % K)   # bit-op, no idiv
        mask3 = (k_of_j < n_ref[0]).astype(jnp.float32)               # (SK, N, 1)
        s = jnp.sum(h3 * mask3, axis=0)                               # (N, c_out)

        # rho MLP (wr2/br2 zero-padded to 128 cols -> lane-dense, unmasked store).
        z = jnp.maximum(jnp.dot(s, param(p_ref, 'wr1'),
                                preferred_element_type=jnp.float32)
                        + param(p_ref, 'br1'), 0.0)
        o_ref[0] = jnp.dot(z, param(p_ref, 'wr2'),
                           preferred_element_type=jnp.float32) + param(p_ref, 'br2')

    @jax.jit
    def forward(x_gnkc, adj_i_g, n_nodes_g, packed):
        G = x_gnkc.shape[0]
        # (node, k, c) -> rows ordered (sign, k, node): row = (s*K + k)*N + n.
        xk = jnp.transpose(x_gnkc, (0, 2, 1, 3))               # (G, K, N, c_in)
        x0 = jnp.concatenate([xk[:, None], -xk[:, None]], 1)   # (G, 2, K, N, c_in)
        x0 = x0.reshape(G, R, c_in)

        out = pl.pallas_call(
            kernel,
            out_shape=jax.ShapeDtypeStruct((G, N, 128), jnp.float32),
            grid=(G,),
            in_specs=[
                pl.BlockSpec((1, N, N), lambda g: (g, 0, 0)),        # adj + I
                pl.BlockSpec((1, R, c_in), lambda g: (g, 0, 0)),     # +x/-x features
                pl.BlockSpec((1, N, 1), lambda g: (g, 0, 0)),        # per-node graph size
                pl.BlockSpec((p_rows, 128), lambda g: (0, 0)),       # weights, DMA'd once
            ],
            out_specs=pl.BlockSpec((1, N, 128), lambda g: (g, 0, 0)),
            compiler_params=pltpu.CompilerParams(
                dimension_semantics=("parallel",)),
        )(adj_i_g, x0, n_nodes_g, packed)
        return out[..., :dim_pe]

    return forward


# ----------------------------------------------------------------------------
# Pure-JAX reference (mirrors the PyTorch module in eval mode).
# ----------------------------------------------------------------------------
def _gin_conv_ref(x, adj, w1, b1, w2, b2):
    agg = x + jnp.einsum("ij,kjc->kic", adj, x)
    h = jnp.maximum(agg @ w1 + b1, 0.0)
    return h @ w2 + b2


def _forward_ref(x_nkc, adj, n_per_node, gin_layers, rho_params, K):
    x = jnp.transpose(x_nkc, (1, 0, 2))                       # (K, N, Cin)
    xp, xn = x, -x
    for (w1, b1, w2, b2) in gin_layers:
        xp = _gin_conv_ref(xp, adj, w1, b1, w2, b2)
        xn = _gin_conv_ref(xn, adj, w1, b1, w2, b2)
    x = jnp.transpose(xp + xn, (1, 0, 2))                     # (N, K, Cout)
    mask = (jnp.arange(K, dtype=jnp.int32)[None, :] < n_per_node[:, None]).astype(x.dtype)
    x = jnp.sum(x * mask[:, :, None], axis=1)                 # (N, Cout)
    wr1, br1, wr2, br2 = rho_params
    return jnp.maximum(x @ wr1 + br1, 0.0) @ wr2 + br2


# ----------------------------------------------------------------------------
# Main
# ----------------------------------------------------------------------------
if __name__ == "__main__":
    N = 16          # total nodes per instance (two graphs per instance)
    K = 8           # eigenvectors
    C_IN = 4        # in_channels
    HID = 32        # hidden_channels
    C_OUT = 16      # out_channels
    DIM_PE = 8      # dim_pe
    G = 4           # batched graph instances (grid axis, "parallel")

    key = jax.random.PRNGKey(0)
    keys = jax.random.split(key, 16)

    x = jax.random.normal(keys[0], (G, N, K, C_IN), dtype=jnp.float32)

    # Per-instance pair of undirected ring graphs of varying sizes (exercises k<n mask).
    sizes = [(10, 6), (9, 7), (12, 4), (8, 8)]
    adjs, adjs_i, n_nodes = [], [], []
    for (s0, s1) in sizes:
        assert s0 + s1 == N
        src0 = np.arange(s0); dst0 = (src0 + 1) % s0
        src1 = s0 + np.arange(s1); dst1 = s0 + (np.arange(s1) + 1) % s1
        src = np.concatenate([src0, dst0, src1, dst1])
        dst = np.concatenate([dst0, src0, dst1, src1])
        a = np.zeros((N, N), np.float32)
        np.add.at(a, (dst, src), 1.0)                 # A[dst, src] = #edges(src -> dst)
        adjs.append(a)
        adjs_i.append(a + np.eye(N, dtype=np.float32))  # fold GIN self-term once
        n_nodes.append(np.array([s0] * s0 + [s1] * s1, np.int32))
    adj_g = jnp.asarray(np.stack(adjs))                       # (G,N,N) reference adj
    adj_i_g = jnp.asarray(np.stack(adjs_i))                   # (G,N,N) adj + I (kernel)
    n_nodes_g = jnp.asarray(np.stack(n_nodes)).reshape(G, N, 1)

    # Deterministic synthetic weights.
    def lin(kw, kb, fan_in, fan_out):
        w = jax.random.normal(kw, (fan_in, fan_out), jnp.float32) * (1.0 / np.sqrt(fan_in))
        b = jax.random.normal(kb, (1, fan_out), jnp.float32) * 0.01
        return w, b

    dims = [(C_IN, HID, HID), (HID, HID, HID), (HID, HID, C_OUT)]
    gin_layers, ki = [], 1
    for (ci, h, co) in dims:
        w1, b1 = lin(keys[ki], keys[ki + 1], ci, h)
        w2, b2 = lin(keys[ki + 2], keys[ki + 3], h, co)
        gin_layers.append((w1, b1, w2, b2))
        ki += 4
    wr1, br1 = lin(keys[13], keys[14], C_OUT, HID)
    wr2, br2 = lin(keys[15], keys[0], HID, DIM_PE)
    rho_params = (wr1, br1, wr2, br2)

    # Lane-dense output: zero-pad rho's last layer to 128 output columns.
    wr2p = np.zeros((HID, 128), np.float32); wr2p[:, :DIM_PE] = np.asarray(wr2)
    br2p = np.zeros((1, 128), np.float32);   br2p[:, :DIM_PE] = np.asarray(br2)

    named = [("w11", gin_layers[0][0]), ("b11", gin_layers[0][1]),
             ("w12", gin_layers[0][2]), ("b12", gin_layers[0][3]),
             ("w21", gin_layers[1][0]), ("b21", gin_layers[1][1]),
             ("w22", gin_layers[1][2]), ("b22", gin_layers[1][3]),
             ("w31", gin_layers[2][0]), ("b31", gin_layers[2][1]),
             ("w32", gin_layers[2][2]), ("b32", gin_layers[2][3]),
             ("wr1", wr1), ("br1", br1), ("wr2", wr2p), ("br2", br2p)]
    packed, offs, p_rows = pack_params(named)

    forward = build_forward(N, K, C_IN, DIM_PE, offs, p_rows)
    out = jax.block_until_ready(forward(x, adj_i_g, n_nodes_g, packed))

    for g in range(G):
        ref = _forward_ref(x[g], adj_g[g], jnp.asarray(n_nodes[g]),
                           gin_layers, rho_params, K)
        np.testing.assert_allclose(np.asarray(out[g]), np.asarray(ref),
                                   rtol=1e-3, atol=1e-3)
    assert out.shape == (G, N, DIM_PE)
    print("KERNEL_OK")
</pallas_src>

<mosaic_0001>
module attributes {stable_mosaic.version = 11 : i64} {
  func.func @kernel(%arg0: i32, %arg1: memref<1x16x16xf32, #tpu.memory_space<vmem>>, %arg2: memref<1x256x4xf32, #tpu.memory_space<vmem>>, %arg3: memref<1x16x1xi32, #tpu.memory_space<vmem>>, %arg4: memref<280x128xf32, #tpu.memory_space<vmem>>, %arg5: memref<1x16x128xf32, #tpu.memory_space<vmem>>) attributes {dimension_semantics = [#tpu.dimension_semantics<parallel>], iteration_bounds = array<i64: 4>, scalar_prefetch = 0 : i64, scratch_operands = 0 : i64, tpu.core_type = #tpu.core_type<tc>, window_params = [{transform_indices = @transform_0, window_bounds = array<i64: 1, 16, 16>}, {transform_indices = @transform_1, window_bounds = array<i64: 1, 256, 4>}, {transform_indices = @transform_2, window_bounds = array<i64: 1, 16, 1>}, {pipeline_mode = #tpu.pipeline_mode<synchronous>, transform_indices = @transform_3, window_bounds = array<i64: 280, 128>}, {transform_indices = @transform_4, window_bounds = array<i64: 1, 16, 128>}]} {
    %c0 = arith.constant 0 : index
    %c0_0 = arith.constant 0 : index
    %c0_1 = arith.constant 0 : index
    %0 = vector.load %arg1[%c0, %c0_0, %c0_1] : memref<1x16x16xf32, #tpu.memory_space<vmem>>, vector<1x16x16xf32>
    %1 = vector.shape_cast %0 : vector<1x16x16xf32> to vector<16x16xf32>
    %2 = vector.shape_cast %1 : vector<16x16xf32> to vector<1x16x16xf32>
    %3 = vector.broadcast %2 : vector<1x16x16xf32> to vector<16x16x16xf32>
    %c0_2 = arith.constant 0 : index
    %c0_3 = arith.constant 0 : index
    %c0_4 = arith.constant 0 : index
    %4 = vector.load %arg2[%c0_2, %c0_3, %c0_4] : memref<1x256x4xf32, #tpu.memory_space<vmem>>, vector<1x256x4xf32>
    %5 = vector.shape_cast %4 : vector<1x256x4xf32> to vector<256x4xf32>
    %6 = vector.shape_cast %5 : vector<256x4xf32> to vector<16x16x4xf32>
    "tpu.trace_start"() <{level = 10 : i32, message = "snm,smc->snc"}> : () -> ()
    %cst = arith.constant dense<0.000000e+00> : vector<16x16x4xf32>
    %7 = tpu.matmul %3, %6, %cst {dimension_numbers = #tpu.dot_dimension_numbers<[2], [1], [1], [2], [0, 0, 0, 1, 1, 2], [0], [0]>} : vector<16x16x16xf32>, vector<16x16x4xf32>, vector<16x16x4xf32> -> vector<16x16x4xf32>
    "tpu.trace_stop"() : () -> ()
    %8 = vector.shape_cast %7 : vector<16x16x4xf32> to vector<256x4xf32>
    %c0_5 = arith.constant 0 : index
    %c0_6 = arith.constant 0 : index
    %9 = vector.load %arg4[%c0_5, %c0_6] : memref<280x128xf32, #tpu.memory_space<vmem>>, vector<4x32xf32>
    %cst_7 = arith.constant dense<0.000000e+00> : vector<256x32xf32>
    %10 = tpu.matmul %8, %9, %cst_7 {dimension_numbers = #tpu.dot_dimension_numbers<[1], [0], [0], [1], [0, 0, 1, 1], [], []>} : vector<256x4xf32>, vector<4x32xf32>, vector<256x32xf32> -> vector<256x32xf32>
    %c8 = arith.constant 8 : index
    %c0_8 = arith.constant 0 : index
    %11 = vector.load %arg4[%c8, %c0_8] : memref<280x128xf32, #tpu.memory_space<vmem>>, vector<1x32xf32>
    %12 = vector.broadcast %11 : vector<1x32xf32> to vector<256x32xf32>
    %13 = arith.addf %10, %12 : vector<256x32xf32>
    %cst_9 = arith.constant 0.000000e+00 : f32
    %14 = vector.broadcast %cst_9 : f32 to vector<256x32xf32>
    %15 = arith.maximumf %13, %14 : vector<256x32xf32>
    %c16 = arith.constant 16 : index
    %c0_10 = arith.constant 0 : index
    %16 = vector.load %arg4[%c16, %c0_10] : memref<280x128xf32, #tpu.memory_space<vmem>>, vector<32x32xf32>
    %cst_11 = arith.constant dense<0.000000e+00> : vector<256x32xf32>
    %17 = tpu.matmul %15, %16, %cst_11 {dimension_numbers = #tpu.dot_dimension_numbers<[1], [0], [0], [1], [0, 0, 1, 1], [], []>} : vector<256x32xf32>, vector<32x32xf32>, vector<256x32xf32> -> vector<256x32xf32>
    %c48 = arith.constant 48 : index
    %c0_12 = arith.constant 0 : index
    %18 = vector.load %arg4[%c48, %c0_12] : memref<280x128xf32, #tpu.memory_space<vmem>>, vector<1x32xf32>
    %19 = vector.broadcast %18 : vector<1x32xf32> to vector<256x32xf32>
    %20 = arith.addf %17, %19 : vector<256x32xf32>
    %21 = vector.shape_cast %20 : vector<256x32xf32> to vector<16x16x32xf32>
    "tpu.trace_start"() <{level = 10 : i32, message = "snm,smc->snc"}> : () -> ()
    %cst_13 = arith.constant dense<0.000000e+00> : vector<16x16x32xf32>
    %22 = tpu.matmul %3, %21, %cst_13 {dimension_numbers = #tpu.dot_dimension_numbers<[2], [1], [1], [2], [0, 0, 0, 1, 1, 2], [0], [0]>} : vector<16x16x16xf32>, vector<16x16x32xf32>, vector<16x16x32xf32> -> vector<16x16x32xf32>
    "tpu.trace_stop"() : () -> ()
    %23 = vector.shape_cast %22 : vector<16x16x32xf32> to vector<256x32xf32>
    %c56 = arith.constant 56 : index
    %c0_14 = arith.constant 0 : index
    %24 = vector.load %arg4[%c56, %c0_14] : memref<280x128xf32, #tpu.memory_space<vmem>>, vector<32x32xf32>
    %cst_15 = arith.constant dense<0.000000e+00> : vector<256x32xf32>
    %25 = tpu.matmul %23, %24, %cst_15 {dimension_numbers = #tpu.dot_dimension_numbers<[1], [0], [0], [1], [0, 0, 1, 1], [], []>} : vector<256x32xf32>, vector<32x32xf32>, vector<256x32xf32> -> vector<256x32xf32>
    %c88 = arith.constant 88 : index
    %c0_16 = arith.constant 0 : index
    %26 = vector.load %arg4[%c88, %c0_16] : memref<280x128xf32, #tpu.memory_space<vmem>>, vector<1x32xf32>
    %27 = vector.broadcast %26 : vector<1x32xf32> to vector<256x32xf32>
    %28 = arith.addf %25, %27 : vector<256x32xf32>
    %cst_17 = arith.constant 0.000000e+00 : f32
    %29 = vector.broadcast %cst_17 : f32 to vector<256x32xf32>
    %30 = arith.maximumf %28, %29 : vector<256x32xf32>
    %c96 = arith.constant 96 : index
    %c0_18 = arith.constant 0 : index
    %31 = vector.load %arg4[%c96, %c0_18] : memref<280x128xf32, #tpu.memory_space<vmem>>, vector<32x32xf32>
    %cst_19 = arith.constant dense<0.000000e+00> : vector<256x32xf32>
    %32 = tpu.matmul %30, %31, %cst_19 {dimension_numbers = #tpu.dot_dimension_numbers<[1], [0], [0], [1], [0, 0, 1, 1], [], []>} : vector<256x32xf32>, vector<32x32xf32>, vector<256x32xf32> -> vector<256x32xf32>
    %c128 = arith.constant 128 : index
    %c0_20 = arith.constant 0 : index
    %33 = vector.load %arg4[%c128, %c0_20] : memref<280x128xf32, #tpu.memory_space<vmem>>, vector<1x32xf32>
    %34 = vector.broadcast %33 : vector<1x32xf32> to vector<256x32xf32>
    %35 = arith.addf %32, %34 : vector<256x32xf32>
    %36 = vector.shape_cast %35 : vector<256x32xf32> to vector<16x16x32xf32>
    "tpu.trace_start"() <{level = 10 : i32, message = "snm,smc->snc"}> : () -> ()
    %cst_21 = arith.constant dense<0.000000e+00> : vector<16x16x32xf32>
    %37 = tpu.matmul %3, %36, %cst_21 {dimension_numbers = #tpu.dot_dimension_numbers<[2], [1], [1], [2], [0, 0, 0, 1, 1, 2], [0], [0]>} : vector<16x16x16xf32>, vector<16x16x32xf32>, vector<16x16x32xf32> -> vector<16x16x32xf32>
    "tpu.trace_stop"() : () -> ()
    %38 = vector.shape_cast %37 : vector<16x16x32xf32> to vector<256x32xf32>
    %c136 = arith.constant 136 : index
    %c0_22 = arith.constant 0 : index
    %39 = vector.load %arg4[%c136, %c0_22] : memref<280x128xf32, #tpu.memory_space<vmem>>, vector<32x32xf32>
    %cst_23 = arith.constant dense<0.000000e+00> : vector<256x32xf32>
    %40 = tpu.matmul %38, %39, %cst_23 {dimension_numbers = #tpu.dot_dimension_numbers<[1], [0], [0], [1], [0, 0, 1, 1], [], []>} : vector<256x32xf32>, vector<32x32xf32>, vector<256x32xf32> -> vector<256x32xf32>
    %c168 = arith.constant 168 : index
    %c0_24 = arith.constant 0 : index
    %41 = vector.load %arg4[%c168, %c0_24] : memref<280x128xf32, #tpu.memory_space<vmem>>, vector<1x32xf32>
    %42 = vector.broadcast %41 : vector<1x32xf32> to vector<256x32xf32>
    %43 = arith.addf %40, %42 : vector<256x32xf32>
    %cst_25 = arith.constant 0.000000e+00 : f32
    %44 = vector.broadcast %cst_25 : f32 to vector<256x32xf32>
    %45 = arith.maximumf %43, %44 : vector<256x32xf32>
    %c176 = arith.constant 176 : index
    %c0_26 = arith.constant 0 : index
    %46 = vector.load %arg4[%c176, %c0_26] : memref<280x128xf32, #tpu.memory_space<vmem>>, vector<32x16xf32>
    %cst_27 = arith.constant dense<0.000000e+00> : vector<256x16xf32>
    %47 = tpu.matmul %45, %46, %cst_27 {dimension_numbers = #tpu.dot_dimension_numbers<[1], [0], [0], [1], [0, 0, 1, 1], [], []>} : vector<256x32xf32>, vector<32x16xf32>, vector<256x16xf32> -> vector<256x16xf32>
    %c208 = arith.constant 208 : index
    %c0_28 = arith.constant 0 : index
    %48 = vector.load %arg4[%c208, %c0_28] : memref<280x128xf32, #tpu.memory_space<vmem>>, vector<1x16xf32>
    %49 = vector.broadcast %48 : vector<1x16xf32> to vector<256x16xf32>
    %50 = arith.addf %47, %49 : vector<256x16xf32>
    %51 = vector.shape_cast %50 : vector<256x16xf32> to vector<16x16x16xf32>
    %52 = tpu.iota {dimensions = array<i32: 0>} : vector<16x16x1xi32>
    %c7_i32 = arith.constant 7 : i32
    %53 = vector.broadcast %c7_i32 : i32 to vector<16x16x1xi32>
    %54 = arith.andi %52, %53 : vector<16x16x1xi32>
    %c0_29 = arith.constant 0 : index
    %c0_30 = arith.constant 0 : index
    %c0_31 = arith.constant 0 : index
    %55 = vector.load %arg3[%c0_29, %c0_30, %c0_31] : memref<1x16x1xi32, #tpu.memory_space<vmem>>, vector<1x16x1xi32>
    %56 = vector.shape_cast %55 : vector<1x16x1xi32> to vector<16x1xi32>
    %57 = vector.shape_cast %56 : vector<16x1xi32> to vector<1x16x1xi32>
    %58 = vector.broadcast %57 : vector<1x16x1xi32> to vector<16x16x1xi32>
    %59 = arith.cmpi slt, %54, %58 : vector<16x16x1xi32>
    %60 = arith.extui %59 : vector<16x16x1xi1> to vector<16x16x1xi32>
    %61 = arith.sitofp %60 : vector<16x16x1xi32> to vector<16x16x1xf32>
    %62 = vector.broadcast %61 : vector<16x16x1xf32> to vector<16x16x16xf32>
    %63 = arith.mulf %51, %62 : vector<16x16x16xf32>
    %cst_32 = arith.constant dense<0.000000e+00> : vector<16x16xf32>
    %64 = vector.multi_reduction <add>, %63, %cst_32 [0] : vector<16x16x16xf32> to vector<16x16xf32>
    %c216 = arith.constant 216 : index
    %c0_33 = arith.constant 0 : index
    %65 = vector.load %arg4[%c216, %c0_33] : memref<280x128xf32, #tpu.memory_space<vmem>>, vector<16x32xf32>
    %cst_34 = arith.constant dense<0.000000e+00> : vector<16x32xf32>
    %66 = tpu.matmul %64, %65, %cst_34 {dimension_numbers = #tpu.dot_dimension_numbers<[1], [0], [0], [1], [0, 0, 1, 1], [], []>} : vector<16x16xf32>, vector<16x32xf32>, vector<16x32xf32> -> vector<16x32xf32>
    %c232 = arith.constant 232 : index
    %c0_35 = arith.constant 0 : index
    %67 = vector.load %arg4[%c232, %c0_35] : memref<280x128xf32, #tpu.memory_space<vmem>>, vector<1x32xf32>
    %68 = vector.broadcast %67 : vector<1x32xf32> to vector<16x32xf32>
    %69 = arith.addf %66, %68 : vector<16x32xf32>
    %cst_36 = arith.constant 0.000000e+00 : f32
    %70 = vector.broadcast %cst_36 : f32 to vector<16x32xf32>
    %71 = arith.maximumf %69, %70 : vector<16x32xf32>
    %c240 = arith.constant 240 : index
    %c0_37 = arith.constant 0 : index
    %72 = vector.load %arg4[%c240, %c0_37] : memref<280x128xf32, #tpu.memory_space<vmem>>, vector<32x128xf32>
    %cst_38 = arith.constant dense<0.000000e+00> : vector<16x128xf32>
    %73 = tpu.matmul %71, %72, %cst_38 {dimension_numbers = #tpu.dot_dimension_numbers<[1], [0], [0], [1], [0, 0, 1, 1], [], []>} : vector<16x32xf32>, vector<32x128xf32>, vector<16x128xf32> -> vector<16x128xf32>
    %c272 = arith.constant 272 : index
    %c0_39 = arith.constant 0 : index
    %74 = vector.load %arg4[%c272, %c0_39] : memref<280x128xf32, #tpu.memory_space<vmem>>, vector<1x128xf32>
    %75 = vector.broadcast %74 : vector<1x128xf32> to vector<16x128xf32>
    %76 = arith.addf %73, %75 : vector<16x128xf32>
    %c0_40 = arith.constant 0 : index
    %c0_41 = arith.constant 0 : index
    %c0_42 = arith.constant 0 : index
    %77 = vector.load %arg5[%c0_40, %c0_41, %c0_42] : memref<1x16x128xf32, #tpu.memory_space<vmem>>, vector<1x16x128xf32>
    %78 = vector.shape_cast %77 : vector<1x16x128xf32> to vector<16x128xf32>
    %79 = vector.shape_cast %76 : vector<16x128xf32> to vector<1x16x128xf32>
    tpu.vector_store %arg5[%c0_40, %c0_41, %c0_42], %79 {strides = array<i32>} : memref<1x16x128xf32, #tpu.memory_space<vmem>>, vector<1x16x128xf32>,
    return
  }
  func.func @transform_0(%arg0: i32) -> (i32, i32, i32) {
    %c0_i32 = arith.constant 0 : i32
    %c0_i32_0 = arith.constant 0 : i32
    %c0_i32_1 = arith.constant 0 : i32
    return %arg0, %c0_i32, %c0_i32_0 : i32, i32, i32
  }
  func.func @transform_1(%arg0: i32) -> (i32, i32, i32) {
    %c0_i32 = arith.constant 0 : i32
    %c0_i32_0 = arith.constant 0 : i32
    %c0_i32_1 = arith.constant 0 : i32
    return %arg0, %c0_i32, %c0_i32_0 : i32, i32, i32
  }
  func.func @transform_2(%arg0: i32) -> (i32, i32, i32) {
    %c0_i32 = arith.constant 0 : i32
    %c0_i32_0 = arith.constant 0 : i32
    %c0_i32_1 = arith.constant 0 : i32
    return %arg0, %c0_i32, %c0_i32_0 : i32, i32, i32
  }
  func.func @transform_3(%arg0: i32) -> (i32, i32) {
    %c0_i32 = arith.constant 0 : i32
    %c0_i32_0 = arith.constant 0 : i32
    %c0_i32_1 = arith.constant 0 : i32
    return %c0_i32, %c0_i32_0 : i32, i32
  }
  func.func @transform_4(%arg0: i32) -> (i32, i32, i32) {
    %c0_i32 = arith.constant 0 : i32
    %c0_i32_0 = arith.constant 0 : i32
    %c0_i32_1 = arith.constant 0 : i32
    return %arg0, %c0_i32, %c0_i32_0 : i32, i32, i32
  }
}

</mosaic_0001>

<llo_original>
// kernel: forward.1
$region0: #{forward.1}
  #allocation0 [shape = 'u32[]', space=smem, size = 0x4, offset = 0x4, fixed_abs, tag = 'smem constant byte address 0x4 - core index']
  #allocation1 [shape = 'u32[144,128]{1,0:T(1,128)}', space=vmem, size = 0x12000, scoped, tag = 'internal scratch']
  %s0 = inlined_call_operand.vmem [shape: f32[4,16,16], index: 0, kind: input, shape index: {}]
  %s1 = inlined_call_operand.vmem [shape: f32[4,256,4], index: 1, kind: input, shape index: {}]
  %s2 = inlined_call_operand.vmem [shape: s32[4,16,1], index: 2, kind: input, shape index: {}]
  %s3 = inlined_call_operand.vmem [shape: f32[280,128], index: 3, kind: input, shape index: {}]
  %s4 = inlined_call_operand.vmem [shape: f32[4,16,128], index: 4, kind: output, shape index: {}]
  %s5 = sld [smem:[#allocation0]]
  $region49: #{forward.1} parent=0
    _
  %s7 = ssub.s32 1, %s5
  %s8 = scalar_select 0, %s7, %s5
  loop: start=0, step=1, limit=6
  $region2: #{forward.1} parent=0 // loop_pre_header
    _
  $region3: #{forward.1} parent=0 // loop_header
    %s10 = sphi 0, %s14
    %p11 = scmp.ge.s32.totalorder %s10, 6
    %s20 = sphi 0, %s22
    %s23 = sphi 0, %s20
    %s24 = sphi 0, %s23
    %s40 = sphi 0, %s24
    %s46 = sphi 0, %s48
    %s49 = sphi 0, %s46
    %s50 = sphi 0, %s49
    %s66 = sphi 0, %s50
    %s72 = sphi 0, %s74
    %s75 = sphi 0, %s72
    %s76 = sphi 0, %s75
    %s92 = sphi 0, %s76
    %s96 = sphi 0, %s96
    %s98 = sphi 0, %s96
    %s99 = sphi 0, %s98
    %s113 = sphi 0, %s99
    %s119 = sphi 0, %s121
    %s122 = sphi 0, %s119
    %s123 = sphi 0, %s122
    %s139 = sphi 0, %s123
  $region4: #{forward.1} parent=0 // loop_header_branch
    %13 = sbr.rel (%p11) target = $region8
  $region5: #{forward.1} parent=0 // loop_body
    %s15 = ssub.s32 %s10, 1
    %s16 = ssub.s32 %s10, 2
    %s17 = sadd.s32 %s10, 1
    %s18 = ssub.s32 %s10, %s17
    %p19 = scmp.eq.s32.totalorder %s18, 0
    %s21 = sadd.s32 %s20, 1
    %s22 = scalar_select %p19, %s20, %s21
    %p25 = pneg %p19
    %p26 = scmp.eq.s32.totalorder %s10, 3
    %p27 = por %p25, %p26
    %p28 = scmp.ne.s32.totalorder %s20, %s23
    %p29 = scmp.eq.s32.totalorder %s10, 0
    %p30 = por %p28, %p29
    %p31 = scmp.ne.s32.totalorder %s20, %s23
    %p32 = scmp.eq.s32.totalorder %s15, 3
    %p33 = por %p31, %p32
    %p34 = scmp.ne.s32.totalorder %s23, %s24
    %p35 = scmp.eq.s32.totalorder %s15, 0
    %p36 = por %p34, %p35
    %p37 = scmp.ne.s32.totalorder %s23, %s24
    %p38 = scmp.eq.s32.totalorder %s16, 3
    %p39 = por %p37, %p38
    %p41 = scmp.ne.s32.totalorder %s24, %s40
    %p42 = scmp.eq.s32.totalorder %s16, 0
    %p43 = por %p41, %p42
    %s44 = ssub.s32 %s10, %s17
    %p45 = scmp.eq.s32.totalorder %s44, 0
    %s47 = sadd.s32 %s46, 1
    %s48 = scalar_select %p45, %s46, %s47
    %p51 = pneg %p45
    %p52 = scmp.eq.s32.totalorder %s10, 3
    %p53 = por %p51, %p52
    %p54 = scmp.ne.s32.totalorder %s46, %s49
    %p55 = scmp.eq.s32.totalorder %s10, 0
    %p56 = por %p54, %p55
    %p57 = scmp.ne.s32.totalorder %s46, %s49
    %p58 = scmp.eq.s32.totalorder %s15, 3
    %p59 = por %p57, %p58
    %p60 = scmp.ne.s32.totalorder %s49, %s50
    %p61 = scmp.eq.s32.totalorder %s15, 0
    %p62 = por %p60, %p61
    %p63 = scmp.ne.s32.totalorder %s49, %s50
    %p64 = scmp.eq.s32.totalorder %s16, 3
    %p65 = por %p63, %p64
    %p67 = scmp.ne.s32.totalorder %s50, %s66
    %p68 = scmp.eq.s32.totalorder %s16, 0
    %p69 = por %p67, %p68
    %s70 = ssub.s32 %s10, %s17
    %p71 = scmp.eq.s32.totalorder %s70, 0
    %s73 = sadd.s32 %s72, 1
    %s74 = scalar_select %p71, %s72, %s73
    %p77 = pneg %p71
    %p78 = scmp.eq.s32.totalorder %s10, 3
    %p79 = por %p77, %p78
    %p80 = scmp.ne.s32.totalorder %s72, %s75
    %p81 = scmp.eq.s32.totalorder %s10, 0
    %p82 = por %p80, %p81
    %p83 = scmp.ne.s32.totalorder %s72, %s75
    %p84 = scmp.eq.s32.totalorder %s15, 3
    %p85 = por %p83, %p84
    %p86 = scmp.ne.s32.totalorder %s75, %s76
    %p87 = scmp.eq.s32.totalorder %s15, 0
    %p88 = por %p86, %p87
    %p89 = scmp.ne.s32.totalorder %s75, %s76
    %p90 = scmp.eq.s32.totalorder %s16, 3
    %p91 = por %p89, %p90
    %p93 = scmp.ne.s32.totalorder %s76, %s92
    %p94 = scmp.eq.s32.totalorder %s16, 0
    %p95 = por %p93, %p94
    %s97 = sadd.s32 %s96, 1
    %p100 = scmp.eq.s32.totalorder %s10, 3
    %p101 = scmp.ne.s32.totalorder %s96, %s98
    %p102 = scmp.eq.s32.totalorder %s10, 0
    %p103 = por %p101, %p102
    %p104 = scmp.ne.s32.totalorder %s96, %s98
    %p105 = scmp.eq.s32.totalorder %s15, 3
    %p106 = por %p104, %p105
    %p107 = scmp.ne.s32.totalorder %s98, %s99
    %p108 = scmp.eq.s32.totalorder %s15, 0
    %p109 = por %p107, %p108
    %p110 = scmp.ne.s32.totalorder %s98, %s99
    %p111 = scmp.eq.s32.totalorder %s16, 3
    %p112 = por %p110, %p111
    %p114 = scmp.ne.s32.totalorder %s99, %s113
    %p115 = scmp.eq.s32.totalorder %s16, 0
    %p116 = por %p114, %p115
    %s117 = ssub.s32 %s10, %s17
    %p118 = scmp.eq.s32.totalorder %s117, 0
    %s120 = sadd.s32 %s119, 1
    %s121 = scalar_select %p118, %s119, %s120
    %p124 = pneg %p118
    %p125 = scmp.eq.s32.totalorder %s10, 3
    %p126 = por %p124, %p125
    %p127 = scmp.ne.s32.totalorder %s119, %s122
    %p128 = scmp.eq.s32.totalorder %s10, 0
    %p129 = por %p127, %p128
    %p130 = scmp.ne.s32.totalorder %s119, %s122
    %p131 = scmp.eq.s32.totalorder %s15, 3
    %p132 = por %p130, %p131
    %p133 = scmp.ne.s32.totalorder %s122, %s123
    %p134 = scmp.eq.s32.totalorder %s15, 0
    %p135 = por %p133, %p134
    %p136 = scmp.ne.s32.totalorder %s122, %s123
    %p137 = scmp.eq.s32.totalorder %s16, 3
    %p138 = por %p136, %p137
    %p140 = scmp.ne.s32.totalorder %s123, %s139
    %p141 = scmp.eq.s32.totalorder %s16, 0
    %p142 = por %p140, %p141
    %p143 = scmp.le.s32.totalorder 1, %s10
    %p144 = scmp.lt.s32.totalorder %s10, 5
    %p145 = pnand %p143, %p144
    %p146 = pneg %p145
    // Predicated region
    $region9: #{forward.1} parent=5 // pred_check
      _
    $region10: #{forward.1} parent=5 // pred_check_branch
      %148 = sbr.rel (%p145) target = $region12
    $region11: #{forward.1} parent=5 // pred_region
      %s149 = ssub.s32 %s10, 1
      // Predicated region
      $region13: #{forward.1} parent=11 // pred_check
        %p150 = pneg %p109
      $region14: #{forward.1} parent=11 // pred_check_branch
        %152 = sbr.rel (%p150) target = $region16
      $region15: #{forward.1} parent=11 // pred_region
        _
      $region16: #{forward.1} parent=11 // pred_fallthru
        _
    $region12: #{forward.1} parent=5 // pred_fallthru
      _
    %p153 = scmp.lt.s32.totalorder %s10, 4
    // Predicated region
    $region17: #{forward.1} parent=5 // pred_check
      %p154 = pneg %p153
    $region18: #{forward.1} parent=5 // pred_check_branch
      %156 = sbr.rel (%p154) target = $region20
    $region19: #{forward.1} parent=5 // pred_region
      // Predicated region
      $region21: #{forward.1} parent=19 // pred_check
        %p157 = pneg %p30
      $region22: #{forward.1} parent=19 // pred_check_branch
        %159 = sbr.rel (%p157) target = $region24
      $region23: #{forward.1} parent=19 // pred_region
        %p160 = scmp.lt.s32.totalorder %s10, 3
        %s161 = scalar_select %p160, %s10, 3
        %s162 = smul.addr %s161, 2
        %s163 = smul.addr %s162, 8
        %s164 = scalar_lea.vmem %s0, %s163
      $region24: #{forward.1} parent=19 // pred_fallthru
        _
      // Predicated region
      $region25: #{forward.1} parent=19 // pred_check
        %p165 = pneg %p56
      $region26: #{forward.1} parent=19 // pred_check_branch
        %167 = sbr.rel (%p165) target = $region28
      $region27: #{forward.1} parent=19 // pred_region
        %p168 = scmp.lt.s32.totalorder %s10, 3
        %s169 = scalar_select %p168, %s10, 3
        %s170 = smul.addr %s169, 32
        %s171 = smul.addr %s170, 8
        %s172 = scalar_lea.vmem %s1, %s171
      $region28: #{forward.1} parent=19 // pred_fallthru
        _
      // Predicated region
      $region29: #{forward.1} parent=19 // pred_check
        %p173 = pneg %p82
      $region30: #{forward.1} parent=19 // pred_check_branch
        %175 = sbr.rel (%p173) target = $region32
      $region31: #{forward.1} parent=19 // pred_region
        %p176 = scmp.lt.s32.totalorder %s10, 3
        %s177 = scalar_select %p176, %s10, 3
        %s178 = smul.addr %s177, 2
        %s179 = smul.addr %s178, 8
        %s180 = scalar_lea.vmem %s2, %s179
      $region32: #{forward.1} parent=19 // pred_fallthru
        _
    $region20: #{forward.1} parent=5 // pred_fallthru
      _
    %p181 = scmp.le.s32.totalorder 1, %s10
    %p182 = scmp.lt.s32.totalorder %s10, 5
    %p183 = pnand %p181, %p182
    %p184 = pneg %p183
    // Predicated region
    $region33: #{forward.1} parent=5 // pred_check
      _
    $region34: #{forward.1} parent=5 // pred_check_branch
      %186 = sbr.rel (%p183) target = $region36
    $region35: #{forward.1} parent=5 // pred_region
      %s187 = ssub.s32 %s10, 1
      %p188 = scmp.lt.s32.totalorder %s15, 3
      %s189 = scalar_select %p188, %s15, 3
      %s190 = smul.addr %s189, 2
      %s191 = smul.addr %s190, 8
      %s192 = scalar_lea.vmem %s0, %s191
      %p193 = pneg %p36
      %p194 = pneg %p33
      %p195 = scmp.lt.s32.totalorder %s15, 3
      %s196 = scalar_select %p195, %s15, 3
      %s197 = smul.addr %s196, 32
      %s198 = smul.addr %s197, 8
      %s199 = scalar_lea.vmem %s1, %s198
      %p200 = pneg %p62
      %p201 = pneg %p59
      %p202 = scmp.lt.s32.totalorder %s15, 3
      %s203 = scalar_select %p202, %s15, 3
      %s204 = smul.addr %s203, 2
      %s205 = smul.addr %s204, 8
      %s206 = scalar_lea.vmem %s2, %s205
      %p207 = pneg %p88
      %p208 = pneg %p85
      %p209 = pneg %p109
      %p210 = pneg %p106
      %p211 = pneg %p135
      %p212 = pneg %p132
      %p213 = scmp.lt.s32.totalorder %s15, 3
      %s214 = scalar_select %p213, %s15, 3
      %s215 = smul.addr %s214, 2
      %s216 = smul.addr %s215, 8
      %s217 = scalar_lea.vmem %s4, %s216
      %p218 = scmp.lt.s32.totalorder %s15, 3
      %s219 = scalar_select %p218, %s15, 3
      %s220 = smul.addr %s219, 2
      %s221 = smul.addr %s220, 8
      %s222 = scalar_lea.vmem %s0, %s221
      %p223 = scmp.lt.s32.totalorder %s15, 3
      %s224 = scalar_select %p223, %s15, 3
      %s225 = smul.addr %s224, 32
      %s226 = smul.addr %s225, 8
      %s227 = scalar_lea.vmem %s1, %s226
      %p228 = scmp.lt.s32.totalorder %s15, 3
      %s229 = scalar_select %p228, %s15, 3
      %s230 = smul.addr %s229, 2
      %s231 = smul.addr %s230, 8
      %s232 = scalar_lea.vmem %s2, %s231
      %p233 = scmp.lt.s32.totalorder %s15, 3
      %s234 = scalar_select %p233, %s15, 3
      %s235 = smul.addr %s234, 2
      %s236 = smul.addr %s235, 8
      %s237 = scalar_lea.vmem %s4, %s236
      %v238 = vld [vmem:[%s222] sm:$0xff]
      %v239 = vld [vmem:[%s222 + $0x8] sm:$0xff]
      %v240 = vld [vmem:[%s227] sm:$0xff]
      %v241 = vld [vmem:[%s227 + $0x8] sm:$0xff]
      %v242 = vld [vmem:[%s227 + $0x10] sm:$0xff]
      %v243 = vld [vmem:[%s227 + $0x18] sm:$0xff]
      %v244 = vld [vmem:[%s227 + $0x20] sm:$0xff]
      %v245 = vld [vmem:[%s227 + $0x28] sm:$0xff]
      %v246 = vld [vmem:[%s227 + $0x30] sm:$0xff]
      %v247 = vld [vmem:[%s227 + $0x38] sm:$0xff]
      %v248 = vld [vmem:[%s227 + $0x40] sm:$0xff]
      %v249 = vld [vmem:[%s227 + $0x48] sm:$0xff]
      %v250 = vld [vmem:[%s227 + $0x50] sm:$0xff]
      %v251 = vld [vmem:[%s227 + $0x58] sm:$0xff]
      %v252 = vld [vmem:[%s227 + $0x60] sm:$0xff]
      %v253 = vld [vmem:[%s227 + $0x68] sm:$0xff]
      %v254 = vld [vmem:[%s227 + $0x70] sm:$0xff]
      %v255 = vld [vmem:[%s227 + $0x78] sm:$0xff]
      %v256 = vld [vmem:[%s227 + $0x80] sm:$0xff]
      %v257 = vld [vmem:[%s227 + $0x88] sm:$0xff]
      %v258 = vld [vmem:[%s227 + $0x90] sm:$0xff]
      %v259 = vld [vmem:[%s227 + $0x98] sm:$0xff]
      %v260 = vld [vmem:[%s227 + $0xa0] sm:$0xff]
      %v261 = vld [vmem:[%s227 + $0xa8] sm:$0xff]
      %v262 = vld [vmem:[%s227 + $0xb0] sm:$0xff]
      %v263 = vld [vmem:[%s227 + $0xb8] sm:$0xff]
      %v264 = vld [vmem:[%s227 + $0xc0] sm:$0xff]
      %v265 = vld [vmem:[%s227 + $0xc8] sm:$0xff]
      %v266 = vld [vmem:[%s227 + $0xd0] sm:$0xff]
      %v267 = vld [vmem:[%s227 + $0xd8] sm:$0xff]
      %v268 = vld [vmem:[%s227 + $0xe0] sm:$0xff]
      %v269 = vld [vmem:[%s227 + $0xe8] sm:$0xff]
      %v270 = vld [vmem:[%s227 + $0xf0] sm:$0xff]
      %v271 = vld [vmem:[%s227 + $0xf8] sm:$0xff]
      %vm272 = vcmask 130048
      %v274 = vsel %vm272, %v238, 0
      %v277 = vsel %vm272, %v239, 0
      %279 = vmatprep.subr.mxu0 0.0
      %280 = vmatpush1.msra.mxu0 0.0
      %281 = vmatprep.subr.mxu0 0.0
      %282 = vmatpush1.msra.mxu0 0.0
      %283 = vmatprep.subr.mxu0 0.0
      %284 = vmatpush1.msra.mxu0 0.0
      %285 = vmatprep.subr.mxu0 0.0
      %286 = vmatpush1.msra.mxu0 0.0
      %287 = vmatprep.subr.mxu0 0.0
      %288 = vmatpush1.msra.mxu0 0.0
      %289 = vmatprep.subr.mxu0 0.0
      %290 = vmatpush1.msra.mxu0 0.0
      %291 = vmatprep.subr.mxu0 0.0
      %292 = vmatpush1.msra.mxu0 0.0
      %293 = vmatprep.subr.mxu0 0.0
      %294 = vmatpush1.msra.mxu0 0.0
      %295 = vmatprep.subr.mxu0 0.0
      %296 = vmatpush1.msra.mxu0 0.0
      %297 = vmatprep.subr.mxu0 0.0
      %298 = vmatpush1.msra.mxu0 0.0
      %299 = vmatprep.subr.mxu0 0.0
      %300 = vmatpush1.msra.mxu0 0.0
      %301 = vmatprep.subr.mxu0 0.0
      %302 = vmatpush1.msra.mxu0 0.0
      %303 = vmatprep.subr.mxu0 0.0
      %304 = vmatpush1.msra.mxu0 0.0
      %305 = vmatprep.subr.mxu0 0.0
      %306 = vmatpush1.msra.mxu0 0.0
      %307 = vmatprep.subr.mxu0 0.0
      %308 = vmatpush1.msra.mxu0 %v241
      %309 = vmatprep.subr.mxu0 0.0
      %310 = vmatpush1.msra.mxu0 %v240
      %311 = vmatprep.subr.mxu0 0.0
      %312 = vmatpush2.msra.mxu0 0.0
      %313 = vmatprep.subr.mxu0 0.0
      %314 = vmatpush2.msra.mxu0 0.0
      %315 = vmatprep.subr.mxu0 0.0
      %316 = vmatpush2.msra.mxu0 0.0
      %317 = vmatprep.subr.mxu0 0.0
      %318 = vmatpush2.msra.mxu0 0.0
      %319 = vmatprep.subr.mxu0 0.0
      %320 = vmatpush2.msra.mxu0 0.0
      %321 = vmatprep.subr.mxu0 0.0
      %322 = vmatpush2.msra.mxu0 0.0
      %323 = vmatprep.subr.mxu0 0.0
      %324 = vmatpush2.msra.mxu0 0.0
      %325 = vmatprep.subr.mxu0 0.0
      %326 = vmatpush2.msra.mxu0 0.0
      %327 = vmatprep.subr.mxu0 0.0
      %328 = vmatpush2.msra.mxu0 0.0
      %329 = vmatprep.subr.mxu0 0.0
      %330 = vmatpush2.msra.mxu0 0.0
      %331 = vmatprep.subr.mxu0 0.0
      %332 = vmatpush2.msra.mxu0 0.0
      %333 = vmatprep.subr.mxu0 0.0
      %334 = vmatpush2.msra.mxu0 0.0
      %335 = vmatprep.subr.mxu0 0.0
      %336 = vmatpush2.msra.mxu0 0.0
      %337 = vmatprep.subr.mxu0 0.0
      %338 = vmatpush2.msra.mxu0 0.0
      %339 = vmatprep.subr.mxu0 0.0
      %340 = vmatpush2.msra.mxu0 0.0
      %341 = vmatprep.subr.mxu0 0.0
      %342 = vmatpush2.msra.mxu0 0.0
      %343 = vmatprep.mubr.f32.mxu0 0.0
      %344 = vmatmul.mubr.f32.gmra.mxu0 %v274
      %v345 = vpop.f32.mrf.mxu0
      %v346 = vadd.f32 0.0, %v345
      %v347 = vpop.f32.mrf.mxu0
      %348 = vmatprep.mubr.f32.mxu0 0.0
      %349 = vmatmul.mubr.f32.gmra.mxu0 %v277
      %v350 = vpop.f32.mrf.mxu0
      %v351 = vadd.f32 0.0, %v350
      %v352 = vpop.f32.mrf.mxu0
      %353 = vdwg.mxu0
      %354 = vmatprep.subr.mxu0 0.0
      %355 = vmatpush1.msra.mxu0 0.0
      %356 = vmatprep.subr.mxu0 0.0
      %357 = vmatpush1.msra.mxu0 0.0
      %358 = vmatprep.subr.mxu0 0.0
      %359 = vmatpush1.msra.mxu0 0.0
      %360 = vmatprep.subr.mxu0 0.0
      %361 = vmatpush1.msra.mxu0 0.0
      %362 = vmatprep.subr.mxu0 0.0
      %363 = vmatpush1.msra.mxu0 0.0
      %364 = vmatprep.subr.mxu0 0.0
      %365 = vmatpush1.msra.mxu0 0.0
      %366 = vmatprep.subr.mxu0 0.0
      %367 = vmatpush1.msra.mxu0 0.0
      %368 = vmatprep.subr.mxu0 0.0
      %369 = vmatpush1.msra.mxu0 0.0
      %370 = vmatprep.subr.mxu0 0.0
      %371 = vmatpush1.msra.mxu0 0.0
      %372 = vmatprep.subr.mxu0 0.0
      %373 = vmatpush1.msra.mxu0 0.0
      %374 = vmatprep.subr.mxu0 0.0
      %375 = vmatpush1.msra.mxu0 0.0
      %376 = vmatprep.subr.mxu0 0.0
      %377 = vmatpush1.msra.mxu0 0.0
      %378 = vmatprep.subr.mxu0 0.0
      %379 = vmatpush1.msra.mxu0 0.0
      %380 = vmatprep.subr.mxu0 0.0
      %381 = vmatpush1.msra.mxu0 0.0
      %382 = vmatprep.subr.mxu0 0.0
      %383 = vmatpush1.msra.mxu0 %v243
      %384 = vmatprep.subr.mxu0 0.0
      %385 = vmatpush1.msra.mxu0 %v242
      %386 = vmatprep.subr.mxu0 0.0
      %387 = vmatpush2.msra.mxu0 0.0
      %388 = vmatprep.subr.mxu0 0.0
      %389 = vmatpush2.msra.mxu0 0.0
      %390 = vmatprep.subr.mxu0 0.0
      %391 = vmatpush2.msra.mxu0 0.0
      %392 = vmatprep.subr.mxu0 0.0
      %393 = vmatpush2.msra.mxu0 0.0
      %394 = vmatprep.subr.mxu0 0.0
      %395 = vmatpush2.msra.mxu0 0.0
      %396 = vmatprep.subr.mxu0 0.0
      %397 = vmatpush2.msra.mxu0 0.0
      %398 = vmatprep.subr.mxu0 0.0
      %399 = vmatpush2.msra.mxu0 0.0
      %400 = vmatprep.subr.mxu0 0.0
      %401 = vmatpush2.msra.mxu0 0.0
      %402 = vmatprep.subr.mxu0 0.0
      %403 = vmatpush2.msra.mxu0 0.0
      %404 = vmatprep.subr.mxu0 0.0
      %405 = vmatpush2.msra.mxu0 0.0
      %406 = vmatprep.subr.mxu0 0.0
      %407 = vmatpush2.msra.mxu0 0.0
      %408 = vmatprep.subr.mxu0 0.0
      %409 = vmatpush2.msra.mxu0 0.0
      %410 = vmatprep.subr.mxu0 0.0
      %411 = vmatpush2.msra.mxu0 0.0
      %412 = vmatprep.subr.mxu0 0.0
      %413 = vmatpush2.msra.mxu0 0.0
      %414 = vmatprep.subr.mxu0 0.0
      %415 = vmatpush2.msra.mxu0 0.0
      %416 = vmatprep.subr.mxu0 0.0
      %417 = vmatpush2.msra.mxu0 0.0
      %418 = vmatprep.mubr.f32.mxu0 0.0
      %419 = vmatmul.mubr.f32.gmra.mxu0 %v274
      %v420 = vpop.f32.mrf.mxu0
      %v421 = vadd.f32 0.0, %v420
      %v422 = vpop.f32.mrf.mxu0
      %423 = vmatprep.mubr.f32.mxu0 0.0
      %424 = vmatmul.mubr.f32.gmra.mxu0 %v277
      %v425 = vpop.f32.mrf.mxu0
      %v426 = vadd.f32 0.0, %v425
      %v427 = vpop.f32.mrf.mxu0
      %428 = vdwg.mxu0
      %429 = vmatprep.subr.mxu0 0.0
      %430 = vmatpush1.msra.mxu0 0.0
      %431 = vmatprep.subr.mxu0 0.0
      %432 = vmatpush1.msra.mxu0 0.0
      %433 = vmatprep.subr.mxu0 0.0
      %434 = vmatpush1.msra.mxu0 0.0
      %435 = vmatprep.subr.mxu0 0.0
      %436 = vmatpush1.msra.mxu0 0.0
      %437 = vmatprep.subr.mxu0 0.0
      %438 = vmatpush1.msra.mxu0 0.0
      %439 = vmatprep.subr.mxu0 0.0
      %440 = vmatpush1.msra.mxu0 0.0
      %441 = vmatprep.subr.mxu0 0.0
      %442 = vmatpush1.msra.mxu0 0.0
      %443 = vmatprep.subr.mxu0 0.0
      %444 = vmatpush1.msra.mxu0 0.0
      %445 = vmatprep.subr.mxu0 0.0
      %446 = vmatpush1.msra.mxu0 0.0
      %447 = vmatprep.subr.mxu0 0.0
      %448 = vmatpush1.msra.mxu0 0.0
      %449 = vmatprep.subr.mxu0 0.0
      %450 = vmatpush1.msra.mxu0 0.0
      %451 = vmatprep.subr.mxu0 0.0
      %452 = vmatpush1.msra.mxu0 0.0
      %453 = vmatprep.subr.mxu0 0.0
      %454 = vmatpush1.msra.mxu0 0.0
      %455 = vmatprep.subr.mxu0 0.0
      %456 = vmatpush1.msra.mxu0 0.0
      %457 = vmatprep.subr.mxu0 0.0
      %458 = vmatpush1.msra.mxu0 %v245
      %459 = vmatprep.subr.mxu0 0.0
      %460 = vmatpush1.msra.mxu0 %v244
      %461 = vmatprep.subr.mxu0 0.0
      %462 = vmatpush2.msra.mxu0 0.0
      %463 = vmatprep.subr.mxu0 0.0
      %464 = vmatpush2.msra.mxu0 0.0
      %465 = vmatprep.subr.mxu0 0.0
      %466 = vmatpush2.msra.mxu0 0.0
      %467 = vmatprep.subr.mxu0 0.0
      %468 = vmatpush2.msra.mxu0 0.0
      %469 = vmatprep.subr.mxu0 0.0
      %470 = vmatpush2.msra.mxu0 0.0
      %471 = vmatprep.subr.mxu0 0.0
      %472 = vmatpush2.msra.mxu0 0.0
      %473 = vmatprep.subr.mxu0 0.0
      %474 = vmatpush2.msra.mxu0 0.0
      %475 = vmatprep.subr.mxu0 0.0
      %476 = vmatpush2.msra.mxu0 0.0
      %477 = vmatprep.subr.mxu0 0.0
      %478 = vmatpush2.msra.mxu0 0.0
      %479 = vmatprep.subr.mxu0 0.0
      %480 = vmatpush2.msra.mxu0 0.0
      %481 = vmatprep.subr.mxu0 0.0
      %482 = vmatpush2.msra.mxu0 0.0
      %483 = vmatprep.subr.mxu0 0.0
      %484 = vmatpush2.msra.mxu0 0.0
      %485 = vmatprep.subr.mxu0 0.0
      %486 = vmatpush2.msra.mxu0 0.0
      %487 = vmatprep.subr.mxu0 0.0
      %488 = vmatpush2.msra.mxu0 0.0
      %489 = vmatprep.subr.mxu0 0.0
      %490 = vmatpush2.msra.mxu0 0.0
      %491 = vmatprep.subr.mxu0 0.0
      %492 = vmatpush2.msra.mxu0 0.0
      %493 = vmatprep.mubr.f32.mxu0 0.0
      %494 = vmatmul.mubr.f32.gmra.mxu0 %v274
      %v495 = vpop.f32.mrf.mxu0
      %v496 = vadd.f32 0.0, %v495
      %v497 = vpop.f32.mrf.mxu0
      %498 = vmatprep.mubr.f32.mxu0 0.0
      %499 = vmatmul.mubr.f32.gmra.mxu0 %v277
      %v500 = vpop.f32.mrf.mxu0
      %v501 = vadd.f32 0.0, %v500
      %v502 = vpop.f32.mrf.mxu0
      %503 = vdwg.mxu0
      %504 = vmatprep.subr.mxu0 0.0
      %505 = vmatpush1.msra.mxu0 0.0
      %506 = vmatprep.subr.mxu0 0.0
      %507 = vmatpush1.msra.mxu0 0.0
      %508 = vmatprep.subr.mxu0 0.0
      %509 = vmatpush1.msra.mxu0 0.0
      %510 = vmatprep.subr.mxu0 0.0
      %511 = vmatpush1.msra.mxu0 0.0
      %512 = vmatprep.subr.mxu0 0.0
      %513 = vmatpush1.msra.mxu0 0.0
      %514 = vmatprep.subr.mxu0 0.0
      %515 = vmatpush1.msra.mxu0 0.0
      %516 = vmatprep.subr.mxu0 0.0
      %517 = vmatpush1.msra.mxu0 0.0
      %518 = vmatprep.subr.mxu0 0.0
      %519 = vmatpush1.msra.mxu0 0.0
      %520 = vmatprep.subr.mxu0 0.0
      %521 = vmatpush1.msra.mxu0 0.0
      %522 = vmatprep.subr.mxu0 0.0
      %523 = vmatpush1.msra.mxu0 0.0
      %524 = vmatprep.subr.mxu0 0.0
      %525 = vmatpush1.msra.mxu0 0.0
      %526 = vmatprep.subr.mxu0 0.0
      %527 = vmatpush1.msra.mxu0 0.0
      %528 = vmatprep.subr.mxu0 0.0
      %529 = vmatpush1.msra.mxu0 0.0
      %530 = vmatprep.subr.mxu0 0.0
      %531 = vmatpush1.msra.mxu0 0.0
      %532 = vmatprep.subr.mxu0 0.0
      %533 = vmatpush1.msra.mxu0 %v247
      %534 = vmatprep.subr.mxu0 0.0
      %535 = vmatpush1.msra.mxu0 %v246
      %536 = vmatprep.subr.mxu0 0.0
      %537 = vmatpush2.msra.mxu0 0.0
      %538 = vmatprep.subr.mxu0 0.0
      %539 = vmatpush2.msra.mxu0 0.0
      %540 = vmatprep.subr.mxu0 0.0
      %541 = vmatpush2.msra.mxu0 0.0
      %542 = vmatprep.subr.mxu0 0.0
      %543 = vmatpush2.msra.mxu0 0.0
      %544 = vmatprep.subr.mxu0 0.0
      %545 = vmatpush2.msra.mxu0 0.0
      %546 = vmatprep.subr.mxu0 0.0
      %547 = vmatpush2.msra.mxu0 0.0
      %548 = vmatprep.subr.mxu0 0.0
      %549 = vmatpush2.msra.mxu0 0.0
      %550 = vmatprep.subr.mxu0 0.0
      %551 = vmatpush2.msra.mxu0 0.0
      %552 = vmatprep.subr.mxu0 0.0
      %553 = vmatpush2.msra.mxu0 0.0
      %554 = vmatprep.subr.mxu0 0.0
      %555 = vmatpush2.msra.mxu0 0.0
      %556 = vmatprep.subr.mxu0 0.0
      %557 = vmatpush2.msra.mxu0 0.0
      %558 = vmatprep.subr.mxu0 0.0
      %559 = vmatpush2.msra.mxu0 0.0
      %560 = vmatprep.subr.mxu0 0.0
      %561 = vmatpush2.msra.mxu0 0.0
      %562 = vmatprep.subr.mxu0 0.0
      %563 = vmatpush2.msra.mxu0 0.0
      %564 = vmatprep.subr.mxu0 0.0
      %565 = vmatpush2.msra.mxu0 0.0
      %566 = vmatprep.subr.mxu0 0.0
      %567 = vmatpush2.msra.mxu0 0.0
      %568 = vmatprep.mubr.f32.mxu0 0.0
      %569 = vmatmul.mubr.f32.gmra.mxu0 %v274
      %v570 = vpop.f32.mrf.mxu0
      %v571 = vadd.f32 0.0, %v570
      %v572 = vpop.f32.mrf.mxu0
      %573 = vmatprep.mubr.f32.mxu0 0.0
      %574 = vmatmul.mubr.f32.gmra.mxu0 %v277
      %v575 = vpop.f32.mrf.mxu0
      %v576 = vadd.f32 0.0, %v575
      %v577 = vpop.f32.mrf.mxu0
      %578 = vdwg.mxu0
      %579 = vmatprep.subr.mxu0 0.0
      %580 = vmatpush1.msra.mxu0 0.0
      %581 = vmatprep.subr.mxu0 0.0
      %582 = vmatpush1.msra.mxu0 0.0
      %583 = vmatprep.subr.mxu0 0.0
      %584 = vmatpush1.msra.mxu0 0.0
      %585 = vmatprep.subr.mxu0 0.0
      %586 = vmatpush1.msra.mxu0 0.0
      %587 = vmatprep.subr.mxu0 0.0
      %588 = vmatpush1.msra.mxu0 0.0
      %589 = vmatprep.subr.mxu0 0.0
      %590 = vmatpush1.msra.mxu0 0.0
      %591 = vmatprep.subr.mxu0 0.0
      %592 = vmatpush1.msra.mxu0 0.0
      %593 = vmatprep.subr.mxu0 0.0
      %594 = vmatpush1.msra.mxu0 0.0
      %595 = vmatprep.subr.mxu0 0.0
      %596 = vmatpush1.msra.mxu0 0.0
      %597 = vmatprep.subr.mxu0 0.0
      %598 = vmatpush1.msra.mxu0 0.0
      %599 = vmatprep.subr.mxu0 0.0
      %600 = vmatpush1.msra.mxu0 0.0
      %601 = vmatprep.subr.mxu0 0.0
      %602 = vmatpush1.msra.mxu0 0.0
      %603 = vmatprep.subr.mxu0 0.0
      %604 = vmatpush1.msra.mxu0 0.0
      %605 = vmatprep.subr.mxu0 0.0
      %606 = vmatpush1.msra.mxu0 0.0
      %607 = vmatprep.subr.mxu0 0.0
      %608 = vmatpush1.msra.mxu0 %v249
      %609 = vmatprep.subr.mxu0 0.0
      %610 = vmatpush1.msra.mxu0 %v248
      %611 = vmatprep.subr.mxu0 0.0
      %612 = vmatpush2.msra.mxu0 0.0
      %613 = vmatprep.subr.mxu0 0.0
      %614 = vmatpush2.msra.mxu0 0.0
      %615 = vmatprep.subr.mxu0 0.0
      %616 = vmatpush2.msra.mxu0 0.0
      %617 = vmatprep.subr.mxu0 0.0
      %618 = vmatpush2.msra.mxu0 0.0
      %619 = vmatprep.subr.mxu0 0.0
      %620 = vmatpush2.msra.mxu0 0.0
      %621 = vmatprep.subr.mxu0 0.0
      %622 = vmatpush2.msra.mxu0 0.0
      %623 = vmatprep.subr.mxu0 0.0
      %624 = vmatpush2.msra.mxu0 0.0
      %625 = vmatprep.subr.mxu0 0.0
      %626 = vmatpush2.msra.mxu0 0.0
      %627 = vmatprep.subr.mxu0 0.0
      %628 = vmatpush2.msra.mxu0 0.0
      %629 = vmatprep.subr.mxu0 0.0
      %630 = vmatpush2.msra.mxu0 0.0
      %631 = vmatprep.subr.mxu0 0.0
      %632 = vmatpush2.msra.mxu0 0.0
      %633 = vmatprep.subr.mxu0 0.0
      %634 = vmatpush2.msra.mxu0 0.0
      %635 = vmatprep.subr.mxu0 0.0
      %636 = vmatpush2.msra.mxu0 0.0
      %637 = vmatprep.subr.mxu0 0.0
      %638 = vmatpush2.msra.mxu0 0.0
      %639 = vmatprep.subr.mxu0 0.0
      %640 = vmatpush2.msra.mxu0 0.0
      %641 = vmatprep.subr.mxu0 0.0
      %642 = vmatpush2.msra.mxu0 0.0
      %643 = vmatprep.mubr.f32.mxu0 0.0
      %644 = vmatmul.mubr.f32.gmra.mxu0 %v274
      %v645 = vpop.f32.mrf.mxu0
      %v646 = vadd.f32 0.0, %v645
      %v647 = vpop.f32.mrf.mxu0
      %648 = vmatprep.mubr.f32.mxu0 0.0
      %649 = vmatmul.mubr.f32.gmra.mxu0 %v277
      %v650 = vpop.f32.mrf.mxu0
      %v651 = vadd.f32 0.0, %v650
      %v652 = vpop.f32.mrf.mxu0
      %653 = vdwg.mxu0
      %654 = vmatprep.subr.mxu0 0.0
      %655 = vmatpush1.msra.mxu0 0.0
      %656 = vmatprep.subr.mxu0 0.0
      %657 = vmatpush1.msra.mxu0 0.0
      %658 = vmatprep.subr.mxu0 0.0
      %659 = vmatpush1.msra.mxu0 0.0
      %660 = vmatprep.subr.mxu0 0.0
      %661 = vmatpush1.msra.mxu0 0.0
      %662 = vmatprep.subr.mxu0 0.0
      %663 = vmatpush1.msra.mxu0 0.0
      %664 = vmatprep.subr.mxu0 0.0
      %665 = vmatpush1.msra.mxu0 0.0
      %666 = vmatprep.subr.mxu0 0.0
      %667 = vmatpush1.msra.mxu0 0.0
      %668 = vmatprep.subr.mxu0 0.0
      %669 = vmatpush1.msra.mxu0 0.0
      %670 = vmatprep.subr.mxu0 0.0
      %671 = vmatpush1.msra.mxu0 0.0
      %672 = vmatprep.subr.mxu0 0.0
      %673 = vmatpush1.msra.mxu0 0.0
      %674 = vmatprep.subr.mxu0 0.0
      %675 = vmatpush1.msra.mxu0 0.0
      %676 = vmatprep.subr.mxu0 0.0
      %677 = vmatpush1.msra.mxu0 0.0
      %678 = vmatprep.subr.mxu0 0.0
      %679 = vmatpush1.msra.mxu0 0.0
      %680 = vmatprep.subr.mxu0 0.0
      %681 = vmatpush1.msra.mxu0 0.0
      %682 = vmatprep.subr.mxu0 0.0
      %683 = vmatpush1.msra.mxu0 %v251
      %684 = vmatprep.subr.mxu0 0.0
      %685 = vmatpush1.msra.mxu0 %v250
      %686 = vmatprep.subr.mxu0 0.0
      %687 = vmatpush2.msra.mxu0 0.0
      %688 = vmatprep.subr.mxu0 0.0
      %689 = vmatpush2.msra.mxu0 0.0
      %690 = vmatprep.subr.mxu0 0.0
      %691 = vmatpush2.msra.mxu0 0.0
      %692 = vmatprep.subr.mxu0 0.0
      %693 = vmatpush2.msra.mxu0 0.0
      %694 = vmatprep.subr.mxu0 0.0
      %695 = vmatpush2.msra.mxu0 0.0
      %696 = vmatprep.subr.mxu0 0.0
      %697 = vmatpush2.msra.mxu0 0.0
      %698 = vmatprep.subr.mxu0 0.0
      %699 = vmatpush2.msra.mxu0 0.0
      %700 = vmatprep.subr.mxu0 0.0
      %701 = vmatpush2.msra.mxu0 0.0
      %702 = vmatprep.subr.mxu0 0.0
      %703 = vmatpush2.msra.mxu0 0.0
      %704 = vmatprep.subr.mxu0 0.0
      %705 = vmatpush2.msra.mxu0 0.0
      %706 = vmatprep.subr.mxu0 0.0
      %707 = vmatpush2.msra.mxu0 0.0
      %708 = vmatprep.subr.mxu0 0.0
      %709 = vmatpush2.msra.mxu0 0.0
      %710 = vmatprep.subr.mxu0 0.0
      %711 = vmatpush2.msra.mxu0 0.0
      %712 = vmatprep.subr.mxu0 0.0
      %713 = vmatpush2.msra.mxu0 0.0
      %714 = vmatprep.subr.mxu0 0.0
      %715 = vmatpush2.msra.mxu0 0.0
      %716 = vmatprep.subr.mxu0 0.0
      %717 = vmatpush2.msra.mxu0 0.0
      %718 = vmatprep.mubr.f32.mxu0 0.0
      %719 = vmatmul.mubr.f32.gmra.mxu0 %v274
      %v720 = vpop.f32.mrf.mxu0
      %v721 = vadd.f32 0.0, %v720
      %v722 = vpop.f32.mrf.mxu0
      %723 = vmatprep.mubr.f32.mxu0 0.0
      %724 = vmatmul.mubr.f32.gmra.mxu0 %v277
      %v725 = vpop.f32.mrf.mxu0
      %v726 = vadd.f32 0.0, %v725
      %v727 = vpop.f32.mrf.mxu0
      %728 = vdwg.mxu0
      %729 = vmatprep.subr.mxu0 0.0
      %730 = vmatpush1.msra.mxu0 0.0
      %731 = vmatprep.subr.mxu0 0.0
      %732 = vmatpush1.msra.mxu0 0.0
      %733 = vmatprep.subr.mxu0 0.0
      %734 = vmatpush1.msra.mxu0 0.0
      %735 = vmatprep.subr.mxu0 0.0
      %736 = vmatpush1.msra.mxu0 0.0
      %737 = vmatprep.subr.mxu0 0.0
      %738 = vmatpush1.msra.mxu0 0.0
      %739 = vmatprep.subr.mxu0 0.0
      %740 = vmatpush1.msra.mxu0 0.0
      %741 = vmatprep.subr.mxu0 0.0
      %742 = vmatpush1.msra.mxu0 0.0
      %743 = vmatprep.subr.mxu0 0.0
      %744 = vmatpush1.msra.mxu0 0.0
      %745 = vmatprep.subr.mxu0 0.0
      %746 = vmatpush1.msra.mxu0 0.0
      %747 = vmatprep.subr.mxu0 0.0
      %748 = vmatpush1.msra.mxu0 0.0
      %749 = vmatprep.subr.mxu0 0.0
      %750 = vmatpush1.msra.mxu0 0.0
      %751 = vmatprep.subr.mxu0 0.0
      %752 = vmatpush1.msra.mxu0 0.0
      %753 = vmatprep.subr.mxu0 0.0
      %754 = vmatpush1.msra.mxu0 0.0
      %755 = vmatprep.subr.mxu0 0.0
      %756 = vmatpush1.msra.mxu0 0.0
      %757 = vmatprep.subr.mxu0 0.0
      %758 = vmatpush1.msra.mxu0 %v253
      %759 = vmatprep.subr.mxu0 0.0
      %760 = vmatpush1.msra.mxu0 %v252
      %761 = vmatprep.subr.mxu0 0.0
      %762 = vmatpush2.msra.mxu0 0.0
      %763 = vmatprep.subr.mxu0 0.0
      %764 = vmatpush2.msra.mxu0 0.0
      %765 = vmatprep.subr.mxu0 0.0
      %766 = vmatpush2.msra.mxu0 0.0
      %767 = vmatprep.subr.mxu0 0.0
      %768 = vmatpush2.msra.mxu0 0.0
      %769 = vmatprep.subr.mxu0 0.0
      %770 = vmatpush2.msra.mxu0 0.0
      %771 = vmatprep.subr.mxu0 0.0
      %772 = vmatpush2.msra.mxu0 0.0
      %773 = vmatprep.subr.mxu0 0.0
      %774 = vmatpush2.msra.mxu0 0.0
      %775 = vmatprep.subr.mxu0 0.0
      %776 = vmatpush2.msra.mxu0 0.0
      %777 = vmatprep.subr.mxu0 0.0
      %778 = vmatpush2.msra.mxu0 0.0
      %779 = vmatprep.subr.mxu0 0.0
      %780 = vmatpush2.msra.mxu0 0.0
      %781 = vmatprep.subr.mxu0 0.0
      %782 = vmatpush2.msra.mxu0 0.0
      %783 = vmatprep.subr.mxu0 0.0
      %784 = vmatpush2.msra.mxu0 0.0
      %785 = vmatprep.subr.mxu0 0.0
      %786 = vmatpush2.msra.mxu0 0.0
      %787 = vmatprep.subr.mxu0 0.0
      %788 = vmatpush2.msra.mxu0 0.0
      %789 = vmatprep.subr.mxu0 0.0
      %790 = vmatpush2.msra.mxu0 0.0
      %791 = vmatprep.subr.mxu0 0.0
      %792 = vmatpush2.msra.mxu0 0.0
      %793 = vmatprep.mubr.f32.mxu0 0.0
      %794 = vmatmul.mubr.f32.gmra.mxu0 %v274
      %v795 = vpop.f32.mrf.mxu0
      %v796 = vadd.f32 0.0, %v795
      %v797 = vpop.f32.mrf.mxu0
      %798 = vmatprep.mubr.f32.mxu0 0.0
      %799 = vmatmul.mubr.f32.gmra.mxu0 %v277
      %v800 = vpop.f32.mrf.mxu0
      %v801 = vadd.f32 0.0, %v800
      %v802 = vpop.f32.mrf.mxu0
      %803 = vdwg.mxu0
      %804 = vmatprep.subr.mxu0 0.0
      %805 = vmatpush1.msra.mxu0 0.0
      %806 = vmatprep.subr.mxu0 0.0
      %807 = vmatpush1.msra.mxu0 0.0
      %808 = vmatprep.subr.mxu0 0.0
      %809 = vmatpush1.msra.mxu0 0.0
      %810 = vmatprep.subr.mxu0 0.0
      %811 = vmatpush1.msra.mxu0 0.0
      %812 = vmatprep.subr.mxu0 0.0
      %813 = vmatpush1.msra.mxu0 0.0
      %814 = vmatprep.subr.mxu0 0.0
      %815 = vmatpush1.msra.mxu0 0.0
      %816 = vmatprep.subr.mxu0 0.0
      %817 = vmatpush1.msra.mxu0 0.0
      %818 = vmatprep.subr.mxu0 0.0
      %819 = vmatpush1.msra.mxu0 0.0
      %820 = vmatprep.subr.mxu0 0.0
      %821 = vmatpush1.msra.mxu0 0.0
      %822 = vmatprep.subr.mxu0 0.0
      %823 = vmatpush1.msra.mxu0 0.0
      %824 = vmatprep.subr.mxu0 0.0
      %825 = vmatpush1.msra.mxu0 0.0
      %826 = vmatprep.subr.mxu0 0.0
      %827 = vmatpush1.msra.mxu0 0.0
      %828 = vmatprep.subr.mxu0 0.0
      %829 = vmatpush1.msra.mxu0 0.0
      %830 = vmatprep.subr.mxu0 0.0
      %831 = vmatpush1.msra.mxu0 0.0
      %832 = vmatprep.subr.mxu0 0.0
      %833 = vmatpush1.msra.mxu0 %v255
      %834 = vmatprep.subr.mxu0 0.0
      %835 = vmatpush1.msra.mxu0 %v254
      %836 = vmatprep.subr.mxu0 0.0
      %837 = vmatpush2.msra.mxu0 0.0
      %838 = vmatprep.subr.mxu0 0.0
      %839 = vmatpush2.msra.mxu0 0.0
      %840 = vmatprep.subr.mxu0 0.0
      %841 = vmatpush2.msra.mxu0 0.0
      %842 = vmatprep.subr.mxu0 0.0
      %843 = vmatpush2.msra.mxu0 0.0
      %844 = vmatprep.subr.mxu0 0.0
      %845 = vmatpush2.msra.mxu0 0.0
      %846 = vmatprep.subr.mxu0 0.0
      %847 = vmatpush2.msra.mxu0 0.0
      %848 = vmatprep.subr.mxu0 0.0
      %849 = vmatpush2.msra.mxu0 0.0
      %850 = vmatprep.subr.mxu0 0.0
      %851 = vmatpush2.msra.mxu0 0.0
      %852 = vmatprep.subr.mxu0 0.0
      %853 = vmatpush2.msra.mxu0 0.0
      %854 = vmatprep.subr.mxu0 0.0
      %855 = vmatpush2.msra.mxu0 0.0
      %856 = vmatprep.subr.mxu0 0.0
      %857 = vmatpush2.msra.mxu0 0.0
      %858 = vmatprep.subr.mxu0 0.0
      %859 = vmatpush2.msra.mxu0 0.0
      %860 = vmatprep.subr.mxu0 0.0
      %861 = vmatpush2.msra.mxu0 0.0
      %862 = vmatprep.subr.mxu0 0.0
      %863 = vmatpush2.msra.mxu0 0.0
      %864 = vmatprep.subr.mxu0 0.0
      %865 = vmatpush2.msra.mxu0 0.0
      %866 = vmatprep.subr.mxu0 0.0
      %867 = vmatpush2.msra.mxu0 0.0
      %868 = vmatprep.mubr.f32.mxu0 0.0
      %869 = vmatmul.mubr.f32.gmra.mxu0 %v274
      %v870 = vpop.f32.mrf.mxu0
      %v871 = vadd.f32 0.0, %v870
      %v872 = vpop.f32.mrf.mxu0
      %873 = vmatprep.mubr.f32.mxu0 0.0
      %874 = vmatmul.mubr.f32.gmra.mxu0 %v277
      %v875 = vpop.f32.mrf.mxu0
      %v876 = vadd.f32 0.0, %v875
      %v877 = vpop.f32.mrf.mxu0
      %878 = vdwg.mxu0
      %879 = vmatprep.subr.mxu0 0.0
      %880 = vmatpush1.msra.mxu0 0.0
      %881 = vmatprep.subr.mxu0 0.0
      %882 = vmatpush1.msra.mxu0 0.0
      %883 = vmatprep.subr.mxu0 0.0
      %884 = vmatpush1.msra.mxu0 0.0
      %885 = vmatprep.subr.mxu0 0.0
      %886 = vmatpush1.msra.mxu0 0.0
      %887 = vmatprep.subr.mxu0 0.0
      %888 = vmatpush1.msra.mxu0 0.0
      %889 = vmatprep.subr.mxu0 0.0
      %890 = vmatpush1.msra.mxu0 0.0
      %891 = vmatprep.subr.mxu0 0.0
      %892 = vmatpush1.msra.mxu0 0.0
      %893 = vmatprep.subr.mxu0 0.0
      %894 = vmatpush1.msra.mxu0 0.0
      %895 = vmatprep.subr.mxu0 0.0
      %896 = vmatpush1.msra.mxu0 0.0
      %897 = vmatprep.subr.mxu0 0.0
      %898 = vmatpush1.msra.mxu0 0.0
      %899 = vmatprep.subr.mxu0 0.0
      %900 = vmatpush1.msra.mxu0 0.0
      %901 = vmatprep.subr.mxu0 0.0
      %902 = vmatpush1.msra.mxu0 0.0
      %903 = vmatprep.subr.mxu0 0.0
      %904 = vmatpush1.msra.mxu0 0.0
      %905 = vmatprep.subr.mxu0 0.0
      %906 = vmatpush1.msra.mxu0 0.0
      %907 = vmatprep.subr.mxu0 0.0
      %908 = vmatpush1.msra.mxu0 %v257
      %909 = vmatprep.subr.mxu0 0.0
      %910 = vmatpush1.msra.mxu0 %v256
      %911 = vmatprep.subr.mxu0 0.0
      %912 = vmatpush2.msra.mxu0 0.0
      %913 = vmatprep.subr.mxu0 0.0
      %914 = vmatpush2.msra.mxu0 0.0
      %915 = vmatprep.subr.mxu0 0.0
      %916 = vmatpush2.msra.mxu0 0.0
      %917 = vmatprep.subr.mxu0 0.0
      %918 = vmatpush2.msra.mxu0 0.0
      %919 = vmatprep.subr.mxu0 0.0
      %920 = vmatpush2.msra.mxu0 0.0
      %921 = vmatprep.subr.mxu0 0.0
      %922 = vmatpush2.msra.mxu0 0.0
      %923 = vmatprep.subr.mxu0 0.0
      %924 = vmatpush2.msra.mxu0 0.0
      %925 = vmatprep.subr.mxu0 0.0
      %926 = vmatpush2.msra.mxu0 0.0
      %927 = vmatprep.subr.mxu0 0.0
      %928 = vmatpush2.msra.mxu0 0.0
      %929 = vmatprep.subr.mxu0 0.0
      %930 = vmatpush2.msra.mxu0 0.0
      %931 = vmatprep.subr.mxu0 0.0
      %932 = vmatpush2.msra.mxu0 0.0
      %933 = vmatprep.subr.mxu0 0.0
      %934 = vmatpush2.msra.mxu0 0.0
      %935 = vmatprep.subr.mxu0 0.0
      %936 = vmatpush2.msra.mxu0 0.0
      %937 = vmatprep.subr.mxu0 0.0
      %938 = vmatpush2.msra.mxu0 0.0
      %939 = vmatprep.subr.mxu0 0.0
      %940 = vmatpush2.msra.mxu0 0.0
      %941 = vmatprep.subr.mxu0 0.0
      %942 = vmatpush2.msra.mxu0 0.0
      %943 = vmatprep.mubr.f32.mxu0 0.0
      %944 = vmatmul.mubr.f32.gmra.mxu0 %v274
      %v945 = vpop.f32.mrf.mxu0
      %v946 = vadd.f32 0.0, %v945
      %v947 = vpop.f32.mrf.mxu0
      %948 = vmatprep.mubr.f32.mxu0 0.0
      %949 = vmatmul.mubr.f32.gmra.mxu0 %v277
      %v950 = vpop.f32.mrf.mxu0
      %v951 = vadd.f32 0.0, %v950
      %v952 = vpop.f32.mrf.mxu0
      %953 = vdwg.mxu0
      %954 = vmatprep.subr.mxu0 0.0
      %955 = vmatpush1.msra.mxu0 0.0
      %956 = vmatprep.subr.mxu0 0.0
      %957 = vmatpush1.msra.mxu0 0.0
      %958 = vmatprep.subr.mxu0 0.0
      %959 = vmatpush1.msra.mxu0 0.0
      %960 = vmatprep.subr.mxu0 0.0
      %961 = vmatpush1.msra.mxu0 0.0
      %962 = vmatprep.subr.mxu0 0.0
      %963 = vmatpush1.msra.mxu0 0.0
      %964 = vmatprep.subr.mxu0 0.0
      %965 = vmatpush1.msra.mxu0 0.0
      %966 = vmatprep.subr.mxu0 0.0
      %967 = vmatpush1.msra.mxu0 0.0
      %968 = vmatprep.subr.mxu0 0.0
      %969 = vmatpush1.msra.mxu0 0.0
      %970 = vmatprep.subr.mxu0 0.0
      %971 = vmatpush1.msra.mxu0 0.0
      %972 = vmatprep.subr.mxu0 0.0
      %973 = vmatpush1.msra.mxu0 0.0
      %974 = vmatprep.subr.mxu0 0.0
      %975 = vmatpush1.msra.mxu0 0.0
      %976 = vmatprep.subr.mxu0 0.0
      %977 = vmatpush1.msra.mxu0 0.0
      %978 = vmatprep.subr.mxu0 0.0
      %979 = vmatpush1.msra.mxu0 0.0
      %980 = vmatprep.subr.mxu0 0.0
      %981 = vmatpush1.msra.mxu0 0.0
      %982 = vmatprep.subr.mxu0 0.0
      %983 = vmatpush1.msra.mxu0 %v259
      %984 = vmatprep.subr.mxu0 0.0
      %985 = vmatpush1.msra.mxu0 %v258
      %986 = vmatprep.subr.mxu0 0.0
      %987 = vmatpush2.msra.mxu0 0.0
      %988 = vmatprep.subr.mxu0 0.0
      %989 = vmatpush2.msra.mxu0 0.0
      %990 = vmatprep.subr.mxu0 0.0
      %991 = vmatpush2.msra.mxu0 0.0
      %992 = vmatprep.subr.mxu0 0.0
      %993 = vmatpush2.msra.mxu0 0.0
      %994 = vmatprep.subr.mxu0 0.0
      %995 = vmatpush2.msra.mxu0 0.0
      %996 = vmatprep.subr.mxu0 0.0
      %997 = vmatpush2.msra.mxu0 0.0
      %998 = vmatprep.subr.mxu0 0.0
      %999 = vmatpush2.msra.mxu0 0.0
      %1000 = vmatprep.subr.mxu0 0.0
      %1001 = vmatpush2.msra.mxu0 0.0
      %1002 = vmatprep.subr.mxu0 0.0
      %1003 = vmatpush2.msra.mxu0 0.0
      %1004 = vmatprep.subr.mxu0 0.0
      %1005 = vmatpush2.msra.mxu0 0.0
      %1006 = vmatprep.subr.mxu0 0.0
      %1007 = vmatpush2.msra.mxu0 0.0
      %1008 = vmatprep.subr.mxu0 0.0
      %1009 = vmatpush2.msra.mxu0 0.0
      %1010 = vmatprep.subr.mxu0 0.0
      %1011 = vmatpush2.msra.mxu0 0.0
      %1012 = vmatprep.subr.mxu0 0.0
      %1013 = vmatpush2.msra.mxu0 0.0
      %1014 = vmatprep.subr.mxu0 0.0
      %1015 = vmatpush2.msra.mxu0 0.0
      %1016 = vmatprep.subr.mxu0 0.0
      %1017 = vmatpush2.msra.mxu0 0.0
      %1018 = vmatprep.mubr.f32.mxu0 0.0
      %1019 = vmatmul.mubr.f32.gmra.mxu0 %v274
      %v1020 = vpop.f32.mrf.mxu0
      %v1021 = vadd.f32 0.0, %v1020
      %v1022 = vpop.f32.mrf.mxu0
      %1023 = vmatprep.mubr.f32.mxu0 0.0
      %1024 = vmatmul.mubr.f32.gmra.mxu0 %v277
      %v1025 = vpop.f32.mrf.mxu0
      %v1026 = vadd.f32 0.0, %v1025
      %v1027 = vpop.f32.mrf.mxu0
      %1028 = vdwg.mxu0
      %1029 = vmatprep.subr.mxu0 0.0
      %1030 = vmatpush1.msra.mxu0 0.0
      %1031 = vmatprep.subr.mxu0 0.0
      %1032 = vmatpush1.msra.mxu0 0.0
      %1033 = vmatprep.subr.mxu0 0.0
      %1034 = vmatpush1.msra.mxu0 0.0
      %1035 = vmatprep.subr.mxu0 0.0
      %1036 = vmatpush1.msra.mxu0 0.0
      %1037 = vmatprep.subr.mxu0 0.0
      %1038 = vmatpush1.msra.mxu0 0.0
      %1039 = vmatprep.subr.mxu0 0.0
      %1040 = vmatpush1.msra.mxu0 0.0
      %1041 = vmatprep.subr.mxu0 0.0
      %1042 = vmatpush1.msra.mxu0 0.0
      %1043 = vmatprep.subr.mxu0 0.0
      %1044 = vmatpush1.msra.mxu0 0.0
      %1045 = vmatprep.subr.mxu0 0.0
      %1046 = vmatpush1.msra.mxu0 0.0
      %1047 = vmatprep.subr.mxu0 0.0
      %1048 = vmatpush1.msra.mxu0 0.0
      %1049 = vmatprep.subr.mxu0 0.0
      %1050 = vmatpush1.msra.mxu0 0.0
      %1051 = vmatprep.subr.mxu0 0.0
      %1052 = vmatpush1.msra.mxu0 0.0
      %1053 = vmatprep.subr.mxu0 0.0
      %1054 = vmatpush1.msra.mxu0 0.0
      %1055 = vmatprep.subr.mxu0 0.0
      %1056 = vmatpush1.msra.mxu0 0.0
      %1057 = vmatprep.subr.mxu0 0.0
      %1058 = vmatpush1.msra.mxu0 %v261
      %1059 = vmatprep.subr.mxu0 0.0
      %1060 = vmatpush1.msra.mxu0 %v260
      %1061 = vmatprep.subr.mxu0 0.0
      %1062 = vmatpush2.msra.mxu0 0.0
      %1063 = vmatprep.subr.mxu0 0.0
      %1064 = vmatpush2.msra.mxu0 0.0
      %1065 = vmatprep.subr.mxu0 0.0
      %1066 = vmatpush2.msra.mxu0 0.0
      %1067 = vmatprep.subr.mxu0 0.0
      %1068 = vmatpush2.msra.mxu0 0.0
      %1069 = vmatprep.subr.mxu0 0.0
      %1070 = vmatpush2.msra.mxu0 0.0
      %1071 = vmatprep.subr.mxu0 0.0
      %1072 = vmatpush2.msra.mxu0 0.0
      %1073 = vmatprep.subr.mxu0 0.0
      %1074 = vmatpush2.msra.mxu0 0.0
      %1075 = vmatprep.subr.mxu0 0.0
      %1076 = vmatpush2.msra.mxu0 0.0
      %1077 = vmatprep.subr.mxu0 0.0
      %1078 = vmatpush2.msra.mxu0 0.0
      %1079 = vmatprep.subr.mxu0 0.0
      %1080 = vmatpush2.msra.mxu0 0.0
      %1081 = vmatprep.subr.mxu0 0.0
      %1082 = vmatpush2.msra.mxu0 0.0
      %1083 = vmatprep.subr.mxu0 0.0
      %1084 = vmatpush2.msra.mxu0 0.0
      %1085 = vmatprep.subr.mxu0 0.0
      %1086 = vmatpush2.msra.mxu0 0.0
      %1087 = vmatprep.subr.mxu0 0.0
      %1088 = vmatpush2.msra.mxu0 0.0
      %1089 = vmatprep.subr.mxu0 0.0
      %1090 = vmatpush2.msra.mxu0 0.0
      %1091 = vmatprep.subr.mxu0 0.0
      %1092 = vmatpush2.msra.mxu0 0.0
      %1093 = vmatprep.mubr.f32.mxu0 0.0
      %1094 = vmatmul.mubr.f32.gmra.mxu0 %v274
      %v1095 = vpop.f32.mrf.mxu0
      %v1096 = vadd.f32 0.0, %v1095
      %v1097 = vpop.f32.mrf.mxu0
      %1098 = vmatprep.mubr.f32.mxu0 0.0
      %1099 = vmatmul.mubr.f32.gmra.mxu0 %v277
      %v1100 = vpop.f32.mrf.mxu0
      %v1101 = vadd.f32 0.0, %v1100
      %v1102 = vpop.f32.mrf.mxu0
      %1103 = vdwg.mxu0
      %1104 = vmatprep.subr.mxu0 0.0
      %1105 = vmatpush1.msra.mxu0 0.0
      %1106 = vmatprep.subr.mxu0 0.0
      %1107 = vmatpush1.msra.mxu0 0.0
      %1108 = vmatprep.subr.mxu0 0.0
      %1109 = vmatpush1.msra.mxu0 0.0
      %1110 = vmatprep.subr.mxu0 0.0
      %1111 = vmatpush1.msra.mxu0 0.0
      %1112 = vmatprep.subr.mxu0 0.0
      %1113 = vmatpush1.msra.mxu0 0.0
      %1114 = vmatprep.subr.mxu0 0.0
      %1115 = vmatpush1.msra.mxu0 0.0
      %1116 = vmatprep.subr.mxu0 0.0
      %1117 = vmatpush1.msra.mxu0 0.0
      %1118 = vmatprep.subr.mxu0 0.0
      %1119 = vmatpush1.msra.mxu0 0.0
      %1120 = vmatprep.subr.mxu0 0.0
      %1121 = vmatpush1.msra.mxu0 0.0
      %1122 = vmatprep.subr.mxu0 0.0
      %1123 = vmatpush1.msra.mxu0 0.0
      %1124 = vmatprep.subr.mxu0 0.0
      %1125 = vmatpush1.msra.mxu0 0.0
      %1126 = vmatprep.subr.mxu0 0.0
      %1127 = vmatpush1.msra.mxu0 0.0
      %1128 = vmatprep.subr.mxu0 0.0
      %1129 = vmatpush1.msra.mxu0 0.0
      %1130 = vmatprep.subr.mxu0 0.0
      %1131 = vmatpush1.msra.mxu0 0.0
      %1132 = vmatprep.subr.mxu0 0.0
      %1133 = vmatpush1.msra.mxu0 %v263
      %1134 = vmatprep.subr.mxu0 0.0
      %1135 = vmatpush1.msra.mxu0 %v262
      %1136 = vmatprep.subr.mxu0 0.0
      %1137 = vmatpush2.msra.mxu0 0.0
      %1138 = vmatprep.subr.mxu0 0.0
      %1139 = vmatpush2.msra.mxu0 0.0
      %1140 = vmatprep.subr.mxu0 0.0
      %1141 = vmatpush2.msra.mxu0 0.0
      %1142 = vmatprep.subr.mxu0 0.0
      %1143 = vmatpush2.msra.mxu0 0.0
      %1144 = vmatprep.subr.mxu0 0.0
      %1145 = vmatpush2.msra.mxu0 0.0
      %1146 = vmatprep.subr.mxu0 0.0
      %1147 = vmatpush2.msra.mxu0 0.0
      %1148 = vmatprep.subr.mxu0 0.0
      %1149 = vmatpush2.msra.mxu0 0.0
      %1150 = vmatprep.subr.mxu0 0.0
      %1151 = vmatpush2.msra.mxu0 0.0
      %1152 = vmatprep.subr.mxu0 0.0
      %1153 = vmatpush2.msra.mxu0 0.0
      %1154 = vmatprep.subr.mxu0 0.0
      %1155 = vmatpush2.msra.mxu0 0.0
      %1156 = vmatprep.subr.mxu0 0.0
      %1157 = vmatpush2.msra.mxu0 0.0
      %1158 = vmatprep.subr.mxu0 0.0
      %1159 = vmatpush2.msra.mxu0 0.0
      %1160 = vmatprep.subr.mxu0 0.0
      %1161 = vmatpush2.msra.mxu0 0.0
      %1162 = vmatprep.subr.mxu0 0.0
      %1163 = vmatpush2.msra.mxu0 0.0
      %1164 = vmatprep.subr.mxu0 0.0
      %1165 = vmatpush2.msra.mxu0 0.0
      %1166 = vmatprep.subr.mxu0 0.0
      %1167 = vmatpush2.msra.mxu0 0.0
      %1168 = vmatprep.mubr.f32.mxu0 0.0
      %1169 = vmatmul.mubr.f32.gmra.mxu0 %v274
      %v1170 = vpop.f32.mrf.mxu0
      %v1171 = vadd.f32 0.0, %v1170
      %v1172 = vpop.f32.mrf.mxu0
      %1173 = vmatprep.mubr.f32.mxu0 0.0
      %1174 = vmatmul.mubr.f32.gmra.mxu0 %v277
      %v1175 = vpop.f32.mrf.mxu0
      %v1176 = vadd.f32 0.0, %v1175
      %v1177 = vpop.f32.mrf.mxu0
      %1178 = vdwg.mxu0
      %1179 = vmatprep.subr.mxu0 0.0
      %1180 = vmatpush1.msra.mxu0 0.0
      %1181 = vmatprep.subr.mxu0 0.0
      %1182 = vmatpush1.msra.mxu0 0.0
      %1183 = vmatprep.subr.mxu0 0.0
      %1184 = vmatpush1.msra.mxu0 0.0
      %1185 = vmatprep.subr.mxu0 0.0
      %1186 = vmatpush1.msra.mxu0 0.0
      %1187 = vmatprep.subr.mxu0 0.0
      %1188 = vmatpush1.msra.mxu0 0.0
      %1189 = vmatprep.subr.mxu0 0.0
      %1190 = vmatpush1.msra.mxu0 0.0
      %1191 = vmatprep.subr.mxu0 0.0
      %1192 = vmatpush1.msra.mxu0 0.0
      %1193 = vmatprep.subr.mxu0 0.0
      %1194 = vmatpush1.msra.mxu0 0.0
      %1195 = vmatprep.subr.mxu0 0.0
      %1196 = vmatpush1.msra.mxu0 0.0
      %1197 = vmatprep.subr.mxu0 0.0
      %1198 = vmatpush1.msra.mxu0 0.0
      %1199 = vmatprep.subr.mxu0 0.0
      %1200 = vmatpush1.msra.mxu0 0.0
      %1201 = vmatprep.subr.mxu0 0.0
      %1202 = vmatpush1.msra.mxu0 0.0
      %1203 = vmatprep.subr.mxu0 0.0
      %1204 = vmatpush1.msra.mxu0 0.0
      %1205 = vmatprep.subr.mxu0 0.0
      %1206 = vmatpush1.msra.mxu0 0.0
      %1207 = vmatprep.subr.mxu0 0.0
      %1208 = vmatpush1.msra.mxu0 %v265
      %1209 = vmatprep.subr.mxu0 0.0
      %1210 = vmatpush1.msra.mxu0 %v264
      %1211 = vmatprep.subr.mxu0 0.0
      %1212 = vmatpush2.msra.mxu0 0.0
      %1213 = vmatprep.subr.mxu0 0.0
      %1214 = vmatpush2.msra.mxu0 0.0
      %1215 = vmatprep.subr.mxu0 0.0
      %1216 = vmatpush2.msra.mxu0 0.0
      %1217 = vmatprep.subr.mxu0 0.0
      %1218 = vmatpush2.msra.mxu0 0.0
      %1219 = vmatprep.subr.mxu0 0.0
      %1220 = vmatpush2.msra.mxu0 0.0
      %1221 = vmatprep.subr.mxu0 0.0
      %1222 = vmatpush2.msra.mxu0 0.0
      %1223 = vmatprep.subr.mxu0 0.0
      %1224 = vmatpush2.msra.mxu0 0.0
      %1225 = vmatprep.subr.mxu0 0.0
      %1226 = vmatpush2.msra.mxu0 0.0
      %1227 = vmatprep.subr.mxu0 0.0
      %1228 = vmatpush2.msra.mxu0 0.0
      %1229 = vmatprep.subr.mxu0 0.0
      %1230 = vmatpush2.msra.mxu0 0.0
      %1231 = vmatprep.subr.mxu0 0.0
      %1232 = vmatpush2.msra.mxu0 0.0
      %1233 = vmatprep.subr.mxu0 0.0
      %1234 = vmatpush2.msra.mxu0 0.0
      %1235 = vmatprep.subr.mxu0 0.0
      %1236 = vmatpush2.msra.mxu0 0.0
      %1237 = vmatprep.subr.mxu0 0.0
      %1238 = vmatpush2.msra.mxu0 0.0
      %1239 = vmatprep.subr.mxu0 0.0
      %1240 = vmatpush2.msra.mxu0 0.0
      %1241 = vmatprep.subr.mxu0 0.0
      %1242 = vmatpush2.msra.mxu0 0.0
      %1243 = vmatprep.mubr.f32.mxu0 0.0
      %1244 = vmatmul.mubr.f32.gmra.mxu0 %v274
      %v1245 = vpop.f32.mrf.mxu0
      %v1246 = vadd.f32 0.0, %v1245
      %v1247 = vpop.f32.mrf.mxu0
      %1248 = vmatprep.mubr.f32.mxu0 0.0
      %1249 = vmatmul.mubr.f32.gmra.mxu0 %v277
      %v1250 = vpop.f32.mrf.mxu0
      %v1251 = vadd.f32 0.0, %v1250
      %v1252 = vpop.f32.mrf.mxu0
      %1253 = vdwg.mxu0
      %1254 = vmatprep.subr.mxu0 0.0
      %1255 = vmatpush1.msra.mxu0 0.0
      %1256 = vmatprep.subr.mxu0 0.0
      %1257 = vmatpush1.msra.mxu0 0.0
      %1258 = vmatprep.subr.mxu0 0.0
      %1259 = vmatpush1.msra.mxu0 0.0
      %1260 = vmatprep.subr.mxu0 0.0
      %1261 = vmatpush1.msra.mxu0 0.0
      %1262 = vmatprep.subr.mxu0 0.0
      %1263 = vmatpush1.msra.mxu0 0.0
      %1264 = vmatprep.subr.mxu0 0.0
      %1265 = vmatpush1.msra.mxu0 0.0
      %1266 = vmatprep.subr.mxu0 0.0
      %1267 = vmatpush1.msra.mxu0 0.0
      %1268 = vmatprep.subr.mxu0 0.0
      %1269 = vmatpush1.msra.mxu0 0.0
      %1270 = vmatprep.subr.mxu0 0.0
      %1271 = vmatpush1.msra.mxu0 0.0
      %1272 = vmatprep.subr.mxu0 0.0
      %1273 = vmatpush1.msra.mxu0 0.0
      %1274 = vmatprep.subr.mxu0 0.0
      %1275 = vmatpush1.msra.mxu0 0.0
      %1276 = vmatprep.subr.mxu0 0.0
      %1277 = vmatpush1.msra.mxu0 0.0
      %1278 = vmatprep.subr.mxu0 0.0
      %1279 = vmatpush1.msra.mxu0 0.0
      %1280 = vmatprep.subr.mxu0 0.0
      %1281 = vmatpush1.msra.mxu0 0.0
      %1282 = vmatprep.subr.mxu0 0.0
      %1283 = vmatpush1.msra.mxu0 %v267
      %1284 = vmatprep.subr.mxu0 0.0
      %1285 = vmatpush1.msra.mxu0 %v266
      %1286 = vmatprep.subr.mxu0 0.0
      %1287 = vmatpush2.msra.mxu0 0.0
      %1288 = vmatprep.subr.mxu0 0.0
      %1289 = vmatpush2.msra.mxu0 0.0
      %1290 = vmatprep.subr.mxu0 0.0
      %1291 = vmatpush2.msra.mxu0 0.0
      %1292 = vmatprep.subr.mxu0 0.0
      %1293 = vmatpush2.msra.mxu0 0.0
      %1294 = vmatprep.subr.mxu0 0.0
      %1295 = vmatpush2.msra.mxu0 0.0
      %1296 = vmatprep.subr.mxu0 0.0
      %1297 = vmatpush2.msra.mxu0 0.0
      %1298 = vmatprep.subr.mxu0 0.0
      %1299 = vmatpush2.msra.mxu0 0.0
      %1300 = vmatprep.subr.mxu0 0.0
      %1301 = vmatpush2.msra.mxu0 0.0
      %1302 = vmatprep.subr.mxu0 0.0
      %1303 = vmatpush2.msra.mxu0 0.0
      %1304 = vmatprep.subr.mxu0 0.0
      %1305 = vmatpush2.msra.mxu0 0.0
      %1306 = vmatprep.subr.mxu0 0.0
      %1307 = vmatpush2.msra.mxu0 0.0
      %1308 = vmatprep.subr.mxu0 0.0
      %1309 = vmatpush2.msra.mxu0 0.0
      %1310 = vmatprep.subr.mxu0 0.0
      %1311 = vmatpush2.msra.mxu0 0.0
      %1312 = vmatprep.subr.mxu0 0.0
      %1313 = vmatpush2.msra.mxu0 0.0
      %1314 = vmatprep.subr.mxu0 0.0
      %1315 = vmatpush2.msra.mxu0 0.0
      %1316 = vmatprep.subr.mxu0 0.0
      %1317 = vmatpush2.msra.mxu0 0.0
      %1318 = vmatprep.mubr.f32.mxu0 0.0
      %1319 = vmatmul.mubr.f32.gmra.mxu0 %v274
      %v1320 = vpop.f32.mrf.mxu0
      %v1321 = vadd.f32 0.0, %v1320
      %v1322 = vpop.f32.mrf.mxu0
      %1323 = vmatprep.mubr.f32.mxu0 0.0
      %1324 = vmatmul.mubr.f32.gmra.mxu0 %v277
      %v1325 = vpop.f32.mrf.mxu0
      %v1326 = vadd.f32 0.0, %v1325
      %v1327 = vpop.f32.mrf.mxu0
      %1328 = vdwg.mxu0
      %1329 = vmatprep.subr.mxu0 0.0
      %1330 = vmatpush1.msra.mxu0 0.0
      %1331 = vmatprep.subr.mxu0 0.0
      %1332 = vmatpush1.msra.mxu0 0.0
      %1333 = vmatprep.subr.mxu0 0.0
      %1334 = vmatpush1.msra.mxu0 0.0
      %1335 = vmatprep.subr.mxu0 0.0
      %1336 = vmatpush1.msra.mxu0 0.0
      %1337 = vmatprep.subr.mxu0 0.0
      %1338 = vmatpush1.msra.mxu0 0.0
      %1339 = vmatprep.subr.mxu0 0.0
      %1340 = vmatpush1.msra.mxu0 0.0
      %1341 = vmatprep.subr.mxu0 0.0
      %1342 = vmatpush1.msra.mxu0 0.0
      %1343 = vmatprep.subr.mxu0 0.0
      %1344 = vmatpush1.msra.mxu0 0.0
      %1345 = vmatprep.subr.mxu0 0.0
      %1346 = vmatpush1.msra.mxu0 0.0
      %1347 = vmatprep.subr.mxu0 0.0
      %1348 = vmatpush1.msra.mxu0 0.0
      %1349 = vmatprep.subr.mxu0 0.0
      %1350 = vmatpush1.msra.mxu0 0.0
      %1351 = vmatprep.subr.mxu0 0.0
      %1352 = vmatpush1.msra.mxu0 0.0
      %1353 = vmatprep.subr.mxu0 0.0
      %1354 = vmatpush1.msra.mxu0 0.0
      %1355 = vmatprep.subr.mxu0 0.0
      %1356 = vmatpush1.msra.mxu0 0.0
      %1357 = vmatprep.subr.mxu0 0.0
      %1358 = vmatpush1.msra.mxu0 %v269
      %1359 = vmatprep.subr.mxu0 0.0
      %1360 = vmatpush1.msra.mxu0 %v268
      %1361 = vmatprep.subr.mxu0 0.0
      %1362 = vmatpush2.msra.mxu0 0.0
      %1363 = vmatprep.subr.mxu0 0.0
      %1364 = vmatpush2.msra.mxu0 0.0
      %1365 = vmatprep.subr.mxu0 0.0
      %1366 = vmatpush2.msra.mxu0 0.0
      %1367 = vmatprep.subr.mxu0 0.0
      %1368 = vmatpush2.msra.mxu0 0.0
      %1369 = vmatprep.subr.mxu0 0.0
      %1370 = vmatpush2.msra.mxu0 0.0
      %1371 = vmatprep.subr.mxu0 0.0
      %1372 = vmatpush2.msra.mxu0 0.0
      %1373 = vmatprep.subr.mxu0 0.0
      %1374 = vmatpush2.msra.mxu0 0.0
      %1375 = vmatprep.subr.mxu0 0.0
      %1376 = vmatpush2.msra.mxu0 0.0
      %1377 = vmatprep.subr.mxu0 0.0
      %1378 = vmatpush2.msra.mxu0 0.0
      %1379 = vmatprep.subr.mxu0 0.0
      %1380 = vmatpush2.msra.mxu0 0.0
      %1381 = vmatprep.subr.mxu0 0.0
      %1382 = vmatpush2.msra.mxu0 0.0
      %1383 = vmatprep.subr.mxu0 0.0
      %1384 = vmatpush2.msra.mxu0 0.0
      %1385 = vmatprep.subr.mxu0 0.0
      %1386 = vmatpush2.msra.mxu0 0.0
      %1387 = vmatprep.subr.mxu0 0.0
      %1388 = vmatpush2.msra.mxu0 0.0
      %1389 = vmatprep.subr.mxu0 0.0
      %1390 = vmatpush2.msra.mxu0 0.0
      %1391 = vmatprep.subr.mxu0 0.0
      %1392 = vmatpush2.msra.mxu0 0.0
      %1393 = vmatprep.mubr.f32.mxu0 0.0
      %1394 = vmatmul.mubr.f32.gmra.mxu0 %v274
      %v1395 = vpop.f32.mrf.mxu0
      %v1396 = vadd.f32 0.0, %v1395
      %v1397 = vpop.f32.mrf.mxu0
      %1398 = vmatprep.mubr.f32.mxu0 0.0
      %1399 = vmatmul.mubr.f32.gmra.mxu0 %v277
      %v1400 = vpop.f32.mrf.mxu0
      %v1401 = vadd.f32 0.0, %v1400
      %v1402 = vpop.f32.mrf.mxu0
      %1403 = vdwg.mxu0
      %1404 = vmatprep.subr.mxu0 0.0
      %1405 = vmatpush1.msra.mxu0 0.0
      %1406 = vmatprep.subr.mxu0 0.0
      %1407 = vmatpush1.msra.mxu0 0.0
      %1408 = vmatprep.subr.mxu0 0.0
      %1409 = vmatpush1.msra.mxu0 0.0
      %1410 = vmatprep.subr.mxu0 0.0
      %1411 = vmatpush1.msra.mxu0 0.0
      %1412 = vmatprep.subr.mxu0 0.0
      %1413 = vmatpush1.msra.mxu0 0.0
      %1414 = vmatprep.subr.mxu0 0.0
      %1415 = vmatpush1.msra.mxu0 0.0
      %1416 = vmatprep.subr.mxu0 0.0
      %1417 = vmatpush1.msra.mxu0 0.0
      %1418 = vmatprep.subr.mxu0 0.0
      %1419 = vmatpush1.msra.mxu0 0.0
      %1420 = vmatprep.subr.mxu0 0.0
      %1421 = vmatpush1.msra.mxu0 0.0
      %1422 = vmatprep.subr.mxu0 0.0
      %1423 = vmatpush1.msra.mxu0 0.0
      %1424 = vmatprep.subr.mxu0 0.0
      %1425 = vmatpush1.msra.mxu0 0.0
      %1426 = vmatprep.subr.mxu0 0.0
      %1427 = vmatpush1.msra.mxu0 0.0
      %1428 = vmatprep.subr.mxu0 0.0
      %1429 = vmatpush1.msra.mxu0 0.0
      %1430 = vmatprep.subr.mxu0 0.0
      %1431 = vmatpush1.msra.mxu0 0.0
      %1432 = vmatprep.subr.mxu0 0.0
      %1433 = vmatpush1.msra.mxu0 %v271
      %1434 = vmatprep.subr.mxu0 0.0
      %1435 = vmatpush1.msra.mxu0 %v270
      %1436 = vmatprep.subr.mxu0 0.0
      %1437 = vmatpush2.msra.mxu0 0.0
      %1438 = vmatprep.subr.mxu0 0.0
      %1439 = vmatpush2.msra.mxu0 0.0
      %1440 = vmatprep.subr.mxu0 0.0
      %1441 = vmatpush2.msra.mxu0 0.0
      %1442 = vmatprep.subr.mxu0 0.0
      %1443 = vmatpush2.msra.mxu0 0.0
      %1444 = vmatprep.subr.mxu0 0.0
      %1445 = vmatpush2.msra.mxu0 0.0
      %1446 = vmatprep.subr.mxu0 0.0
      %1447 = vmatpush2.msra.mxu0 0.0
      %1448 = vmatprep.subr.mxu0 0.0
      %1449 = vmatpush2.msra.mxu0 0.0
      %1450 = vmatprep.subr.mxu0 0.0
      %1451 = vmatpush2.msra.mxu0 0.0
      %1452 = vmatprep.subr.mxu0 0.0
      %1453 = vmatpush2.msra.mxu0 0.0
      %1454 = vmatprep.subr.mxu0 0.0
      %1455 = vmatpush2.msra.mxu0 0.0
      %1456 = vmatprep.subr.mxu0 0.0
      %1457 = vmatpush2.msra.mxu0 0.0
      %1458 = vmatprep.subr.mxu0 0.0
      %1459 = vmatpush2.msra.mxu0 0.0
      %1460 = vmatprep.subr.mxu0 0.0
      %1461 = vmatpush2.msra.mxu0 0.0
      %1462 = vmatprep.subr.mxu0 0.0
      %1463 = vmatpush2.msra.mxu0 0.0
      %1464 = vmatprep.subr.mxu0 0.0
      %1465 = vmatpush2.msra.mxu0 0.0
      %1466 = vmatprep.subr.mxu0 0.0
      %1467 = vmatpush2.msra.mxu0 0.0
      %1468 = vmatprep.mubr.f32.mxu0 0.0
      %1469 = vmatmul.mubr.f32.gmra.mxu0 %v274
      %v1470 = vpop.f32.mrf.mxu0
      %v1471 = vadd.f32 0.0, %v1470
      %v1472 = vpop.f32.mrf.mxu0
      %1473 = vmatprep.mubr.f32.mxu0 0.0
      %1474 = vmatmul.mubr.f32.gmra.mxu0 %v277
      %v1475 = vpop.f32.mrf.mxu0
      %v1476 = vadd.f32 0.0, %v1475
      %v1477 = vpop.f32.mrf.mxu0
      %1478 = vdwg.mxu0
      %v1479 = vld [vmem:[%s3] sm:$0xf]
      %v1480 = vld [vmem:[%s3 + $0x8] sm:$0x1]
      %v1481 = vlaneseq
      %v1482 = vshrl.u32 %v1481, 7
      %v1483 = vsub.s32 0, %v1482
      %v1484 = vrot.slane %v1480, %v1483
      %vm1485 = vcmask 31744
      %v1487 = vsel %vm1485, %v346, 0
      %v1490 = vsel %vm1485, %v351, 0
      %v1493 = vsel %vm1485, %v421, 0
      %v1496 = vsel %vm1485, %v426, 0
      %v1499 = vsel %vm1485, %v496, 0
      %v1502 = vsel %vm1485, %v501, 0
      %v1505 = vsel %vm1485, %v571, 0
      %v1508 = vsel %vm1485, %v576, 0
      %v1511 = vsel %vm1485, %v646, 0
      %v1514 = vsel %vm1485, %v651, 0
      %v1517 = vsel %vm1485, %v721, 0
      %v1520 = vsel %vm1485, %v726, 0
      %v1523 = vsel %vm1485, %v796, 0
      %v1526 = vsel %vm1485, %v801, 0
      %v1529 = vsel %vm1485, %v871, 0
      %v1532 = vsel %vm1485, %v876, 0
      %v1535 = vsel %vm1485, %v946, 0
      %v1538 = vsel %vm1485, %v951, 0
      %v1541 = vsel %vm1485, %v1021, 0
      %v1544 = vsel %vm1485, %v1026, 0
      %v1547 = vsel %vm1485, %v1096, 0
      %v1550 = vsel %vm1485, %v1101, 0
      %v1553 = vsel %vm1485, %v1171, 0
      %v1556 = vsel %vm1485, %v1176, 0
      %v1559 = vsel %vm1485, %v1246, 0
      %v1562 = vsel %vm1485, %v1251, 0
      %v1565 = vsel %vm1485, %v1321, 0
      %v1568 = vsel %vm1485, %v1326, 0
      %v1571 = vsel %vm1485, %v1396, 0
      %v1574 = vsel %vm1485, %v1401, 0
      %v1577 = vsel %vm1485, %v1471, 0
      %v1580 = vsel %vm1485, %v1476, 0
      %vm1582 = vcmask 1043456
      %v1584 = vsel %vm1582, %v1479, 0
      %1586 = vmatprep.subr.mxu0 0.0
      %1587 = vmatpush1.msra.mxu0 0.0
      %1588 = vmatprep.subr.mxu0 0.0
      %1589 = vmatpush1.msra.mxu0 0.0
      %1590 = vmatprep.subr.mxu0 0.0
      %1591 = vmatpush1.msra.mxu0 0.0
      %1592 = vmatprep.subr.mxu0 0.0
      %1593 = vmatpush1.msra.mxu0 0.0
      %1594 = vmatprep.subr.mxu0 0.0
      %1595 = vmatpush1.msra.mxu0 0.0
      %1596 = vmatprep.subr.mxu0 0.0
      %1597 = vmatpush1.msra.mxu0 0.0
      %1598 = vmatprep.subr.mxu0 0.0
      %1599 = vmatpush1.msra.mxu0 0.0
      %1600 = vmatprep.subr.mxu0 0.0
      %1601 = vmatpush1.msra.mxu0 0.0
      %1602 = vmatprep.subr.mxu0 0.0
      %1603 = vmatpush1.msra.mxu0 0.0
      %1604 = vmatprep.subr.mxu0 0.0
      %1605 = vmatpush1.msra.mxu0 0.0
      %1606 = vmatprep.subr.mxu0 0.0
      %1607 = vmatpush1.msra.mxu0 0.0
      %1608 = vmatprep.subr.mxu0 0.0
      %1609 = vmatpush1.msra.mxu0 0.0
      %1610 = vmatprep.subr.mxu0 0.0
      %1611 = vmatpush1.msra.mxu0 0.0
      %1612 = vmatprep.subr.mxu0 0.0
      %1613 = vmatpush1.msra.mxu0 0.0
      %1614 = vmatprep.subr.mxu0 0.0
      %1615 = vmatpush1.msra.mxu0 0.0
      %1616 = vmatprep.subr.mxu0 0.0
      %1617 = vmatpush1.msra.mxu0 %v1584
      %1618 = vmatprep.subr.mxu0 0.0
      %1619 = vmatpush2.msra.mxu0 0.0
      %1620 = vmatprep.subr.mxu0 0.0
      %1621 = vmatpush2.msra.mxu0 0.0
      %1622 = vmatprep.subr.mxu0 0.0
      %1623 = vmatpush2.msra.mxu0 0.0
      %1624 = vmatprep.subr.mxu0 0.0
      %1625 = vmatpush2.msra.mxu0 0.0
      %1626 = vmatprep.subr.mxu0 0.0
      %1627 = vmatpush2.msra.mxu0 0.0
      %1628 = vmatprep.subr.mxu0 0.0
      %1629 = vmatpush2.msra.mxu0 0.0
      %1630 = vmatprep.subr.mxu0 0.0
      %1631 = vmatpush2.msra.mxu0 0.0
      %1632 = vmatprep.subr.mxu0 0.0
      %1633 = vmatpush2.msra.mxu0 0.0
      %1634 = vmatprep.subr.mxu0 0.0
      %1635 = vmatpush2.msra.mxu0 0.0
      %1636 = vmatprep.subr.mxu0 0.0
      %1637 = vmatpush2.msra.mxu0 0.0
      %1638 = vmatprep.subr.mxu0 0.0
      %1639 = vmatpush2.msra.mxu0 0.0
      %1640 = vmatprep.subr.mxu0 0.0
      %1641 = vmatpush2.msra.mxu0 0.0
      %1642 = vmatprep.subr.mxu0 0.0
      %1643 = vmatpush2.msra.mxu0 0.0
      %1644 = vmatprep.subr.mxu0 0.0
      %1645 = vmatpush2.msra.mxu0 0.0
      %1646 = vmatprep.subr.mxu0 0.0
      %1647 = vmatpush2.msra.mxu0 0.0
      %1648 = vmatprep.subr.mxu0 0.0
      %1649 = vmatpush2.msra.mxu0 0.0
      %1650 = vmatprep.mubr.f32.mxu0 0.0
      %1651 = vmatmul.mubr.f32.gmra.mxu0 %v1487
      %v1652 = vpop.f32.mrf.mxu0
      %v1653 = vadd.f32 %v1484, %v1652
      %v1654 = vpop.f32.mrf.mxu0
      %1655 = vmatprep.mubr.f32.mxu0 0.0
      %1656 = vmatmul.mubr.f32.gmra.mxu0 %v1490
      %v1657 = vpop.f32.mrf.mxu0
      %v1658 = vadd.f32 %v1484, %v1657
      %v1659 = vpop.f32.mrf.mxu0
      %1660 = vmatprep.mubr.f32.mxu0 0.0
      %1661 = vmatmul.mubr.f32.gmra.mxu0 %v1493
      %v1662 = vpop.f32.mrf.mxu0
      %v1663 = vadd.f32 %v1484, %v1662
      %v1664 = vpop.f32.mrf.mxu0
      %1665 = vmatprep.mubr.f32.mxu0 0.0
      %1666 = vmatmul.mubr.f32.gmra.mxu0 %v1496
      %v1667 = vpop.f32.mrf.mxu0
      %v1668 = vadd.f32 %v1484, %v1667
      %v1669 = vpop.f32.mrf.mxu0
      %1670 = vmatprep.mubr.f32.mxu0 0.0
      %1671 = vmatmul.mubr.f32.gmra.mxu0 %v1499
      %v1672 = vpop.f32.mrf.mxu0
      %v1673 = vadd.f32 %v1484, %v1672
      %v1674 = vpop.f32.mrf.mxu0
      %1675 = vmatprep.mubr.f32.mxu0 0.0
      %1676 = vmatmul.mubr.f32.gmra.mxu0 %v1502
      %v1677 = vpop.f32.mrf.mxu0
      %v1678 = vadd.f32 %v1484, %v1677
      %v1679 = vpop.f32.mrf.mxu0
      %1680 = vmatprep.mubr.f32.mxu0 0.0
      %1681 = vmatmul.mubr.f32.gmra.mxu0 %v1505
      %v1682 = vpop.f32.mrf.mxu0
      %v1683 = vadd.f32 %v1484, %v1682
      %v1684 = vpop.f32.mrf.mxu0
      %1685 = vmatprep.mubr.f32.mxu0 0.0
      %1686 = vmatmul.mubr.f32.gmra.mxu0 %v1508
      %v1687 = vpop.f32.mrf.mxu0
      %v1688 = vadd.f32 %v1484, %v1687
      %v1689 = vpop.f32.mrf.mxu0
      %1690 = vmatprep.mubr.f32.mxu0 0.0
      %1691 = vmatmul.mubr.f32.gmra.mxu0 %v1511
      %v1692 = vpop.f32.mrf.mxu0
      %v1693 = vadd.f32 %v1484, %v1692
      %v1694 = vpop.f32.mrf.mxu0
      %1695 = vmatprep.mubr.f32.mxu0 0.0
      %1696 = vmatmul.mubr.f32.gmra.mxu0 %v1514
      %v1697 = vpop.f32.mrf.mxu0
      %v1698 = vadd.f32 %v1484, %v1697
      %v1699 = vpop.f32.mrf.mxu0
      %1700 = vmatprep.mubr.f32.mxu0 0.0
      %1701 = vmatmul.mubr.f32.gmra.mxu0 %v1517
      %v1702 = vpop.f32.mrf.mxu0
      %v1703 = vadd.f32 %v1484, %v1702
      %v1704 = vpop.f32.mrf.mxu0
      %1705 = vmatprep.mubr.f32.mxu0 0.0
      %1706 = vmatmul.mubr.f32.gmra.mxu0 %v1520
      %v1707 = vpop.f32.mrf.mxu0
      %v1708 = vadd.f32 %v1484, %v1707
      %v1709 = vpop.f32.mrf.mxu0
      %1710 = vmatprep.mubr.f32.mxu0 0.0
      %1711 = vmatmul.mubr.f32.gmra.mxu0 %v1523
      %v1712 = vpop.f32.mrf.mxu0
      %v1713 = vadd.f32 %v1484, %v1712
      %v1714 = vpop.f32.mrf.mxu0
      %1715 = vmatprep.mubr.f32.mxu0 0.0
      %1716 = vmatmul.mubr.f32.gmra.mxu0 %v1526
      %v1717 = vpop.f32.mrf.mxu0
      %v1718 = vadd.f32 %v1484, %v1717
      %v1719 = vpop.f32.mrf.mxu0
      %1720 = vmatprep.mubr.f32.mxu0 0.0
      %1721 = vmatmul.mubr.f32.gmra.mxu0 %v1529
      %v1722 = vpop.f32.mrf.mxu0
      %v1723 = vadd.f32 %v1484, %v1722
      %v1724 = vpop.f32.mrf.mxu0
      %1725 = vmatprep.mubr.f32.mxu0 0.0
      %1726 = vmatmul.mubr.f32.gmra.mxu0 %v1532
      %v1727 = vpop.f32.mrf.mxu0
      %v1728 = vadd.f32 %v1484, %v1727
      %v1729 = vpop.f32.mrf.mxu0
      %1730 = vmatprep.mubr.f32.mxu0 0.0
      %1731 = vmatmul.mubr.f32.gmra.mxu0 %v1535
      %v1732 = vpop.f32.mrf.mxu0
      %v1733 = vadd.f32 %v1484, %v1732
      %v1734 = vpop.f32.mrf.mxu0
      %1735 = vmatprep.mubr.f32.mxu0 0.0
      %1736 = vmatmul.mubr.f32.gmra.mxu0 %v1538
      %v1737 = vpop.f32.mrf.mxu0
      %v1738 = vadd.f32 %v1484, %v1737
      %v1739 = vpop.f32.mrf.mxu0
      %1740 = vmatprep.mubr.f32.mxu0 0.0
      %1741 = vmatmul.mubr.f32.gmra.mxu0 %v1541
      %v1742 = vpop.f32.mrf.mxu0
      %v1743 = vadd.f32 %v1484, %v1742
      %v1744 = vpop.f32.mrf.mxu0
      %1745 = vmatprep.mubr.f32.mxu0 0.0
      %1746 = vmatmul.mubr.f32.gmra.mxu0 %v1544
      %v1747 = vpop.f32.mrf.mxu0
      %v1748 = vadd.f32 %v1484, %v1747
      %v1749 = vpop.f32.mrf.mxu0
      %1750 = vmatprep.mubr.f32.mxu0 0.0
      %1751 = vmatmul.mubr.f32.gmra.mxu0 %v1547
      %v1752 = vpop.f32.mrf.mxu0
      %v1753 = vadd.f32 %v1484, %v1752
      %v1754 = vpop.f32.mrf.mxu0
      %1755 = vmatprep.mubr.f32.mxu0 0.0
      %1756 = vmatmul.mubr.f32.gmra.mxu0 %v1550
      %v1757 = vpop.f32.mrf.mxu0
      %v1758 = vadd.f32 %v1484, %v1757
      %v1759 = vpop.f32.mrf.mxu0
      %1760 = vmatprep.mubr.f32.mxu0 0.0
      %1761 = vmatmul.mubr.f32.gmra.mxu0 %v1553
      %v1762 = vpop.f32.mrf.mxu0
      %v1763 = vadd.f32 %v1484, %v1762
      %v1764 = vpop.f32.mrf.mxu0
      %1765 = vmatprep.mubr.f32.mxu0 0.0
      %1766 = vmatmul.mubr.f32.gmra.mxu0 %v1556
      %v1767 = vpop.f32.mrf.mxu0
      %v1768 = vadd.f32 %v1484, %v1767
      %v1769 = vpop.f32.mrf.mxu0
      %1770 = vmatprep.mubr.f32.mxu0 0.0
      %1771 = vmatmul.mubr.f32.gmra.mxu0 %v1559
      %v1772 = vpop.f32.mrf.mxu0
      %v1773 = vadd.f32 %v1484, %v1772
      %v1774 = vpop.f32.mrf.mxu0
      %1775 = vmatprep.mubr.f32.mxu0 0.0
      %1776 = vmatmul.mubr.f32.gmra.mxu0 %v1562
      %v1777 = vpop.f32.mrf.mxu0
      %v1778 = vadd.f32 %v1484, %v1777
      %v1779 = vpop.f32.mrf.mxu0
      %1780 = vmatprep.mubr.f32.mxu0 0.0
      %1781 = vmatmul.mubr.f32.gmra.mxu0 %v1565
      %v1782 = vpop.f32.mrf.mxu0
      %v1783 = vadd.f32 %v1484, %v1782
      %v1784 = vpop.f32.mrf.mxu0
      %1785 = vmatprep.mubr.f32.mxu0 0.0
      %1786 = vmatmul.mubr.f32.gmra.mxu0 %v1568
      %v1787 = vpop.f32.mrf.mxu0
      %v1788 = vadd.f32 %v1484, %v1787
      %v1789 = vpop.f32.mrf.mxu0
      %1790 = vmatprep.mubr.f32.mxu0 0.0
      %1791 = vmatmul.mubr.f32.gmra.mxu0 %v1571
      %v1792 = vpop.f32.mrf.mxu0
      %v1793 = vadd.f32 %v1484, %v1792
      %v1794 = vpop.f32.mrf.mxu0
      %1795 = vmatprep.mubr.f32.mxu0 0.0
      %1796 = vmatmul.mubr.f32.gmra.mxu0 %v1574
      %v1797 = vpop.f32.mrf.mxu0
      %v1798 = vadd.f32 %v1484, %v1797
      %v1799 = vpop.f32.mrf.mxu0
      %1800 = vmatprep.mubr.f32.mxu0 0.0
      %1801 = vmatmul.mubr.f32.gmra.mxu0 %v1577
      %v1802 = vpop.f32.mrf.mxu0
      %v1803 = vadd.f32 %v1484, %v1802
      %v1804 = vpop.f32.mrf.mxu0
      %1805 = vmatprep.mubr.f32.mxu0 0.0
      %1806 = vmatmul.mubr.f32.gmra.mxu0 %v1580
      %v1807 = vpop.f32.mrf.mxu0
      %v1808 = vadd.f32 %v1484, %v1807
      %v1809 = vpop.f32.mrf.mxu0
      %1810 = vdwg.mxu0
      %v1811 = vmax.f32 %v1653, 0.0
      %v1812 = vmax.f32 %v1658, 0.0
      %v1813 = vmax.f32 %v1663, 0.0
      %v1814 = vmax.f32 %v1668, 0.0
      %v1815 = vmax.f32 %v1673, 0.0
      %v1816 = vmax.f32 %v1678, 0.0
      %v1817 = vmax.f32 %v1683, 0.0
      %v1818 = vmax.f32 %v1688, 0.0
      %v1819 = vmax.f32 %v1693, 0.0
      %v1820 = vmax.f32 %v1698, 0.0
      %v1821 = vmax.f32 %v1703, 0.0
      %v1822 = vmax.f32 %v1708, 0.0
      %v1823 = vmax.f32 %v1713, 0.0
      %v1824 = vmax.f32 %v1718, 0.0
      %v1825 = vmax.f32 %v1723, 0.0
      %v1826 = vmax.f32 %v1728, 0.0
      %v1827 = vmax.f32 %v1733, 0.0
      %v1828 = vmax.f32 %v1738, 0.0
      %v1829 = vmax.f32 %v1743, 0.0
      %v1830 = vmax.f32 %v1748, 0.0
      %v1831 = vmax.f32 %v1753, 0.0
      %v1832 = vmax.f32 %v1758, 0.0
      %v1833 = vmax.f32 %v1763, 0.0
      %v1834 = vmax.f32 %v1768, 0.0
      %v1835 = vmax.f32 %v1773, 0.0
      %v1836 = vmax.f32 %v1778, 0.0
      %v1837 = vmax.f32 %v1783, 0.0
      %v1838 = vmax.f32 %v1788, 0.0
      %v1839 = vmax.f32 %v1793, 0.0
      %v1840 = vmax.f32 %v1798, 0.0
      %v1841 = vmax.f32 %v1803, 0.0
      %v1842 = vmax.f32 %v1808, 0.0
      %v1843 = vld [vmem:[%s3 + $0x10] sm:$0xff]
      %v1844 = vld [vmem:[%s3 + $0x18] sm:$0xff]
      %v1845 = vld [vmem:[%s3 + $0x20] sm:$0xff]
      %v1846 = vld [vmem:[%s3 + $0x28] sm:$0xff]
      %v1847 = vld [vmem:[%s3 + $0x30] sm:$0x1]
      %v1848 = vlaneseq
      %v1849 = vshrl.u32 %v1848, 7
      %v1850 = vsub.s32 0, %v1849
      %v1851 = vrot.slane %v1847, %v1850
      %vm1852 = vcmask 261120
      %v1854 = vsel %vm1852, %v1811, 0
      %v1857 = vsel %vm1852, %v1812, 0
      %v1860 = vsel %vm1852, %v1813, 0
      %v1863 = vsel %vm1852, %v1814, 0
      %v1866 = vsel %vm1852, %v1815, 0
      %v1869 = vsel %vm1852, %v1816, 0
      %v1872 = vsel %vm1852, %v1817, 0
      %v1875 = vsel %vm1852, %v1818, 0
      %v1878 = vsel %vm1852, %v1819, 0
      %v1881 = vsel %vm1852, %v1820, 0
      %v1884 = vsel %vm1852, %v1821, 0
      %v1887 = vsel %vm1852, %v1822, 0
      %v1890 = vsel %vm1852, %v1823, 0
      %v1893 = vsel %vm1852, %v1824, 0
      %v1896 = vsel %vm1852, %v1825, 0
      %v1899 = vsel %vm1852, %v1826, 0
      %v1902 = vsel %vm1852, %v1827, 0
      %v1905 = vsel %vm1852, %v1828, 0
      %v1908 = vsel %vm1852, %v1829, 0
      %v1911 = vsel %vm1852, %v1830, 0
      %v1914 = vsel %vm1852, %v1831, 0
      %v1917 = vsel %vm1852, %v1832, 0
      %v1920 = vsel %vm1852, %v1833, 0
      %v1923 = vsel %vm1852, %v1834, 0
      %v1926 = vsel %vm1852, %v1835, 0
      %v1929 = vsel %vm1852, %v1836, 0
      %v1932 = vsel %vm1852, %v1837, 0
      %v1935 = vsel %vm1852, %v1838, 0
      %v1938 = vsel %vm1852, %v1839, 0
      %v1941 = vsel %vm1852, %v1840, 0
      %v1944 = vsel %vm1852, %v1841, 0
      %v1947 = vsel %vm1852, %v1842, 0
      %1949 = vmatprep.subr.mxu0 0.0
      %1950 = vmatpush1.msra.mxu0 0.0
      %1951 = vmatprep.subr.mxu0 0.0
      %1952 = vmatpush1.msra.mxu0 0.0
      %1953 = vmatprep.subr.mxu0 0.0
      %1954 = vmatpush1.msra.mxu0 0.0
      %1955 = vmatprep.subr.mxu0 0.0
      %1956 = vmatpush1.msra.mxu0 0.0
      %1957 = vmatprep.subr.mxu0 0.0
      %1958 = vmatpush1.msra.mxu0 0.0
      %1959 = vmatprep.subr.mxu0 0.0
      %1960 = vmatpush1.msra.mxu0 0.0
      %1961 = vmatprep.subr.mxu0 0.0
      %1962 = vmatpush1.msra.mxu0 0.0
      %1963 = vmatprep.subr.mxu0 0.0
      %1964 = vmatpush1.msra.mxu0 0.0
      %1965 = vmatprep.subr.mxu0 0.0
      %1966 = vmatpush1.msra.mxu0 0.0
      %1967 = vmatprep.subr.mxu0 0.0
      %1968 = vmatpush1.msra.mxu0 0.0
      %1969 = vmatprep.subr.mxu0 0.0
      %1970 = vmatpush1.msra.mxu0 0.0
      %1971 = vmatprep.subr.mxu0 0.0
      %1972 = vmatpush1.msra.mxu0 0.0
      %1973 = vmatprep.subr.mxu0 0.0
      %1974 = vmatpush1.msra.mxu0 %v1846
      %1975 = vmatprep.subr.mxu0 0.0
      %1976 = vmatpush1.msra.mxu0 %v1845
      %1977 = vmatprep.subr.mxu0 0.0
      %1978 = vmatpush1.msra.mxu0 %v1844
      %1979 = vmatprep.subr.mxu0 0.0
      %1980 = vmatpush1.msra.mxu0 %v1843
      %1981 = vmatprep.subr.mxu0 0.0
      %1982 = vmatpush2.msra.mxu0 0.0
      %1983 = vmatprep.subr.mxu0 0.0
      %1984 = vmatpush2.msra.mxu0 0.0
      %1985 = vmatprep.subr.mxu0 0.0
      %1986 = vmatpush2.msra.mxu0 0.0
      %1987 = vmatprep.subr.mxu0 0.0
      %1988 = vmatpush2.msra.mxu0 0.0
      %1989 = vmatprep.subr.mxu0 0.0
      %1990 = vmatpush2.msra.mxu0 0.0
      %1991 = vmatprep.subr.mxu0 0.0
      %1992 = vmatpush2.msra.mxu0 0.0
      %1993 = vmatprep.subr.mxu0 0.0
      %1994 = vmatpush2.msra.mxu0 0.0
      %1995 = vmatprep.subr.mxu0 0.0
      %1996 = vmatpush2.msra.mxu0 0.0
      %1997 = vmatprep.subr.mxu0 0.0
      %1998 = vmatpush2.msra.mxu0 0.0
      %1999 = vmatprep.subr.mxu0 0.0
      %2000 = vmatpush2.msra.mxu0 0.0
      %2001 = vmatprep.subr.mxu0 0.0
      %2002 = vmatpush2.msra.mxu0 0.0
      %2003 = vmatprep.subr.mxu0 0.0
      %2004 = vmatpush2.msra.mxu0 0.0
      %2005 = vmatprep.subr.mxu0 0.0
      %2006 = vmatpush2.msra.mxu0 0.0
      %2007 = vmatprep.subr.mxu0 0.0
      %2008 = vmatpush2.msra.mxu0 0.0
      %2009 = vmatprep.subr.mxu0 0.0
      %2010 = vmatpush2.msra.mxu0 0.0
      %2011 = vmatprep.subr.mxu0 0.0
      %2012 = vmatpush2.msra.mxu0 0.0
      %2013 = vmatprep.mubr.f32.mxu0 0.0
      %2014 = vmatmul.mubr.f32.gmra.mxu0 %v1854
      %v2015 = vpop.f32.mrf.mxu0
      %v2016 = vadd.f32 %v1851, %v2015
      %v2017 = vpop.f32.mrf.mxu0
      %2018 = vmatprep.mubr.f32.mxu0 0.0
      %2019 = vmatmul.mubr.f32.gmra.mxu0 %v1857
      %v2020 = vpop.f32.mrf.mxu0
      %v2021 = vadd.f32 %v1851, %v2020
      %v2022 = vpop.f32.mrf.mxu0
      %2023 = vmatprep.mubr.f32.mxu0 0.0
      %2024 = vmatmul.mubr.f32.gmra.mxu0 %v1860
      %v2025 = vpop.f32.mrf.mxu0
      %v2026 = vadd.f32 %v1851, %v2025
      %v2027 = vpop.f32.mrf.mxu0
      %2028 = vmatprep.mubr.f32.mxu0 0.0
      %2029 = vmatmul.mubr.f32.gmra.mxu0 %v1863
      %v2030 = vpop.f32.mrf.mxu0
      %v2031 = vadd.f32 %v1851, %v2030
      %v2032 = vpop.f32.mrf.mxu0
      %2033 = vmatprep.mubr.f32.mxu0 0.0
      %2034 = vmatmul.mubr.f32.gmra.mxu0 %v1866
      %v2035 = vpop.f32.mrf.mxu0
      %v2036 = vadd.f32 %v1851, %v2035
      %v2037 = vpop.f32.mrf.mxu0
      %2038 = vmatprep.mubr.f32.mxu0 0.0
      %2039 = vmatmul.mubr.f32.gmra.mxu0 %v1869
      %v2040 = vpop.f32.mrf.mxu0
      %v2041 = vadd.f32 %v1851, %v2040
      %v2042 = vpop.f32.mrf.mxu0
      %2043 = vmatprep.mubr.f32.mxu0 0.0
      %2044 = vmatmul.mubr.f32.gmra.mxu0 %v1872
      %v2045 = vpop.f32.mrf.mxu0
      %v2046 = vadd.f32 %v1851, %v2045
      %v2047 = vpop.f32.mrf.mxu0
      %2048 = vmatprep.mubr.f32.mxu0 0.0
      %2049 = vmatmul.mubr.f32.gmra.mxu0 %v1875
      %v2050 = vpop.f32.mrf.mxu0
      %v2051 = vadd.f32 %v1851, %v2050
      %v2052 = vpop.f32.mrf.mxu0
      %2053 = vmatprep.mubr.f32.mxu0 0.0
      %2054 = vmatmul.mubr.f32.gmra.mxu0 %v1878
      %v2055 = vpop.f32.mrf.mxu0
      %v2056 = vadd.f32 %v1851, %v2055
      %v2057 = vpop.f32.mrf.mxu0
      %2058 = vmatprep.mubr.f32.mxu0 0.0
      %2059 = vmatmul.mubr.f32.gmra.mxu0 %v1881
      %v2060 = vpop.f32.mrf.mxu0
      %v2061 = vadd.f32 %v1851, %v2060
      %v2062 = vpop.f32.mrf.mxu0
      %2063 = vmatprep.mubr.f32.mxu0 0.0
      %2064 = vmatmul.mubr.f32.gmra.mxu0 %v1884
      %v2065 = vpop.f32.mrf.mxu0
      %v2066 = vadd.f32 %v1851, %v2065
      %v2067 = vpop.f32.mrf.mxu0
      %2068 = vmatprep.mubr.f32.mxu0 0.0
      %2069 = vmatmul.mubr.f32.gmra.mxu0 %v1887
      %v2070 = vpop.f32.mrf.mxu0
      %v2071 = vadd.f32 %v1851, %v2070
      %v2072 = vpop.f32.mrf.mxu0
      %2073 = vmatprep.mubr.f32.mxu0 0.0
      %2074 = vmatmul.mubr.f32.gmra.mxu0 %v1890
      %v2075 = vpop.f32.mrf.mxu0
      %v2076 = vadd.f32 %v1851, %v2075
      %v2077 = vpop.f32.mrf.mxu0
      %2078 = vmatprep.mubr.f32.mxu0 0.0
      %2079 = vmatmul.mubr.f32.gmra.mxu0 %v1893
      %v2080 = vpop.f32.mrf.mxu0
      %v2081 = vadd.f32 %v1851, %v2080
      %v2082 = vpop.f32.mrf.mxu0
      %2083 = vmatprep.mubr.f32.mxu0 0.0
      %2084 = vmatmul.mubr.f32.gmra.mxu0 %v1896
      %v2085 = vpop.f32.mrf.mxu0
      %v2086 = vadd.f32 %v1851, %v2085
      %v2087 = vpop.f32.mrf.mxu0
      %2088 = vmatprep.mubr.f32.mxu0 0.0
      %2089 = vmatmul.mubr.f32.gmra.mxu0 %v1899
      %v2090 = vpop.f32.mrf.mxu0
      %v2091 = vadd.f32 %v1851, %v2090
      %v2092 = vpop.f32.mrf.mxu0
      %2093 = vmatprep.mubr.f32.mxu0 0.0
      %2094 = vmatmul.mubr.f32.gmra.mxu0 %v1902
      %v2095 = vpop.f32.mrf.mxu0
      %v2096 = vadd.f32 %v1851, %v2095
      %v2097 = vpop.f32.mrf.mxu0
      %2098 = vmatprep.mubr.f32.mxu0 0.0
      %2099 = vmatmul.mubr.f32.gmra.mxu0 %v1905
      %v2100 = vpop.f32.mrf.mxu0
      %v2101 = vadd.f32 %v1851, %v2100
      %v2102 = vpop.f32.mrf.mxu0
      %2103 = vmatprep.mubr.f32.mxu0 0.0
      %2104 = vmatmul.mubr.f32.gmra.mxu0 %v1908
      %v2105 = vpop.f32.mrf.mxu0
      %v2106 = vadd.f32 %v1851, %v2105
      %v2107 = vpop.f32.mrf.mxu0
      %2108 = vmatprep.mubr.f32.mxu0 0.0
      %2109 = vmatmul.mubr.f32.gmra.mxu0 %v1911
      %v2110 = vpop.f32.mrf.mxu0
      %v2111 = vadd.f32 %v1851, %v2110
      %v2112 = vpop.f32.mrf.mxu0
      %2113 = vmatprep.mubr.f32.mxu0 0.0
      %2114 = vmatmul.mubr.f32.gmra.mxu0 %v1914
      %v2115 = vpop.f32.mrf.mxu0
      %v2116 = vadd.f32 %v1851, %v2115
      %v2117 = vpop.f32.mrf.mxu0
      %2118 = vmatprep.mubr.f32.mxu0 0.0
      %2119 = vmatmul.mubr.f32.gmra.mxu0 %v1917
      %v2120 = vpop.f32.mrf.mxu0
      %v2121 = vadd.f32 %v1851, %v2120
      %v2122 = vpop.f32.mrf.mxu0
      %2123 = vmatprep.mubr.f32.mxu0 0.0
      %2124 = vmatmul.mubr.f32.gmra.mxu0 %v1920
      %v2125 = vpop.f32.mrf.mxu0
      %v2126 = vadd.f32 %v1851, %v2125
      %v2127 = vpop.f32.mrf.mxu0
      %2128 = vmatprep.mubr.f32.mxu0 0.0
      %2129 = vmatmul.mubr.f32.gmra.mxu0 %v1923
      %v2130 = vpop.f32.mrf.mxu0
      %v2131 = vadd.f32 %v1851, %v2130
      %v2132 = vpop.f32.mrf.mxu0
      %2133 = vmatprep.mubr.f32.mxu0 0.0
      %2134 = vmatmul.mubr.f32.gmra.mxu0 %v1926
      %v2135 = vpop.f32.mrf.mxu0
      %v2136 = vadd.f32 %v1851, %v2135
      %v2137 = vpop.f32.mrf.mxu0
      %2138 = vmatprep.mubr.f32.mxu0 0.0
      %2139 = vmatmul.mubr.f32.gmra.mxu0 %v1929
      %v2140 = vpop.f32.mrf.mxu0
      %v2141 = vadd.f32 %v1851, %v2140
      %v2142 = vpop.f32.mrf.mxu0
      %2143 = vmatprep.mubr.f32.mxu0 0.0
      %2144 = vmatmul.mubr.f32.gmra.mxu0 %v1932
      %v2145 = vpop.f32.mrf.mxu0
      %v2146 = vadd.f32 %v1851, %v2145
      %v2147 = vpop.f32.mrf.mxu0
      %2148 = vmatprep.mubr.f32.mxu0 0.0
      %2149 = vmatmul.mubr.f32.gmra.mxu0 %v1935
      %v2150 = vpop.f32.mrf.mxu0
      %v2151 = vadd.f32 %v1851, %v2150
      %v2152 = vpop.f32.mrf.mxu0
      %2153 = vmatprep.mubr.f32.mxu0 0.0
      %2154 = vmatmul.mubr.f32.gmra.mxu0 %v1938
      %v2155 = vpop.f32.mrf.mxu0
      %v2156 = vadd.f32 %v1851, %v2155
      %v2157 = vpop.f32.mrf.mxu0
      %2158 = vmatprep.mubr.f32.mxu0 0.0
      %2159 = vmatmul.mubr.f32.gmra.mxu0 %v1941
      %v2160 = vpop.f32.mrf.mxu0
      %v2161 = vadd.f32 %v1851, %v2160
      %v2162 = vpop.f32.mrf.mxu0
      %2163 = vmatprep.mubr.f32.mxu0 0.0
      %2164 = vmatmul.mubr.f32.gmra.mxu0 %v1944
      %v2165 = vpop.f32.mrf.mxu0
      %v2166 = vadd.f32 %v1851, %v2165
      %v2167 = vpop.f32.mrf.mxu0
      %2168 = vmatprep.mubr.f32.mxu0 0.0
      %2169 = vmatmul.mubr.f32.gmra.mxu0 %v1947
      %v2170 = vpop.f32.mrf.mxu0
      %v2171 = vadd.f32 %v1851, %v2170
      %v2172 = vpop.f32.mrf.mxu0
      %2173 = vdwg.mxu0
      %2174 = vmatprep.subr.mxu0 0.0
      %2175 = vmatpush1.msra.mxu0 0.0
      %2176 = vmatprep.subr.mxu0 0.0
      %2177 = vmatpush1.msra.mxu0 0.0
      %2178 = vmatprep.subr.mxu0 0.0
      %2179 = vmatpush1.msra.mxu0 0.0
      %2180 = vmatprep.subr.mxu0 0.0
      %2181 = vmatpush1.msra.mxu0 0.0
      %2182 = vmatprep.subr.mxu0 0.0
      %2183 = vmatpush1.msra.mxu0 0.0
      %2184 = vmatprep.subr.mxu0 0.0
      %2185 = vmatpush1.msra.mxu0 0.0
      %2186 = vmatprep.subr.mxu0 0.0
      %2187 = vmatpush1.msra.mxu0 0.0
      %2188 = vmatprep.subr.mxu0 0.0
      %2189 = vmatpush1.msra.mxu0 0.0
      %2190 = vmatprep.subr.mxu0 0.0
      %2191 = vmatpush1.msra.mxu0 0.0
      %2192 = vmatprep.subr.mxu0 0.0
      %2193 = vmatpush1.msra.mxu0 0.0
      %2194 = vmatprep.subr.mxu0 0.0
      %2195 = vmatpush1.msra.mxu0 0.0
      %2196 = vmatprep.subr.mxu0 0.0
      %2197 = vmatpush1.msra.mxu0 0.0
      %2198 = vmatprep.subr.mxu0 0.0
      %2199 = vmatpush1.msra.mxu0 0.0
      %2200 = vmatprep.subr.mxu0 0.0
      %2201 = vmatpush1.msra.mxu0 0.0
      %2202 = vmatprep.subr.mxu0 0.0
      %2203 = vmatpush1.msra.mxu0 %v2021
      %2204 = vmatprep.subr.mxu0 0.0
      %2205 = vmatpush1.msra.mxu0 %v2016
      %2206 = vmatprep.subr.mxu0 0.0
      %2207 = vmatpush2.msra.mxu0 0.0
      %2208 = vmatprep.subr.mxu0 0.0
      %2209 = vmatpush2.msra.mxu0 0.0
      %2210 = vmatprep.subr.mxu0 0.0
      %2211 = vmatpush2.msra.mxu0 0.0
      %2212 = vmatprep.subr.mxu0 0.0
      %2213 = vmatpush2.msra.mxu0 0.0
      %2214 = vmatprep.subr.mxu0 0.0
      %2215 = vmatpush2.msra.mxu0 0.0
      %2216 = vmatprep.subr.mxu0 0.0
      %2217 = vmatpush2.msra.mxu0 0.0
      %2218 = vmatprep.subr.mxu0 0.0
      %2219 = vmatpush2.msra.mxu0 0.0
      %2220 = vmatprep.subr.mxu0 0.0
      %2221 = vmatpush2.msra.mxu0 0.0
      %2222 = vmatprep.subr.mxu0 0.0
      %2223 = vmatpush2.msra.mxu0 0.0
      %2224 = vmatprep.subr.mxu0 0.0
      %2225 = vmatpush2.msra.mxu0 0.0
      %2226 = vmatprep.subr.mxu0 0.0
      %2227 = vmatpush2.msra.mxu0 0.0
      %2228 = vmatprep.subr.mxu0 0.0
      %2229 = vmatpush2.msra.mxu0 0.0
      %2230 = vmatprep.subr.mxu0 0.0
      %2231 = vmatpush2.msra.mxu0 0.0
      %2232 = vmatprep.subr.mxu0 0.0
      %2233 = vmatpush2.msra.mxu0 0.0
      %2234 = vmatprep.subr.mxu0 0.0
      %2235 = vmatpush2.msra.mxu0 0.0
      %2236 = vmatprep.subr.mxu0 0.0
      %2237 = vmatpush2.msra.mxu0 0.0
      %2238 = vmatprep.mubr.f32.mxu0 0.0
      %2239 = vmatmul.mubr.f32.gmra.mxu0 %v274
      %v2240 = vpop.f32.mrf.mxu0
      %v2241 = vadd.f32 0.0, %v2240
      %v2242 = vpop.f32.mrf.mxu0
      %2243 = vmatprep.mubr.f32.mxu0 0.0
      %2244 = vmatmul.mubr.f32.gmra.mxu0 %v277
      %v2245 = vpop.f32.mrf.mxu0
      %v2246 = vadd.f32 0.0, %v2245
      %v2247 = vpop.f32.mrf.mxu0
      %2248 = vdwg.mxu0
      %2249 = vmatprep.subr.mxu0 0.0
      %2250 = vmatpush1.msra.mxu0 0.0
      %2251 = vmatprep.subr.mxu0 0.0
      %2252 = vmatpush1.msra.mxu0 0.0
      %2253 = vmatprep.subr.mxu0 0.0
      %2254 = vmatpush1.msra.mxu0 0.0
      %2255 = vmatprep.subr.mxu0 0.0
      %2256 = vmatpush1.msra.mxu0 0.0
      %2257 = vmatprep.subr.mxu0 0.0
      %2258 = vmatpush1.msra.mxu0 0.0
      %2259 = vmatprep.subr.mxu0 0.0
      %2260 = vmatpush1.msra.mxu0 0.0
      %2261 = vmatprep.subr.mxu0 0.0
      %2262 = vmatpush1.msra.mxu0 0.0
      %2263 = vmatprep.subr.mxu0 0.0
      %2264 = vmatpush1.msra.mxu0 0.0
      %2265 = vmatprep.subr.mxu0 0.0
      %2266 = vmatpush1.msra.mxu0 0.0
      %2267 = vmatprep.subr.mxu0 0.0
      %2268 = vmatpush1.msra.mxu0 0.0
      %2269 = vmatprep.subr.mxu0 0.0
      %2270 = vmatpush1.msra.mxu0 0.0
      %2271 = vmatprep.subr.mxu0 0.0
      %2272 = vmatpush1.msra.mxu0 0.0
      %2273 = vmatprep.subr.mxu0 0.0
      %2274 = vmatpush1.msra.mxu0 0.0
      %2275 = vmatprep.subr.mxu0 0.0
      %2276 = vmatpush1.msra.mxu0 0.0
      %2277 = vmatprep.subr.mxu0 0.0
      %2278 = vmatpush1.msra.mxu0 %v2031
      %2279 = vmatprep.subr.mxu0 0.0
      %2280 = vmatpush1.msra.mxu0 %v2026
      %2281 = vmatprep.subr.mxu0 0.0
      %2282 = vmatpush2.msra.mxu0 0.0
      %2283 = vmatprep.subr.mxu0 0.0
      %2284 = vmatpush2.msra.mxu0 0.0
      %2285 = vmatprep.subr.mxu0 0.0
      %2286 = vmatpush2.msra.mxu0 0.0
      %2287 = vmatprep.subr.mxu0 0.0
      %2288 = vmatpush2.msra.mxu0 0.0
      %2289 = vmatprep.subr.mxu0 0.0
      %2290 = vmatpush2.msra.mxu0 0.0
      %2291 = vmatprep.subr.mxu0 0.0
      %2292 = vmatpush2.msra.mxu0 0.0
      %2293 = vmatprep.subr.mxu0 0.0
      %2294 = vmatpush2.msra.mxu0 0.0
      %2295 = vmatprep.subr.mxu0 0.0
      %2296 = vmatpush2.msra.mxu0 0.0
      %2297 = vmatprep.subr.mxu0 0.0
      %2298 = vmatpush2.msra.mxu0 0.0
      %2299 = vmatprep.subr.mxu0 0.0
      %2300 = vmatpush2.msra.mxu0 0.0
      %2301 = vmatprep.subr.mxu0 0.0
      %2302 = vmatpush2.msra.mxu0 0.0
      %2303 = vmatprep.subr.mxu0 0.0
      %2304 = vmatpush2.msra.mxu0 0.0
      %2305 = vmatprep.subr.mxu0 0.0
      %2306 = vmatpush2.msra.mxu0 0.0
      %2307 = vmatprep.subr.mxu0 0.0
      %2308 = vmatpush2.msra.mxu0 0.0
      %2309 = vmatprep.subr.mxu0 0.0
      %2310 = vmatpush2.msra.mxu0 0.0
      %2311 = vmatprep.subr.mxu0 0.0
      %2312 = vmatpush2.msra.mxu0 0.0
      %2313 = vmatprep.mubr.f32.mxu0 0.0
      %2314 = vmatmul.mubr.f32.gmra.mxu0 %v274
      %v2315 = vpop.f32.mrf.mxu0
      %v2316 = vadd.f32 0.0, %v2315
      %v2317 = vpop.f32.mrf.mxu0
      %2318 = vmatprep.mubr.f32.mxu0 0.0
      %2319 = vmatmul.mubr.f32.gmra.mxu0 %v277
      %v2320 = vpop.f32.mrf.mxu0
      %v2321 = vadd.f32 0.0, %v2320
      %v2322 = vpop.f32.mrf.mxu0
      %2323 = vdwg.mxu0
      %2324 = vmatprep.subr.mxu0 0.0
      %2325 = vmatpush1.msra.mxu0 0.0
      %2326 = vmatprep.subr.mxu0 0.0
      %2327 = vmatpush1.msra.mxu0 0.0
      %2328 = vmatprep.subr.mxu0 0.0
      %2329 = vmatpush1.msra.mxu0 0.0
      %2330 = vmatprep.subr.mxu0 0.0
      %2331 = vmatpush1.msra.mxu0 0.0
      %2332 = vmatprep.subr.mxu0 0.0
      %2333 = vmatpush1.msra.mxu0 0.0
      %2334 = vmatprep.subr.mxu0 0.0
      %2335 = vmatpush1.msra.mxu0 0.0
      %2336 = vmatprep.subr.mxu0 0.0
      %2337 = vmatpush1.msra.mxu0 0.0
      %2338 = vmatprep.subr.mxu0 0.0
      %2339 = vmatpush1.msra.mxu0 0.0
      %2340 = vmatprep.subr.mxu0 0.0
      %2341 = vmatpush1.msra.mxu0 0.0
      %2342 = vmatprep.subr.mxu0 0.0
      %2343 = vmatpush1.msra.mxu0 0.0
      %2344 = vmatprep.subr.mxu0 0.0
      %2345 = vmatpush1.msra.mxu0 0.0
      %2346 = vmatprep.subr.mxu0 0.0
      %2347 = vmatpush1.msra.mxu0 0.0
      %2348 = vmatprep.subr.mxu0 0.0
      %2349 = vmatpush1.msra.mxu0 0.0
      %2350 = vmatprep.subr.mxu0 0.0
      %2351 = vmatpush1.msra.mxu0 0.0
      %2352 = vmatprep.subr.mxu0 0.0
      %2353 = vmatpush1.msra.mxu0 %v2041
      %2354 = vmatprep.subr.mxu0 0.0
      %2355 = vmatpush1.msra.mxu0 %v2036
      %2356 = vmatprep.subr.mxu0 0.0
      %2357 = vmatpush2.msra.mxu0 0.0
      %2358 = vmatprep.subr.mxu0 0.0
      %2359 = vmatpush2.msra.mxu0 0.0
      %2360 = vmatprep.subr.mxu0 0.0
      %2361 = vmatpush2.msra.mxu0 0.0
      %2362 = vmatprep.subr.mxu0 0.0
      %2363 = vmatpush2.msra.mxu0 0.0
      %2364 = vmatprep.subr.mxu0 0.0
      %2365 = vmatpush2.msra.mxu0 0.0
      %2366 = vmatprep.subr.mxu0 0.0
      %2367 = vmatpush2.msra.mxu0 0.0
      %2368 = vmatprep.subr.mxu0 0.0
      %2369 = vmatpush2.msra.mxu0 0.0
      %2370 = vmatprep.subr.mxu0 0.0
      %2371 = vmatpush2.msra.mxu0 0.0
      %2372 = vmatprep.subr.mxu0 0.0
      %2373 = vmatpush2.msra.mxu0 0.0
      %2374 = vmatprep.subr.mxu0 0.0
      %2375 = vmatpush2.msra.mxu0 0.0
      %2376 = vmatprep.subr.mxu0 0.0
      %2377 = vmatpush2.msra.mxu0 0.0
      %2378 = vmatprep.subr.mxu0 0.0
      %2379 = vmatpush2.msra.mxu0 0.0
      %2380 = vmatprep.subr.mxu0 0.0
      %2381 = vmatpush2.msra.mxu0 0.0
      %2382 = vmatprep.subr.mxu0 0.0
      %2383 = vmatpush2.msra.mxu0 0.0
      %2384 = vmatprep.subr.mxu0 0.0
      %2385 = vmatpush2.msra.mxu0 0.0
      %2386 = vmatprep.subr.mxu0 0.0
      %2387 = vmatpush2.msra.mxu0 0.0
      %2388 = vmatprep.mubr.f32.mxu0 0.0
      %2389 = vmatmul.mubr.f32.gmra.mxu0 %v274
      %v2390 = vpop.f32.mrf.mxu0
      %v2391 = vadd.f32 0.0, %v2390
      %v2392 = vpop.f32.mrf.mxu0
      %2393 = vmatprep.mubr.f32.mxu0 0.0
      %2394 = vmatmul.mubr.f32.gmra.mxu0 %v277
      %v2395 = vpop.f32.mrf.mxu0
      %v2396 = vadd.f32 0.0, %v2395
      %v2397 = vpop.f32.mrf.mxu0
      %2398 = vdwg.mxu0
      %2399 = vmatprep.subr.mxu0 0.0
      %2400 = vmatpush1.msra.mxu0 0.0
      %2401 = vmatprep.subr.mxu0 0.0
      %2402 = vmatpush1.msra.mxu0 0.0
      %2403 = vmatprep.subr.mxu0 0.0
      %2404 = vmatpush1.msra.mxu0 0.0
      %2405 = vmatprep.subr.mxu0 0.0
      %2406 = vmatpush1.msra.mxu0 0.0
      %2407 = vmatprep.subr.mxu0 0.0
      %2408 = vmatpush1.msra.mxu0 0.0
      %2409 = vmatprep.subr.mxu0 0.0
      %2410 = vmatpush1.msra.mxu0 0.0
      %2411 = vmatprep.subr.mxu0 0.0
      %2412 = vmatpush1.msra.mxu0 0.0
      %2413 = vmatprep.subr.mxu0 0.0
      %2414 = vmatpush1.msra.mxu0 0.0
      %2415 = vmatprep.subr.mxu0 0.0
      %2416 = vmatpush1.msra.mxu0 0.0
      %2417 = vmatprep.subr.mxu0 0.0
      %2418 = vmatpush1.msra.mxu0 0.0
      %2419 = vmatprep.subr.mxu0 0.0
      %2420 = vmatpush1.msra.mxu0 0.0
      %2421 = vmatprep.subr.mxu0 0.0
      %2422 = vmatpush1.msra.mxu0 0.0
      %2423 = vmatprep.subr.mxu0 0.0
      %2424 = vmatpush1.msra.mxu0 0.0
      %2425 = vmatprep.subr.mxu0 0.0
      %2426 = vmatpush1.msra.mxu0 0.0
      %2427 = vmatprep.subr.mxu0 0.0
      %2428 = vmatpush1.msra.mxu0 %v2051
      %2429 = vmatprep.subr.mxu0 0.0
      %2430 = vmatpush1.msra.mxu0 %v2046
      %2431 = vmatprep.subr.mxu0 0.0
      %2432 = vmatpush2.msra.mxu0 0.0
      %2433 = vmatprep.subr.mxu0 0.0
      %2434 = vmatpush2.msra.mxu0 0.0
      %2435 = vmatprep.subr.mxu0 0.0
      %2436 = vmatpush2.msra.mxu0 0.0
      %2437 = vmatprep.subr.mxu0 0.0
      %2438 = vmatpush2.msra.mxu0 0.0
      %2439 = vmatprep.subr.mxu0 0.0
      %2440 = vmatpush2.msra.mxu0 0.0
      %2441 = vmatprep.subr.mxu0 0.0
      %2442 = vmatpush2.msra.mxu0 0.0
      %2443 = vmatprep.subr.mxu0 0.0
      %2444 = vmatpush2.msra.mxu0 0.0
      %2445 = vmatprep.subr.mxu0 0.0
      %2446 = vmatpush2.msra.mxu0 0.0
      %2447 = vmatprep.subr.mxu0 0.0
      %2448 = vmatpush2.msra.mxu0 0.0
      %2449 = vmatprep.subr.mxu0 0.0
      %2450 = vmatpush2.msra.mxu0 0.0
      %2451 = vmatprep.subr.mxu0 0.0
      %2452 = vmatpush2.msra.mxu0 0.0
      %2453 = vmatprep.subr.mxu0 0.0
      %2454 = vmatpush2.msra.mxu0 0.0
      %2455 = vmatprep.subr.mxu0 0.0
      %2456 = vmatpush2.msra.mxu0 0.0
      %2457 = vmatprep.subr.mxu0 0.0
      %2458 = vmatpush2.msra.mxu0 0.0
      %2459 = vmatprep.subr.mxu0 0.0
      %2460 = vmatpush2.msra.mxu0 0.0
      %2461 = vmatprep.subr.mxu0 0.0
      %2462 = vmatpush2.msra.mxu0 0.0
      %2463 = vmatprep.mubr.f32.mxu0 0.0
      %2464 = vmatmul.mubr.f32.gmra.mxu0 %v274
      %v2465 = vpop.f32.mrf.mxu0
      %v2466 = vadd.f32 0.0, %v2465
      %v2467 = vpop.f32.mrf.mxu0
      %2468 = vmatprep.mubr.f32.mxu0 0.0
      %2469 = vmatmul.mubr.f32.gmra.mxu0 %v277
      %v2470 = vpop.f32.mrf.mxu0
      %v2471 = vadd.f32 0.0, %v2470
      %v2472 = vpop.f32.mrf.mxu0
      %2473 = vdwg.mxu0
      %2474 = vmatprep.subr.mxu0 0.0
      %2475 = vmatpush1.msra.mxu0 0.0
      %2476 = vmatprep.subr.mxu0 0.0
      %2477 = vmatpush1.msra.mxu0 0.0
      %2478 = vmatprep.subr.mxu0 0.0
      %2479 = vmatpush1.msra.mxu0 0.0
      %2480 = vmatprep.subr.mxu0 0.0
      %2481 = vmatpush1.msra.mxu0 0.0
      %2482 = vmatprep.subr.mxu0 0.0
      %2483 = vmatpush1.msra.mxu0 0.0
      %2484 = vmatprep.subr.mxu0 0.0
      %2485 = vmatpush1.msra.mxu0 0.0
      %2486 = vmatprep.subr.mxu0 0.0
      %2487 = vmatpush1.msra.mxu0 0.0
      %2488 = vmatprep.subr.mxu0 0.0
      %2489 = vmatpush1.msra.mxu0 0.0
      %2490 = vmatprep.subr.mxu0 0.0
      %2491 = vmatpush1.msra.mxu0 0.0
      %2492 = vmatprep.subr.mxu0 0.0
      %2493 = vmatpush1.msra.mxu0 0.0
      %2494 = vmatprep.subr.mxu0 0.0
      %2495 = vmatpush1.msra.mxu0 0.0
      %2496 = vmatprep.subr.mxu0 0.0
      %2497 = vmatpush1.msra.mxu0 0.0
      %2498 = vmatprep.subr.mxu0 0.0
      %2499 = vmatpush1.msra.mxu0 0.0
      %2500 = vmatprep.subr.mxu0 0.0
      %2501 = vmatpush1.msra.mxu0 0.0
      %2502 = vmatprep.subr.mxu0 0.0
      %2503 = vmatpush1.msra.mxu0 %v2061
      %2504 = vmatprep.subr.mxu0 0.0
      %2505 = vmatpush1.msra.mxu0 %v2056
      %2506 = vmatprep.subr.mxu0 0.0
      %2507 = vmatpush2.msra.mxu0 0.0
      %2508 = vmatprep.subr.mxu0 0.0
      %2509 = vmatpush2.msra.mxu0 0.0
      %2510 = vmatprep.subr.mxu0 0.0
      %2511 = vmatpush2.msra.mxu0 0.0
      %2512 = vmatprep.subr.mxu0 0.0
      %2513 = vmatpush2.msra.mxu0 0.0
      %2514 = vmatprep.subr.mxu0 0.0
      %2515 = vmatpush2.msra.mxu0 0.0
      %2516 = vmatprep.subr.mxu0 0.0
      %2517 = vmatpush2.msra.mxu0 0.0
      %2518 = vmatprep.subr.mxu0 0.0
      %2519 = vmatpush2.msra.mxu0 0.0
      %2520 = vmatprep.subr.mxu0 0.0
      %2521 = vmatpush2.msra.mxu0 0.0
      %2522 = vmatprep.subr.mxu0 0.0
      %2523 = vmatpush2.msra.mxu0 0.0
      %2524 = vmatprep.subr.mxu0 0.0
      %2525 = vmatpush2.msra.mxu0 0.0
      %2526 = vmatprep.subr.mxu0 0.0
      %2527 = vmatpush2.msra.mxu0 0.0
      %2528 = vmatprep.subr.mxu0 0.0
      %2529 = vmatpush2.msra.mxu0 0.0
      %2530 = vmatprep.subr.mxu0 0.0
      %2531 = vmatpush2.msra.mxu0 0.0
      %2532 = vmatprep.subr.mxu0 0.0
      %2533 = vmatpush2.msra.mxu0 0.0
      %2534 = vmatprep.subr.mxu0 0.0
      %2535 = vmatpush2.msra.mxu0 0.0
      %2536 = vmatprep.subr.mxu0 0.0
      %2537 = vmatpush2.msra.mxu0 0.0
      %2538 = vmatprep.mubr.f32.mxu0 0.0
      %2539 = vmatmul.mubr.f32.gmra.mxu0 %v274
      %v2540 = vpop.f32.mrf.mxu0
      %v2541 = vadd.f32 0.0, %v2540
      %v2542 = vpop.f32.mrf.mxu0
      %2543 = vmatprep.mubr.f32.mxu0 0.0
      %2544 = vmatmul.mubr.f32.gmra.mxu0 %v277
      %v2545 = vpop.f32.mrf.mxu0
      %v2546 = vadd.f32 0.0, %v2545
      %v2547 = vpop.f32.mrf.mxu0
      %2548 = vdwg.mxu0
      %2549 = vmatprep.subr.mxu0 0.0
      %2550 = vmatpush1.msra.mxu0 0.0
      %2551 = vmatprep.subr.mxu0 0.0
      %2552 = vmatpush1.msra.mxu0 0.0
      %2553 = vmatprep.subr.mxu0 0.0
      %2554 = vmatpush1.msra.mxu0 0.0
      %2555 = vmatprep.subr.mxu0 0.0
      %2556 = vmatpush1.msra.mxu0 0.0
      %2557 = vmatprep.subr.mxu0 0.0
      %2558 = vmatpush1.msra.mxu0 0.0
      %2559 = vmatprep.subr.mxu0 0.0
      %2560 = vmatpush1.msra.mxu0 0.0
      %2561 = vmatprep.subr.mxu0 0.0
      %2562 = vmatpush1.msra.mxu0 0.0
      %2563 = vmatprep.subr.mxu0 0.0
      %2564 = vmatpush1.msra.mxu0 0.0
      %2565 = vmatprep.subr.mxu0 0.0
      %2566 = vmatpush1.msra.mxu0 0.0
      %2567 = vmatprep.subr.mxu0 0.0
      %2568 = vmatpush1.msra.mxu0 0.0
      %2569 = vmatprep.subr.mxu0 0.0
      %2570 = vmatpush1.msra.mxu0 0.0
      %2571 = vmatprep.subr.mxu0 0.0
      %2572 = vmatpush1.msra.mxu0 0.0
      %2573 = vmatprep.subr.mxu0 0.0
      %2574 = vmatpush1.msra.mxu0 0.0
      %2575 = vmatprep.subr.mxu0 0.0
      %2576 = vmatpush1.msra.mxu0 0.0
      %2577 = vmatprep.subr.mxu0 0.0
      %2578 = vmatpush1.msra.mxu0 %v2071
      %2579 = vmatprep.subr.mxu0 0.0
      %2580 = vmatpush1.msra.mxu0 %v2066
      %2581 = vmatprep.subr.mxu0 0.0
      %2582 = vmatpush2.msra.mxu0 0.0
      %2583 = vmatprep.subr.mxu0 0.0
      %2584 = vmatpush2.msra.mxu0 0.0
      %2585 = vmatprep.subr.mxu0 0.0
      %2586 = vmatpush2.msra.mxu0 0.0
      %2587 = vmatprep.subr.mxu0 0.0
      %2588 = vmatpush2.msra.mxu0 0.0
      %2589 = vmatprep.subr.mxu0 0.0
      %2590 = vmatpush2.msra.mxu0 0.0
      %2591 = vmatprep.subr.mxu0 0.0
      %2592 = vmatpush2.msra.mxu0 0.0
      %2593 = vmatprep.subr.mxu0 0.0
      %2594 = vmatpush2.msra.mxu0 0.0
      %2595 = vmatprep.subr.mxu0 0.0
      %2596 = vmatpush2.msra.mxu0 0.0
      %2597 = vmatprep.subr.mxu0 0.0
      %2598 = vmatpush2.msra.mxu0 0.0
      %2599 = vmatprep.subr.mxu0 0.0
      %2600 = vmatpush2.msra.mxu0 0.0
      %2601 = vmatprep.subr.mxu0 0.0
      %2602 = vmatpush2.msra.mxu0 0.0
      %2603 = vmatprep.subr.mxu0 0.0
      %2604 = vmatpush2.msra.mxu0 0.0
      %2605 = vmatprep.subr.mxu0 0.0
      %2606 = vmatpush2.msra.mxu0 0.0
      %2607 = vmatprep.subr.mxu0 0.0
      %2608 = vmatpush2.msra.mxu0 0.0
      %2609 = vmatprep.subr.mxu0 0.0
      %2610 = vmatpush2.msra.mxu0 0.0
      %2611 = vmatprep.subr.mxu0 0.0
      %2612 = vmatpush2.msra.mxu0 0.0
      %2613 = vmatprep.mubr.f32.mxu0 0.0
      %2614 = vmatmul.mubr.f32.gmra.mxu0 %v274
      %v2615 = vpop.f32.mrf.mxu0
      %v2616 = vadd.f32 0.0, %v2615
      %v2617 = vpop.f32.mrf.mxu0
      %2618 = vmatprep.mubr.f32.mxu0 0.0
      %2619 = vmatmul.mubr.f32.gmra.mxu0 %v277
      %v2620 = vpop.f32.mrf.mxu0
      %v2621 = vadd.f32 0.0, %v2620
      %v2622 = vpop.f32.mrf.mxu0
      %2623 = vdwg.mxu0
      %2624 = vmatprep.subr.mxu0 0.0
      %2625 = vmatpush1.msra.mxu0 0.0
      %2626 = vmatprep.subr.mxu0 0.0
      %2627 = vmatpush1.msra.mxu0 0.0
      %2628 = vmatprep.subr.mxu0 0.0
      %2629 = vmatpush1.msra.mxu0 0.0
      %2630 = vmatprep.subr.mxu0 0.0
      %2631 = vmatpush1.msra.mxu0 0.0
      %2632 = vmatprep.subr.mxu0 0.0
      %2633 = vmatpush1.msra.mxu0 0.0
      %2634 = vmatprep.subr.mxu0 0.0
      %2635 = vmatpush1.msra.mxu0 0.0
      %2636 = vmatprep.subr.mxu0 0.0
      %2637 = vmatpush1.msra.mxu0 0.0
      %2638 = vmatprep.subr.mxu0 0.0
      %2639 = vmatpush1.msra.mxu0 0.0
      %2640 = vmatprep.subr.mxu0 0.0
      %2641 = vmatpush1.msra.mxu0 0.0
      %2642 = vmatprep.subr.mxu0 0.0
      %2643 = vmatpush1.msra.mxu0 0.0
      %2644 = vmatprep.subr.mxu0 0.0
      %2645 = vmatpush1.msra.mxu0 0.0
      %2646 = vmatprep.subr.mxu0 0.0
      %2647 = vmatpush1.msra.mxu0 0.0
      %2648 = vmatprep.subr.mxu0 0.0
      %2649 = vmatpush1.msra.mxu0 0.0
      %2650 = vmatprep.subr.mxu0 0.0
      %2651 = vmatpush1.msra.mxu0 0.0
      %2652 = vmatprep.subr.mxu0 0.0
      %2653 = vmatpush1.msra.mxu0 %v2081
      %2654 = vmatprep.subr.mxu0 0.0
      %2655 = vmatpush1.msra.mxu0 %v2076
      %2656 = vmatprep.subr.mxu0 0.0
      %2657 = vmatpush2.msra.mxu0 0.0
      %2658 = vmatprep.subr.mxu0 0.0
      %2659 = vmatpush2.msra.mxu0 0.0
      %2660 = vmatprep.subr.mxu0 0.0
      %2661 = vmatpush2.msra.mxu0 0.0
      %2662 = vmatprep.subr.mxu0 0.0
      %2663 = vmatpush2.msra.mxu0 0.0
      %2664 = vmatprep.subr.mxu0 0.0
      %2665 = vmatpush2.msra.mxu0 0.0
      %2666 = vmatprep.subr.mxu0 0.0
      %2667 = vmatpush2.msra.mxu0 0.0
      %2668 = vmatprep.subr.mxu0 0.0
      %2669 = vmatpush2.msra.mxu0 0.0
      %2670 = vmatprep.subr.mxu0 0.0
      %2671 = vmatpush2.msra.mxu0 0.0
      %2672 = vmatprep.subr.mxu0 0.0
      %2673 = vmatpush2.msra.mxu0 0.0
      %2674 = vmatprep.subr.mxu0 0.0
      %2675 = vmatpush2.msra.mxu0 0.0
      %2676 = vmatprep.subr.mxu0 0.0
      %2677 = vmatpush2.msra.mxu0 0.0
      %2678 = vmatprep.subr.mxu0 0.0
      %2679 = vmatpush2.msra.mxu0 0.0
      %2680 = vmatprep.subr.mxu0 0.0
      %2681 = vmatpush2.msra.mxu0 0.0
      %2682 = vmatprep.subr.mxu0 0.0
      %2683 = vmatpush2.msra.mxu0 0.0
      %2684 = vmatprep.subr.mxu0 0.0
      %2685 = vmatpush2.msra.mxu0 0.0
      %2686 = vmatprep.subr.mxu0 0.0
      %2687 = vmatpush2.msra.mxu0 0.0
      %2688 = vmatprep.mubr.f32.mxu0 0.0
      %2689 = vmatmul.mubr.f32.gmra.mxu0 %v274
      %v2690 = vpop.f32.mrf.mxu0
      %v2691 = vadd.f32 0.0, %v2690
      %v2692 = vpop.f32.mrf.mxu0
      %2693 = vmatprep.mubr.f32.mxu0 0.0
      %2694 = vmatmul.mubr.f32.gmra.mxu0 %v277
      %v2695 = vpop.f32.mrf.mxu0
      %v2696 = vadd.f32 0.0, %v2695
      %v2697 = vpop.f32.mrf.mxu0
      %2698 = vdwg.mxu0
      %2699 = vmatprep.subr.mxu0 0.0
      %2700 = vmatpush1.msra.mxu0 0.0
      %2701 = vmatprep.subr.mxu0 0.0
      %2702 = vmatpush1.msra.mxu0 0.0
      %2703 = vmatprep.subr.mxu0 0.0
      %2704 = vmatpush1.msra.mxu0 0.0
      %2705 = vmatprep.subr.mxu0 0.0
      %2706 = vmatpush1.msra.mxu0 0.0
      %2707 = vmatprep.subr.mxu0 0.0
      %2708 = vmatpush1.msra.mxu0 0.0
      %2709 = vmatprep.subr.mxu0 0.0
      %2710 = vmatpush1.msra.mxu0 0.0
      %2711 = vmatprep.subr.mxu0 0.0
      %2712 = vmatpush1.msra.mxu0 0.0
      %2713 = vmatprep.subr.mxu0 0.0
      %2714 = vmatpush1.msra.mxu0 0.0
      %2715 = vmatprep.subr.mxu0 0.0
      %2716 = vmatpush1.msra.mxu0 0.0
      %2717 = vmatprep.subr.mxu0 0.0
      %2718 = vmatpush1.msra.mxu0 0.0
      %2719 = vmatprep.subr.mxu0 0.0
      %2720 = vmatpush1.msra.mxu0 0.0
      %2721 = vmatprep.subr.mxu0 0.0
      %2722 = vmatpush1.msra.mxu0 0.0
      %2723 = vmatprep.subr.mxu0 0.0
      %2724 = vmatpush1.msra.mxu0 0.0
      %2725 = vmatprep.subr.mxu0 0.0
      %2726 = vmatpush1.msra.mxu0 0.0
      %2727 = vmatprep.subr.mxu0 0.0
      %2728 = vmatpush1.msra.mxu0 %v2091
      %2729 = vmatprep.subr.mxu0 0.0
      %2730 = vmatpush1.msra.mxu0 %v2086
      %2731 = vmatprep.subr.mxu0 0.0
      %2732 = vmatpush2.msra.mxu0 0.0
      %2733 = vmatprep.subr.mxu0 0.0
      %2734 = vmatpush2.msra.mxu0 0.0
      %2735 = vmatprep.subr.mxu0 0.0
      %2736 = vmatpush2.msra.mxu0 0.0
      %2737 = vmatprep.subr.mxu0 0.0
      %2738 = vmatpush2.msra.mxu0 0.0
      %2739 = vmatprep.subr.mxu0 0.0
      %2740 = vmatpush2.msra.mxu0 0.0
      %2741 = vmatprep.subr.mxu0 0.0
      %2742 = vmatpush2.msra.mxu0 0.0
      %2743 = vmatprep.subr.mxu0 0.0
      %2744 = vmatpush2.msra.mxu0 0.0
      %2745 = vmatprep.subr.mxu0 0.0
      %2746 = vmatpush2.msra.mxu0 0.0
      %2747 = vmatprep.subr.mxu0 0.0
      %2748 = vmatpush2.msra.mxu0 0.0
      %2749 = vmatprep.subr.mxu0 0.0
      %2750 = vmatpush2.msra.mxu0 0.0
      %2751 = vmatprep.subr.mxu0 0.0
      %2752 = vmatpush2.msra.mxu0 0.0
      %2753 = vmatprep.subr.mxu0 0.0
      %2754 = vmatpush2.msra.mxu0 0.0
      %2755 = vmatprep.subr.mxu0 0.0
      %2756 = vmatpush2.msra.mxu0 0.0
      %2757 = vmatprep.subr.mxu0 0.0
      %2758 = vmatpush2.msra.mxu0 0.0
      %2759 = vmatprep.subr.mxu0 0.0
      %2760 = vmatpush2.msra.mxu0 0.0
      %2761 = vmatprep.subr.mxu0 0.0
      %2762 = vmatpush2.msra.mxu0 0.0
      %2763 = vmatprep.mubr.f32.mxu0 0.0
      %2764 = vmatmul.mubr.f32.gmra.mxu0 %v274
      %v2765 = vpop.f32.mrf.mxu0
      %v2766 = vadd.f32 0.0, %v2765
      %v2767 = vpop.f32.mrf.mxu0
      %2768 = vmatprep.mubr.f32.mxu0 0.0
      %2769 = vmatmul.mubr.f32.gmra.mxu0 %v277
      %v2770 = vpop.f32.mrf.mxu0
      %v2771 = vadd.f32 0.0, %v2770
      %v2772 = vpop.f32.mrf.mxu0
      %2773 = vdwg.mxu0
      %2774 = vmatprep.subr.mxu0 0.0
      %2775 = vmatpush1.msra.mxu0 0.0
      %2776 = vmatprep.subr.mxu0 0.0
      %2777 = vmatpush1.msra.mxu0 0.0
      %2778 = vmatprep.subr.mxu0 0.0
      %2779 = vmatpush1.msra.mxu0 0.0
      %2780 = vmatprep.subr.mxu0 0.0
      %2781 = vmatpush1.msra.mxu0 0.0
      %2782 = vmatprep.subr.mxu0 0.0
      %2783 = vmatpush1.msra.mxu0 0.0
      %2784 = vmatprep.subr.mxu0 0.0
      %2785 = vmatpush1.msra.mxu0 0.0
      %2786 = vmatprep.subr.mxu0 0.0
      %2787 = vmatpush1.msra.mxu0 0.0
      %2788 = vmatprep.subr.mxu0 0.0
      %2789 = vmatpush1.msra.mxu0 0.0
      %2790 = vmatprep.subr.mxu0 0.0
      %2791 = vmatpush1.msra.mxu0 0.0
      %2792 = vmatprep.subr.mxu0 0.0
      %2793 = vmatpush1.msra.mxu0 0.0
      %2794 = vmatprep.subr.mxu0 0.0
      %2795 = vmatpush1.msra.mxu0 0.0
      %2796 = vmatprep.subr.mxu0 0.0
      %2797 = vmatpush1.msra.mxu0 0.0
      %2798 = vmatprep.subr.mxu0 0.0
      %2799 = vmatpush1.msra.mxu0 0.0
      %2800 = vmatprep.subr.mxu0 0.0
      %2801 = vmatpush1.msra.mxu0 0.0
      %2802 = vmatprep.subr.mxu0 0.0
      %2803 = vmatpush1.msra.mxu0 %v2101
      %2804 = vmatprep.subr.mxu0 0.0
      %2805 = vmatpush1.msra.mxu0 %v2096
      %2806 = vmatprep.subr.mxu0 0.0
      %2807 = vmatpush2.msra.mxu0 0.0
      %2808 = vmatprep.subr.mxu0 0.0
      %2809 = vmatpush2.msra.mxu0 0.0
      %2810 = vmatprep.subr.mxu0 0.0
      %2811 = vmatpush2.msra.mxu0 0.0
      %2812 = vmatprep.subr.mxu0 0.0
      %2813 = vmatpush2.msra.mxu0 0.0
      %2814 = vmatprep.subr.mxu0 0.0
      %2815 = vmatpush2.msra.mxu0 0.0
      %2816 = vmatprep.subr.mxu0 0.0
      %2817 = vmatpush2.msra.mxu0 0.0
      %2818 = vmatprep.subr.mxu0 0.0
      %2819 = vmatpush2.msra.mxu0 0.0
      %2820 = vmatprep.subr.mxu0 0.0
      %2821 = vmatpush2.msra.mxu0 0.0
      %2822 = vmatprep.subr.mxu0 0.0
      %2823 = vmatpush2.msra.mxu0 0.0
      %2824 = vmatprep.subr.mxu0 0.0
      %2825 = vmatpush2.msra.mxu0 0.0
      %2826 = vmatprep.subr.mxu0 0.0
      %2827 = vmatpush2.msra.mxu0 0.0
      %2828 = vmatprep.subr.mxu0 0.0
      %2829 = vmatpush2.msra.mxu0 0.0
      %2830 = vmatprep.subr.mxu0 0.0
      %2831 = vmatpush2.msra.mxu0 0.0
      %2832 = vmatprep.subr.mxu0 0.0
      %2833 = vmatpush2.msra.mxu0 0.0
      %2834 = vmatprep.subr.mxu0 0.0
      %2835 = vmatpush2.msra.mxu0 0.0
      %2836 = vmatprep.subr.mxu0 0.0
      %2837 = vmatpush2.msra.mxu0 0.0
      %2838 = vmatprep.mubr.f32.mxu0 0.0
      %2839 = vmatmul.mubr.f32.gmra.mxu0 %v274
      %v2840 = vpop.f32.mrf.mxu0
      %v2841 = vadd.f32 0.0, %v2840
      %v2842 = vpop.f32.mrf.mxu0
      %2843 = vmatprep.mubr.f32.mxu0 0.0
      %2844 = vmatmul.mubr.f32.gmra.mxu0 %v277
      %v2845 = vpop.f32.mrf.mxu0
      %v2846 = vadd.f32 0.0, %v2845
      %v2847 = vpop.f32.mrf.mxu0
      %2848 = vdwg.mxu0
      %2849 = vmatprep.subr.mxu0 0.0
      %2850 = vmatpush1.msra.mxu0 0.0
      %2851 = vmatprep.subr.mxu0 0.0
      %2852 = vmatpush1.msra.mxu0 0.0
      %2853 = vmatprep.subr.mxu0 0.0
      %2854 = vmatpush1.msra.mxu0 0.0
      %2855 = vmatprep.subr.mxu0 0.0
      %2856 = vmatpush1.msra.mxu0 0.0
      %2857 = vmatprep.subr.mxu0 0.0
      %2858 = vmatpush1.msra.mxu0 0.0
      %2859 = vmatprep.subr.mxu0 0.0
      %2860 = vmatpush1.msra.mxu0 0.0
      %2861 = vmatprep.subr.mxu0 0.0
      %2862 = vmatpush1.msra.mxu0 0.0
      %2863 = vmatprep.subr.mxu0 0.0
      %2864 = vmatpush1.msra.mxu0 0.0
      %2865 = vmatprep.subr.mxu0 0.0
      %2866 = vmatpush1.msra.mxu0 0.0
      %2867 = vmatprep.subr.mxu0 0.0
      %2868 = vmatpush1.msra.mxu0 0.0
      %2869 = vmatprep.subr.mxu0 0.0
      %2870 = vmatpush1.msra.mxu0 0.0
      %2871 = vmatprep.subr.mxu0 0.0
      %2872 = vmatpush1.msra.mxu0 0.0
      %2873 = vmatprep.subr.mxu0 0.0
      %2874 = vmatpush1.msra.mxu0 0.0
      %2875 = vmatprep.subr.mxu0 0.0
      %2876 = vmatpush1.msra.mxu0 0.0
      %2877 = vmatprep.subr.mxu0 0.0
      %2878 = vmatpush1.msra.mxu0 %v2111
      %2879 = vmatprep.subr.mxu0 0.0
      %2880 = vmatpush1.msra.mxu0 %v2106
      %2881 = vmatprep.subr.mxu0 0.0
      %2882 = vmatpush2.msra.mxu0 0.0
      %2883 = vmatprep.subr.mxu0 0.0
      %2884 = vmatpush2.msra.mxu0 0.0
      %2885 = vmatprep.subr.mxu0 0.0
      %2886 = vmatpush2.msra.mxu0 0.0
      %2887 = vmatprep.subr.mxu0 0.0
      %2888 = vmatpush2.msra.mxu0 0.0
      %2889 = vmatprep.subr.mxu0 0.0
      %2890 = vmatpush2.msra.mxu0 0.0
      %2891 = vmatprep.subr.mxu0 0.0
      %2892 = vmatpush2.msra.mxu0 0.0
      %2893 = vmatprep.subr.mxu0 0.0
      %2894 = vmatpush2.msra.mxu0 0.0
      %2895 = vmatprep.subr.mxu0 0.0
      %2896 = vmatpush2.msra.mxu0 0.0
      %2897 = vmatprep.subr.mxu0 0.0
      %2898 = vmatpush2.msra.mxu0 0.0
      %2899 = vmatprep.subr.mxu0 0.0
      %2900 = vmatpush2.msra.mxu0 0.0
      %2901 = vmatprep.subr.mxu0 0.0
      %2902 = vmatpush2.msra.mxu0 0.0
      %2903 = vmatprep.subr.mxu0 0.0
      %2904 = vmatpush2.msra.mxu0 0.0
      %2905 = vmatprep.subr.mxu0 0.0
      %2906 = vmatpush2.msra.mxu0 0.0
      %2907 = vmatprep.subr.mxu0 0.0
      %2908 = vmatpush2.msra.mxu0 0.0
      %2909 = vmatprep.subr.mxu0 0.0
      %2910 = vmatpush2.msra.mxu0 0.0
      %2911 = vmatprep.subr.mxu0 0.0
      %2912 = vmatpush2.msra.mxu0 0.0
      %2913 = vmatprep.mubr.f32.mxu0 0.0
      %2914 = vmatmul.mubr.f32.gmra.mxu0 %v274
      %v2915 = vpop.f32.mrf.mxu0
      %v2916 = vadd.f32 0.0, %v2915
      %v2917 = vpop.f32.mrf.mxu0
      %2918 = vmatprep.mubr.f32.mxu0 0.0
      %2919 = vmatmul.mubr.f32.gmra.mxu0 %v277
      %v2920 = vpop.f32.mrf.mxu0
      %v2921 = vadd.f32 0.0, %v2920
      %v2922 = vpop.f32.mrf.mxu0
      %2923 = vdwg.mxu0
      %2924 = vmatprep.subr.mxu0 0.0
      %2925 = vmatpush1.msra.mxu0 0.0
      %2926 = vmatprep.subr.mxu0 0.0
      %2927 = vmatpush1.msra.mxu0 0.0
      %2928 = vmatprep.subr.mxu0 0.0
      %2929 = vmatpush1.msra.mxu0 0.0
      %2930 = vmatprep.subr.mxu0 0.0
      %2931 = vmatpush1.msra.mxu0 0.0
      %2932 = vmatprep.subr.mxu0 0.0
      %2933 = vmatpush1.msra.mxu0 0.0
      %2934 = vmatprep.subr.mxu0 0.0
      %2935 = vmatpush1.msra.mxu0 0.0
      %2936 = vmatprep.subr.mxu0 0.0
      %2937 = vmatpush1.msra.mxu0 0.0
      %2938 = vmatprep.subr.mxu0 0.0
      %2939 = vmatpush1.msra.mxu0 0.0
      %2940 = vmatprep.subr.mxu0 0.0
      %2941 = vmatpush1.msra.mxu0 0.0
      %2942 = vmatprep.subr.mxu0 0.0
      %2943 = vmatpush1.msra.mxu0 0.0
      %2944 = vmatprep.subr.mxu0 0.0
      %2945 = vmatpush1.msra.mxu0 0.0
      %2946 = vmatprep.subr.mxu0 0.0
      %2947 = vmatpush1.msra.mxu0 0.0
      %2948 = vmatprep.subr.mxu0 0.0
      %2949 = vmatpush1.msra.mxu0 0.0
      %2950 = vmatprep.subr.mxu0 0.0
      %2951 = vmatpush1.msra.mxu0 0.0
      %2952 = vmatprep.subr.mxu0 0.0
      %2953 = vmatpush1.msra.mxu0 %v2121
      %2954 = vmatprep.subr.mxu0 0.0
      %2955 = vmatpush1.msra.mxu0 %v2116
      %2956 = vmatprep.subr.mxu0 0.0
      %2957 = vmatpush2.msra.mxu0 0.0
      %2958 = vmatprep.subr.mxu0 0.0
      %2959 = vmatpush2.msra.mxu0 0.0
      %2960 = vmatprep.subr.mxu0 0.0
      %2961 = vmatpush2.msra.mxu0 0.0
      %2962 = vmatprep.subr.mxu0 0.0
      %2963 = vmatpush2.msra.mxu0 0.0
      %2964 = vmatprep.subr.mxu0 0.0
      %2965 = vmatpush2.msra.mxu0 0.0
      %2966 = vmatprep.subr.mxu0 0.0
      %2967 = vmatpush2.msra.mxu0 0.0
      %2968 = vmatprep.subr.mxu0 0.0
      %2969 = vmatpush2.msra.mxu0 0.0
      %2970 = vmatprep.subr.mxu0 0.0
      %2971 = vmatpush2.msra.mxu0 0.0
      %2972 = vmatprep.subr.mxu0 0.0
      %2973 = vmatpush2.msra.mxu0 0.0
      %2974 = vmatprep.subr.mxu0 0.0
      %2975 = vmatpush2.msra.mxu0 0.0
      %2976 = vmatprep.subr.mxu0 0.0
      %2977 = vmatpush2.msra.mxu0 0.0
      %2978 = vmatprep.subr.mxu0 0.0
      %2979 = vmatpush2.msra.mxu0 0.0
      %2980 = vmatprep.subr.mxu0 0.0
      %2981 = vmatpush2.msra.mxu0 0.0
      %2982 = vmatprep.subr.mxu0 0.0
      %2983 = vmatpush2.msra.mxu0 0.0
      %2984 = vmatprep.subr.mxu0 0.0
      %2985 = vmatpush2.msra.mxu0 0.0
      %2986 = vmatprep.subr.mxu0 0.0
      %2987 = vmatpush2.msra.mxu0 0.0
      %2988 = vmatprep.mubr.f32.mxu0 0.0
      %2989 = vmatmul.mubr.f32.gmra.mxu0 %v274
      %v2990 = vpop.f32.mrf.mxu0
      %v2991 = vadd.f32 0.0, %v2990
      %v2992 = vpop.f32.mrf.mxu0
      %2993 = vmatprep.mubr.f32.mxu0 0.0
      %2994 = vmatmul.mubr.f32.gmra.mxu0 %v277
      %v2995 = vpop.f32.mrf.mxu0
      %v2996 = vadd.f32 0.0, %v2995
      %v2997 = vpop.f32.mrf.mxu0
      %2998 = vdwg.mxu0
      %2999 = vmatprep.subr.mxu0 0.0
      %3000 = vmatpush1.msra.mxu0 0.0
      %3001 = vmatprep.subr.mxu0 0.0
      %3002 = vmatpush1.msra.mxu0 0.0
      %3003 = vmatprep.subr.mxu0 0.0
      %3004 = vmatpush1.msra.mxu0 0.0
      %3005 = vmatprep.subr.mxu0 0.0
      %3006 = vmatpush1.msra.mxu0 0.0
      %3007 = vmatprep.subr.mxu0 0.0
      %3008 = vmatpush1.msra.mxu0 0.0
      %3009 = vmatprep.subr.mxu0 0.0
      %3010 = vmatpush1.msra.mxu0 0.0
      %3011 = vmatprep.subr.mxu0 0.0
      %3012 = vmatpush1.msra.mxu0 0.0
      %3013 = vmatprep.subr.mxu0 0.0
      %3014 = vmatpush1.msra.mxu0 0.0
      %3015 = vmatprep.subr.mxu0 0.0
      %3016 = vmatpush1.msra.mxu0 0.0
      %3017 = vmatprep.subr.mxu0 0.0
      %3018 = vmatpush1.msra.mxu0 0.0
      %3019 = vmatprep.subr.mxu0 0.0
      %3020 = vmatpush1.msra.mxu0 0.0
      %3021 = vmatprep.subr.mxu0 0.0
      %3022 = vmatpush1.msra.mxu0 0.0
      %3023 = vmatprep.subr.mxu0 0.0
      %3024 = vmatpush1.msra.mxu0 0.0
      %3025 = vmatprep.subr.mxu0 0.0
      %3026 = vmatpush1.msra.mxu0 0.0
      %3027 = vmatprep.subr.mxu0 0.0
      %3028 = vmatpush1.msra.mxu0 %v2131
      %3029 = vmatprep.subr.mxu0 0.0
      %3030 = vmatpush1.msra.mxu0 %v2126
      %3031 = vmatprep.subr.mxu0 0.0
      %3032 = vmatpush2.msra.mxu0 0.0
      %3033 = vmatprep.subr.mxu0 0.0
      %3034 = vmatpush2.msra.mxu0 0.0
      %3035 = vmatprep.subr.mxu0 0.0
      %3036 = vmatpush2.msra.mxu0 0.0
      %3037 = vmatprep.subr.mxu0 0.0
      %3038 = vmatpush2.msra.mxu0 0.0
      %3039 = vmatprep.subr.mxu0 0.0
      %3040 = vmatpush2.msra.mxu0 0.0
      %3041 = vmatprep.subr.mxu0 0.0
      %3042 = vmatpush2.msra.mxu0 0.0
      %3043 = vmatprep.subr.mxu0 0.0
      %3044 = vmatpush2.msra.mxu0 0.0
      %3045 = vmatprep.subr.mxu0 0.0
      %3046 = vmatpush2.msra.mxu0 0.0
      %3047 = vmatprep.subr.mxu0 0.0
      %3048 = vmatpush2.msra.mxu0 0.0
      %3049 = vmatprep.subr.mxu0 0.0
      %3050 = vmatpush2.msra.mxu0 0.0
      %3051 = vmatprep.subr.mxu0 0.0
      %3052 = vmatpush2.msra.mxu0 0.0
      %3053 = vmatprep.subr.mxu0 0.0
      %3054 = vmatpush2.msra.mxu0 0.0
      %3055 = vmatprep.subr.mxu0 0.0
      %3056 = vmatpush2.msra.mxu0 0.0
      %3057 = vmatprep.subr.mxu0 0.0
      %3058 = vmatpush2.msra.mxu0 0.0
      %3059 = vmatprep.subr.mxu0 0.0
      %3060 = vmatpush2.msra.mxu0 0.0
      %3061 = vmatprep.subr.mxu0 0.0
      %3062 = vmatpush2.msra.mxu0 0.0
      %3063 = vmatprep.mubr.f32.mxu0 0.0
      %3064 = vmatmul.mubr.f32.gmra.mxu0 %v274
      %v3065 = vpop.f32.mrf.mxu0
      %v3066 = vadd.f32 0.0, %v3065
      %v3067 = vpop.f32.mrf.mxu0
      %3068 = vmatprep.mubr.f32.mxu0 0.0
      %3069 = vmatmul.mubr.f32.gmra.mxu0 %v277
      %v3070 = vpop.f32.mrf.mxu0
      %v3071 = vadd.f32 0.0, %v3070
      %v3072 = vpop.f32.mrf.mxu0
      %3073 = vdwg.mxu0
      %3074 = vmatprep.subr.mxu0 0.0
      %3075 = vmatpush1.msra.mxu0 0.0
      %3076 = vmatprep.subr.mxu0 0.0
      %3077 = vmatpush1.msra.mxu0 0.0
      %3078 = vmatprep.subr.mxu0 0.0
      %3079 = vmatpush1.msra.mxu0 0.0
      %3080 = vmatprep.subr.mxu0 0.0
      %3081 = vmatpush1.msra.mxu0 0.0
      %3082 = vmatprep.subr.mxu0 0.0
      %3083 = vmatpush1.msra.mxu0 0.0
      %3084 = vmatprep.subr.mxu0 0.0
      %3085 = vmatpush1.msra.mxu0 0.0
      %3086 = vmatprep.subr.mxu0 0.0
      %3087 = vmatpush1.msra.mxu0 0.0
      %3088 = vmatprep.subr.mxu0 0.0
      %3089 = vmatpush1.msra.mxu0 0.0
      %3090 = vmatprep.subr.mxu0 0.0
      %3091 = vmatpush1.msra.mxu0 0.0
      %3092 = vmatprep.subr.mxu0 0.0
      %3093 = vmatpush1.msra.mxu0 0.0
      %3094 = vmatprep.subr.mxu0 0.0
      %3095 = vmatpush1.msra.mxu0 0.0
      %3096 = vmatprep.subr.mxu0 0.0
      %3097 = vmatpush1.msra.mxu0 0.0
      %3098 = vmatprep.subr.mxu0 0.0
      %3099 = vmatpush1.msra.mxu0 0.0
      %3100 = vmatprep.subr.mxu0 0.0
      %3101 = vmatpush1.msra.mxu0 0.0
      %3102 = vmatprep.subr.mxu0 0.0
      %3103 = vmatpush1.msra.mxu0 %v2141
      %3104 = vmatprep.subr.mxu0 0.0
      %3105 = vmatpush1.msra.mxu0 %v2136
      %3106 = vmatprep.subr.mxu0 0.0
      %3107 = vmatpush2.msra.mxu0 0.0
      %3108 = vmatprep.subr.mxu0 0.0
      %3109 = vmatpush2.msra.mxu0 0.0
      %3110 = vmatprep.subr.mxu0 0.0
      %3111 = vmatpush2.msra.mxu0 0.0
      %3112 = vmatprep.subr.mxu0 0.0
      %3113 = vmatpush2.msra.mxu0 0.0
      %3114 = vmatprep.subr.mxu0 0.0
      %3115 = vmatpush2.msra.mxu0 0.0
      %3116 = vmatprep.subr.mxu0 0.0
      %3117 = vmatpush2.msra.mxu0 0.0
      %3118 = vmatprep.subr.mxu0 0.0
      %3119 = vmatpush2.msra.mxu0 0.0
      %3120 = vmatprep.subr.mxu0 0.0
      %3121 = vmatpush2.msra.mxu0 0.0
      %3122 = vmatprep.subr.mxu0 0.0
      %3123 = vmatpush2.msra.mxu0 0.0
      %3124 = vmatprep.subr.mxu0 0.0
      %3125 = vmatpush2.msra.mxu0 0.0
      %3126 = vmatprep.subr.mxu0 0.0
      %3127 = vmatpush2.msra.mxu0 0.0
      %3128 = vmatprep.subr.mxu0 0.0
      %3129 = vmatpush2.msra.mxu0 0.0
      %3130 = vmatprep.subr.mxu0 0.0
      %3131 = vmatpush2.msra.mxu0 0.0
      %3132 = vmatprep.subr.mxu0 0.0
      %3133 = vmatpush2.msra.mxu0 0.0
      %3134 = vmatprep.subr.mxu0 0.0
      %3135 = vmatpush2.msra.mxu0 0.0
      %3136 = vmatprep.subr.mxu0 0.0
      %3137 = vmatpush2.msra.mxu0 0.0
      %3138 = vmatprep.mubr.f32.mxu0 0.0
      %3139 = vmatmul.mubr.f32.gmra.mxu0 %v274
      %v3140 = vpop.f32.mrf.mxu0
      %v3141 = vadd.f32 0.0, %v3140
      %v3142 = vpop.f32.mrf.mxu0
      %3143 = vmatprep.mubr.f32.mxu0 0.0
      %3144 = vmatmul.mubr.f32.gmra.mxu0 %v277
      %v3145 = vpop.f32.mrf.mxu0
      %v3146 = vadd.f32 0.0, %v3145
      %v3147 = vpop.f32.mrf.mxu0
      %3148 = vdwg.mxu0
      %3149 = vmatprep.subr.mxu0 0.0
      %3150 = vmatpush1.msra.mxu0 0.0
      %3151 = vmatprep.subr.mxu0 0.0
      %3152 = vmatpush1.msra.mxu0 0.0
      %3153 = vmatprep.subr.mxu0 0.0
      %3154 = vmatpush1.msra.mxu0 0.0
      %3155 = vmatprep.subr.mxu0 0.0
      %3156 = vmatpush1.msra.mxu0 0.0
      %3157 = vmatprep.subr.mxu0 0.0
      %3158 = vmatpush1.msra.mxu0 0.0
      %3159 = vmatprep.subr.mxu0 0.0
      %3160 = vmatpush1.msra.mxu0 0.0
      %3161 = vmatprep.subr.mxu0 0.0
      %3162 = vmatpush1.msra.mxu0 0.0
      %3163 = vmatprep.subr.mxu0 0.0
      %3164 = vmatpush1.msra.mxu0 0.0
      %3165 = vmatprep.subr.mxu0 0.0
      %3166 = vmatpush1.msra.mxu0 0.0
      %3167 = vmatprep.subr.mxu0 0.0
      %3168 = vmatpush1.msra.mxu0 0.0
      %3169 = vmatprep.subr.mxu0 0.0
      %3170 = vmatpush1.msra.mxu0 0.0
      %3171 = vmatprep.subr.mxu0 0.0
      %3172 = vmatpush1.msra.mxu0 0.0
      %3173 = vmatprep.subr.mxu0 0.0
      %3174 = vmatpush1.msra.mxu0 0.0
      %3175 = vmatprep.subr.mxu0 0.0
      %3176 = vmatpush1.msra.mxu0 0.0
      %3177 = vmatprep.subr.mxu0 0.0
      %3178 = vmatpush1.msra.mxu0 %v2151
      %3179 = vmatprep.subr.mxu0 0.0
      %3180 = vmatpush1.msra.mxu0 %v2146
      %3181 = vmatprep.subr.mxu0 0.0
      %3182 = vmatpush2.msra.mxu0 0.0
      %3183 = vmatprep.subr.mxu0 0.0
      %3184 = vmatpush2.msra.mxu0 0.0
      %3185 = vmatprep.subr.mxu0 0.0
      %3186 = vmatpush2.msra.mxu0 0.0
      %3187 = vmatprep.subr.mxu0 0.0
      %3188 = vmatpush2.msra.mxu0 0.0
      %3189 = vmatprep.subr.mxu0 0.0
      %3190 = vmatpush2.msra.mxu0 0.0
      %3191 = vmatprep.subr.mxu0 0.0
      %3192 = vmatpush2.msra.mxu0 0.0
      %3193 = vmatprep.subr.mxu0 0.0
      %3194 = vmatpush2.msra.mxu0 0.0
      %3195 = vmatprep.subr.mxu0 0.0
      %3196 = vmatpush2.msra.mxu0 0.0
      %3197 = vmatprep.subr.mxu0 0.0
      %3198 = vmatpush2.msra.mxu0 0.0
      %3199 = vmatprep.subr.mxu0 0.0
      %3200 = vmatpush2.msra.mxu0 0.0
      %3201 = vmatprep.subr.mxu0 0.0
      %3202 = vmatpush2.msra.mxu0 0.0
      %3203 = vmatprep.subr.mxu0 0.0
      %3204 = vmatpush2.msra.mxu0 0.0
      %3205 = vmatprep.subr.mxu0 0.0
      %3206 = vmatpush2.msra.mxu0 0.0
      %3207 = vmatprep.subr.mxu0 0.0
      %3208 = vmatpush2.msra.mxu0 0.0
      %3209 = vmatprep.subr.mxu0 0.0
      %3210 = vmatpush2.msra.mxu0 0.0
      %3211 = vmatprep.subr.mxu0 0.0
      %3212 = vmatpush2.msra.mxu0 0.0
      %3213 = vmatprep.mubr.f32.mxu0 0.0
      %3214 = vmatmul.mubr.f32.gmra.mxu0 %v274
      %v3215 = vpop.f32.mrf.mxu0
      %v3216 = vadd.f32 0.0, %v3215
      %v3217 = vpop.f32.mrf.mxu0
      %3218 = vmatprep.mubr.f32.mxu0 0.0
      %3219 = vmatmul.mubr.f32.gmra.mxu0 %v277
      %v3220 = vpop.f32.mrf.mxu0
      %v3221 = vadd.f32 0.0, %v3220
      %v3222 = vpop.f32.mrf.mxu0
      %3223 = vdwg.mxu0
      %3224 = vmatprep.subr.mxu0 0.0
      %3225 = vmatpush1.msra.mxu0 0.0
      %3226 = vmatprep.subr.mxu0 0.0
      %3227 = vmatpush1.msra.mxu0 0.0
      %3228 = vmatprep.subr.mxu0 0.0
      %3229 = vmatpush1.msra.mxu0 0.0
      %3230 = vmatprep.subr.mxu0 0.0
      %3231 = vmatpush1.msra.mxu0 0.0
      %3232 = vmatprep.subr.mxu0 0.0
      %3233 = vmatpush1.msra.mxu0 0.0
      %3234 = vmatprep.subr.mxu0 0.0
      %3235 = vmatpush1.msra.mxu0 0.0
      %3236 = vmatprep.subr.mxu0 0.0
      %3237 = vmatpush1.msra.mxu0 0.0
      %3238 = vmatprep.subr.mxu0 0.0
      %3239 = vmatpush1.msra.mxu0 0.0
      %3240 = vmatprep.subr.mxu0 0.0
      %3241 = vmatpush1.msra.mxu0 0.0
      %3242 = vmatprep.subr.mxu0 0.0
      %3243 = vmatpush1.msra.mxu0 0.0
      %3244 = vmatprep.subr.mxu0 0.0
      %3245 = vmatpush1.msra.mxu0 0.0
      %3246 = vmatprep.subr.mxu0 0.0
      %3247 = vmatpush1.msra.mxu0 0.0
      %3248 = vmatprep.subr.mxu0 0.0
      %3249 = vmatpush1.msra.mxu0 0.0
      %3250 = vmatprep.subr.mxu0 0.0
      %3251 = vmatpush1.msra.mxu0 0.0
      %3252 = vmatprep.subr.mxu0 0.0
      %3253 = vmatpush1.msra.mxu0 %v2161
      %3254 = vmatprep.subr.mxu0 0.0
      %3255 = vmatpush1.msra.mxu0 %v2156
      %3256 = vmatprep.subr.mxu0 0.0
      %3257 = vmatpush2.msra.mxu0 0.0
      %3258 = vmatprep.subr.mxu0 0.0
      %3259 = vmatpush2.msra.mxu0 0.0
      %3260 = vmatprep.subr.mxu0 0.0
      %3261 = vmatpush2.msra.mxu0 0.0
      %3262 = vmatprep.subr.mxu0 0.0
      %3263 = vmatpush2.msra.mxu0 0.0
      %3264 = vmatprep.subr.mxu0 0.0
      %3265 = vmatpush2.msra.mxu0 0.0
      %3266 = vmatprep.subr.mxu0 0.0
      %3267 = vmatpush2.msra.mxu0 0.0
      %3268 = vmatprep.subr.mxu0 0.0
      %3269 = vmatpush2.msra.mxu0 0.0
      %3270 = vmatprep.subr.mxu0 0.0
      %3271 = vmatpush2.msra.mxu0 0.0
      %3272 = vmatprep.subr.mxu0 0.0
      %3273 = vmatpush2.msra.mxu0 0.0
      %3274 = vmatprep.subr.mxu0 0.0
      %3275 = vmatpush2.msra.mxu0 0.0
      %3276 = vmatprep.subr.mxu0 0.0
      %3277 = vmatpush2.msra.mxu0 0.0
      %3278 = vmatprep.subr.mxu0 0.0
      %3279 = vmatpush2.msra.mxu0 0.0
      %3280 = vmatprep.subr.mxu0 0.0
      %3281 = vmatpush2.msra.mxu0 0.0
      %3282 = vmatprep.subr.mxu0 0.0
      %3283 = vmatpush2.msra.mxu0 0.0
      %3284 = vmatprep.subr.mxu0 0.0
      %3285 = vmatpush2.msra.mxu0 0.0
      %3286 = vmatprep.subr.mxu0 0.0
      %3287 = vmatpush2.msra.mxu0 0.0
      %3288 = vmatprep.mubr.f32.mxu0 0.0
      %3289 = vmatmul.mubr.f32.gmra.mxu0 %v274
      %v3290 = vpop.f32.mrf.mxu0
      %v3291 = vadd.f32 0.0, %v3290
      %v3292 = vpop.f32.mrf.mxu0
      %3293 = vmatprep.mubr.f32.mxu0 0.0
      %3294 = vmatmul.mubr.f32.gmra.mxu0 %v277
      %v3295 = vpop.f32.mrf.mxu0
      %v3296 = vadd.f32 0.0, %v3295
      %v3297 = vpop.f32.mrf.mxu0
      %3298 = vdwg.mxu0
      %3299 = vmatprep.subr.mxu0 0.0
      %3300 = vmatpush1.msra.mxu0 0.0
      %3301 = vmatprep.subr.mxu0 0.0
      %3302 = vmatpush1.msra.mxu0 0.0
      %3303 = vmatprep.subr.mxu0 0.0
      %3304 = vmatpush1.msra.mxu0 0.0
      %3305 = vmatprep.subr.mxu0 0.0
      %3306 = vmatpush1.msra.mxu0 0.0
      %3307 = vmatprep.subr.mxu0 0.0
      %3308 = vmatpush1.msra.mxu0 0.0
      %3309 = vmatprep.subr.mxu0 0.0
      %3310 = vmatpush1.msra.mxu0 0.0
      %3311 = vmatprep.subr.mxu0 0.0
      %3312 = vmatpush1.msra.mxu0 0.0
      %3313 = vmatprep.subr.mxu0 0.0
      %3314 = vmatpush1.msra.mxu0 0.0
      %3315 = vmatprep.subr.mxu0 0.0
      %3316 = vmatpush1.msra.mxu0 0.0
      %3317 = vmatprep.subr.mxu0 0.0
      %3318 = vmatpush1.msra.mxu0 0.0
      %3319 = vmatprep.subr.mxu0 0.0
      %3320 = vmatpush1.msra.mxu0 0.0
      %3321 = vmatprep.subr.mxu0 0.0
      %3322 = vmatpush1.msra.mxu0 0.0
      %3323 = vmatprep.subr.mxu0 0.0
      %3324 = vmatpush1.msra.mxu0 0.0
      %3325 = vmatprep.subr.mxu0 0.0
      %3326 = vmatpush1.msra.mxu0 0.0
      %3327 = vmatprep.subr.mxu0 0.0
      %3328 = vmatpush1.msra.mxu0 %v2171
      %3329 = vmatprep.subr.mxu0 0.0
      %3330 = vmatpush1.msra.mxu0 %v2166
      %3331 = vmatprep.subr.mxu0 0.0
      %3332 = vmatpush2.msra.mxu0 0.0
      %3333 = vmatprep.subr.mxu0 0.0
      %3334 = vmatpush2.msra.mxu0 0.0
      %3335 = vmatprep.subr.mxu0 0.0
      %3336 = vmatpush2.msra.mxu0 0.0
      %3337 = vmatprep.subr.mxu0 0.0
      %3338 = vmatpush2.msra.mxu0 0.0
      %3339 = vmatprep.subr.mxu0 0.0
      %3340 = vmatpush2.msra.mxu0 0.0
      %3341 = vmatprep.subr.mxu0 0.0
      %3342 = vmatpush2.msra.mxu0 0.0
      %3343 = vmatprep.subr.mxu0 0.0
      %3344 = vmatpush2.msra.mxu0 0.0
      %3345 = vmatprep.subr.mxu0 0.0
      %3346 = vmatpush2.msra.mxu0 0.0
      %3347 = vmatprep.subr.mxu0 0.0
      %3348 = vmatpush2.msra.mxu0 0.0
      %3349 = vmatprep.subr.mxu0 0.0
      %3350 = vmatpush2.msra.mxu0 0.0
      %3351 = vmatprep.subr.mxu0 0.0
      %3352 = vmatpush2.msra.mxu0 0.0
      %3353 = vmatprep.subr.mxu0 0.0
      %3354 = vmatpush2.msra.mxu0 0.0
      %3355 = vmatprep.subr.mxu0 0.0
      %3356 = vmatpush2.msra.mxu0 0.0
      %3357 = vmatprep.subr.mxu0 0.0
      %3358 = vmatpush2.msra.mxu0 0.0
      %3359 = vmatprep.subr.mxu0 0.0
      %3360 = vmatpush2.msra.mxu0 0.0
      %3361 = vmatprep.subr.mxu0 0.0
      %3362 = vmatpush2.msra.mxu0 0.0
      %3363 = vmatprep.mubr.f32.mxu0 0.0
      %3364 = vmatmul.mubr.f32.gmra.mxu0 %v274
      %v3365 = vpop.f32.mrf.mxu0
      %v3366 = vadd.f32 0.0, %v3365
      %v3367 = vpop.f32.mrf.mxu0
      %3368 = vmatprep.mubr.f32.mxu0 0.0
      %3369 = vmatmul.mubr.f32.gmra.mxu0 %v277
      %v3370 = vpop.f32.mrf.mxu0
      %v3371 = vadd.f32 0.0, %v3370
      %v3372 = vpop.f32.mrf.mxu0
      %3373 = vdwg.mxu0
      %v3374 = vld [vmem:[%s3 + $0x38] sm:$0xff]
      %v3375 = vld [vmem:[%s3 + $0x40] sm:$0xff]
      %v3376 = vld [vmem:[%s3 + $0x48] sm:$0xff]
      %v3377 = vld [vmem:[%s3 + $0x50] sm:$0xff]
      %v3378 = vld [vmem:[%s3 + $0x58] sm:$0x1]
      %v3379 = vlaneseq
      %v3380 = vshrl.u32 %v3379, 7
      %v3381 = vsub.s32 0, %v3380
      %v3382 = vrot.slane %v3378, %v3381
      %v3384 = vsel %vm1852, %v2241, 0
      %v3387 = vsel %vm1852, %v2246, 0
      %v3390 = vsel %vm1852, %v2316, 0
      %v3393 = vsel %vm1852, %v2321, 0
      %v3396 = vsel %vm1852, %v2391, 0
      %v3399 = vsel %vm1852, %v2396, 0
      %v3402 = vsel %vm1852, %v2466, 0
      %v3405 = vsel %vm1852, %v2471, 0
      %v3408 = vsel %vm1852, %v2541, 0
      %v3411 = vsel %vm1852, %v2546, 0
      %v3414 = vsel %vm1852, %v2616, 0
      %v3417 = vsel %vm1852, %v2621, 0
      %v3420 = vsel %vm1852, %v2691, 0
      %v3423 = vsel %vm1852, %v2696, 0
      %v3426 = vsel %vm1852, %v2766, 0
      %v3429 = vsel %vm1852, %v2771, 0
      %v3432 = vsel %vm1852, %v2841, 0
      %v3435 = vsel %vm1852, %v2846, 0
      %v3438 = vsel %vm1852, %v2916, 0
      %v3441 = vsel %vm1852, %v2921, 0
      %v3444 = vsel %vm1852, %v2991, 0
      %v3447 = vsel %vm1852, %v2996, 0
      %v3450 = vsel %vm1852, %v3066, 0
      %v3453 = vsel %vm1852, %v3071, 0
      %v3456 = vsel %vm1852, %v3141, 0
      %v3459 = vsel %vm1852, %v3146, 0
      %v3462 = vsel %vm1852, %v3216, 0
      %v3465 = vsel %vm1852, %v3221, 0
      %v3468 = vsel %vm1852, %v3291, 0
      %v3471 = vsel %vm1852, %v3296, 0
      %v3474 = vsel %vm1852, %v3366, 0
      %v3477 = vsel %vm1852, %v3371, 0
      %3479 = vmatprep.subr.mxu0 0.0
      %3480 = vmatpush1.msra.mxu0 0.0
      %3481 = vmatprep.subr.mxu0 0.0
      %3482 = vmatpush1.msra.mxu0 0.0
      %3483 = vmatprep.subr.mxu0 0.0
      %3484 = vmatpush1.msra.mxu0 0.0
      %3485 = vmatprep.subr.mxu0 0.0
      %3486 = vmatpush1.msra.mxu0 0.0
      %3487 = vmatprep.subr.mxu0 0.0
      %3488 = vmatpush1.msra.mxu0 0.0
      %3489 = vmatprep.subr.mxu0 0.0
      %3490 = vmatpush1.msra.mxu0 0.0
      %3491 = vmatprep.subr.mxu0 0.0
      %3492 = vmatpush1.msra.mxu0 0.0
      %3493 = vmatprep.subr.mxu0 0.0
      %3494 = vmatpush1.msra.mxu0 0.0
      %3495 = vmatprep.subr.mxu0 0.0
      %3496 = vmatpush1.msra.mxu0 0.0
      %3497 = vmatprep.subr.mxu0 0.0
      %3498 = vmatpush1.msra.mxu0 0.0
      %3499 = vmatprep.subr.mxu0 0.0
      %3500 = vmatpush1.msra.mxu0 0.0
      %3501 = vmatprep.subr.mxu0 0.0
      %3502 = vmatpush1.msra.mxu0 0.0
      %3503 = vmatprep.subr.mxu0 0.0
      %3504 = vmatpush1.msra.mxu0 %v3377
      %3505 = vmatprep.subr.mxu0 0.0
      %3506 = vmatpush1.msra.mxu0 %v3376
      %3507 = vmatprep.subr.mxu0 0.0
      %3508 = vmatpush1.msra.mxu0 %v3375
      %3509 = vmatprep.subr.mxu0 0.0
      %3510 = vmatpush1.msra.mxu0 %v3374
      %3511 = vmatprep.subr.mxu0 0.0
      %3512 = vmatpush2.msra.mxu0 0.0
      %3513 = vmatprep.subr.mxu0 0.0
      %3514 = vmatpush2.msra.mxu0 0.0
      %3515 = vmatprep.subr.mxu0 0.0
      %3516 = vmatpush2.msra.mxu0 0.0
      %3517 = vmatprep.subr.mxu0 0.0
      %3518 = vmatpush2.msra.mxu0 0.0
      %3519 = vmatprep.subr.mxu0 0.0
      %3520 = vmatpush2.msra.mxu0 0.0
      %3521 = vmatprep.subr.mxu0 0.0
      %3522 = vmatpush2.msra.mxu0 0.0
      %3523 = vmatprep.subr.mxu0 0.0
      %3524 = vmatpush2.msra.mxu0 0.0
      %3525 = vmatprep.subr.mxu0 0.0
      %3526 = vmatpush2.msra.mxu0 0.0
      %3527 = vmatprep.subr.mxu0 0.0
      %3528 = vmatpush2.msra.mxu0 0.0
      %3529 = vmatprep.subr.mxu0 0.0
      %3530 = vmatpush2.msra.mxu0 0.0
      %3531 = vmatprep.subr.mxu0 0.0
      %3532 = vmatpush2.msra.mxu0 0.0
      %3533 = vmatprep.subr.mxu0 0.0
      %3534 = vmatpush2.msra.mxu0 0.0
      %3535 = vmatprep.subr.mxu0 0.0
      %3536 = vmatpush2.msra.mxu0 0.0
      %3537 = vmatprep.subr.mxu0 0.0
      %3538 = vmatpush2.msra.mxu0 0.0
      %3539 = vmatprep.subr.mxu0 0.0
      %3540 = vmatpush2.msra.mxu0 0.0
      %3541 = vmatprep.subr.mxu0 0.0
      %3542 = vmatpush2.msra.mxu0 0.0
      %3543 = vmatprep.mubr.f32.mxu0 0.0
      %3544 = vmatmul.mubr.f32.gmra.mxu0 %v3384
      %v3545 = vpop.f32.mrf.mxu0
      %v3546 = vadd.f32 %v3382, %v3545
      %v3547 = vpop.f32.mrf.mxu0
      %3548 = vmatprep.mubr.f32.mxu0 0.0
      %3549 = vmatmul.mubr.f32.gmra.mxu0 %v3387
      %v3550 = vpop.f32.mrf.mxu0
      %v3551 = vadd.f32 %v3382, %v3550
      %v3552 = vpop.f32.mrf.mxu0
      %3553 = vmatprep.mubr.f32.mxu0 0.0
      %3554 = vmatmul.mubr.f32.gmra.mxu0 %v3390
      %v3555 = vpop.f32.mrf.mxu0
      %v3556 = vadd.f32 %v3382, %v3555
      %v3557 = vpop.f32.mrf.mxu0
      %3558 = vmatprep.mubr.f32.mxu0 0.0
      %3559 = vmatmul.mubr.f32.gmra.mxu0 %v3393
      %v3560 = vpop.f32.mrf.mxu0
      %v3561 = vadd.f32 %v3382, %v3560
      %v3562 = vpop.f32.mrf.mxu0
      %3563 = vmatprep.mubr.f32.mxu0 0.0
      %3564 = vmatmul.mubr.f32.gmra.mxu0 %v3396
      %v3565 = vpop.f32.mrf.mxu0
      %v3566 = vadd.f32 %v3382, %v3565
      %v3567 = vpop.f32.mrf.mxu0
      %3568 = vmatprep.mubr.f32.mxu0 0.0
      %3569 = vmatmul.mubr.f32.gmra.mxu0 %v3399
      %v3570 = vpop.f32.mrf.mxu0
      %v3571 = vadd.f32 %v3382, %v3570
      %v3572 = vpop.f32.mrf.mxu0
      %3573 = vmatprep.mubr.f32.mxu0 0.0
      %3574 = vmatmul.mubr.f32.gmra.mxu0 %v3402
      %v3575 = vpop.f32.mrf.mxu0
      %v3576 = vadd.f32 %v3382, %v3575
      %v3577 = vpop.f32.mrf.mxu0
      %3578 = vmatprep.mubr.f32.mxu0 0.0
      %3579 = vmatmul.mubr.f32.gmra.mxu0 %v3405
      %v3580 = vpop.f32.mrf.mxu0
      %v3581 = vadd.f32 %v3382, %v3580
      %v3582 = vpop.f32.mrf.mxu0
      %3583 = vmatprep.mubr.f32.mxu0 0.0
      %3584 = vmatmul.mubr.f32.gmra.mxu0 %v3408
      %v3585 = vpop.f32.mrf.mxu0
      %v3586 = vadd.f32 %v3382, %v3585
      %v3587 = vpop.f32.mrf.mxu0
      %3588 = vmatprep.mubr.f32.mxu0 0.0
      %3589 = vmatmul.mubr.f32.gmra.mxu0 %v3411
      %v3590 = vpop.f32.mrf.mxu0
      %v3591 = vadd.f32 %v3382, %v3590
      %v3592 = vpop.f32.mrf.mxu0
      %3593 = vmatprep.mubr.f32.mxu0 0.0
      %3594 = vmatmul.mubr.f32.gmra.mxu0 %v3414
      %v3595 = vpop.f32.mrf.mxu0
      %v3596 = vadd.f32 %v3382, %v3595
      %v3597 = vpop.f32.mrf.mxu0
      %3598 = vmatprep.mubr.f32.mxu0 0.0
      %3599 = vmatmul.mubr.f32.gmra.mxu0 %v3417
      %v3600 = vpop.f32.mrf.mxu0
      %v3601 = vadd.f32 %v3382, %v3600
      %v3602 = vpop.f32.mrf.mxu0
      %3603 = vmatprep.mubr.f32.mxu0 0.0
      %3604 = vmatmul.mubr.f32.gmra.mxu0 %v3420
      %v3605 = vpop.f32.mrf.mxu0
      %v3606 = vadd.f32 %v3382, %v3605
      %v3607 = vpop.f32.mrf.mxu0
      %3608 = vmatprep.mubr.f32.mxu0 0.0
      %3609 = vmatmul.mubr.f32.gmra.mxu0 %v3423
      %v3610 = vpop.f32.mrf.mxu0
      %v3611 = vadd.f32 %v3382, %v3610
      %v3612 = vpop.f32.mrf.mxu0
      %3613 = vmatprep.mubr.f32.mxu0 0.0
      %3614 = vmatmul.mubr.f32.gmra.mxu0 %v3426
      %v3615 = vpop.f32.mrf.mxu0
      %v3616 = vadd.f32 %v3382, %v3615
      %v3617 = vpop.f32.mrf.mxu0
      %3618 = vmatprep.mubr.f32.mxu0 0.0
      %3619 = vmatmul.mubr.f32.gmra.mxu0 %v3429
      %v3620 = vpop.f32.mrf.mxu0
      %v3621 = vadd.f32 %v3382, %v3620
      %v3622 = vpop.f32.mrf.mxu0
      %3623 = vmatprep.mubr.f32.mxu0 0.0
      %3624 = vmatmul.mubr.f32.gmra.mxu0 %v3432
      %v3625 = vpop.f32.mrf.mxu0
      %v3626 = vadd.f32 %v3382, %v3625
      %v3627 = vpop.f32.mrf.mxu0
      %3628 = vmatprep.mubr.f32.mxu0 0.0
      %3629 = vmatmul.mubr.f32.gmra.mxu0 %v3435
      %v3630 = vpop.f32.mrf.mxu0
      %v3631 = vadd.f32 %v3382, %v3630
      %v3632 = vpop.f32.mrf.mxu0
      %3633 = vmatprep.mubr.f32.mxu0 0.0
      %3634 = vmatmul.mubr.f32.gmra.mxu0 %v3438
      %v3635 = vpop.f32.mrf.mxu0
      %v3636 = vadd.f32 %v3382, %v3635
      %v3637 = vpop.f32.mrf.mxu0
      %3638 = vmatprep.mubr.f32.mxu0 0.0
      %3639 = vmatmul.mubr.f32.gmra.mxu0 %v3441
      %v3640 = vpop.f32.mrf.mxu0
      %v3641 = vadd.f32 %v3382, %v3640
      %v3642 = vpop.f32.mrf.mxu0
      %3643 = vmatprep.mubr.f32.mxu0 0.0
      %3644 = vmatmul.mubr.f32.gmra.mxu0 %v3444
      %v3645 = vpop.f32.mrf.mxu0
      %v3646 = vadd.f32 %v3382, %v3645
      %v3647 = vpop.f32.mrf.mxu0
      %3648 = vmatprep.mubr.f32.mxu0 0.0
      %3649 = vmatmul.mubr.f32.gmra.mxu0 %v3447
      %v3650 = vpop.f32.mrf.mxu0
      %v3651 = vadd.f32 %v3382, %v3650
      %v3652 = vpop.f32.mrf.mxu0
      %3653 = vmatprep.mubr.f32.mxu0 0.0
      %3654 = vmatmul.mubr.f32.gmra.mxu0 %v3450
      %v3655 = vpop.f32.mrf.mxu0
      %v3656 = vadd.f32 %v3382, %v3655
      %v3657 = vpop.f32.mrf.mxu0
      %3658 = vmatprep.mubr.f32.mxu0 0.0
      %3659 = vmatmul.mubr.f32.gmra.mxu0 %v3453
      %v3660 = vpop.f32.mrf.mxu0
      %v3661 = vadd.f32 %v3382, %v3660
      %v3662 = vpop.f32.mrf.mxu0
      %3663 = vmatprep.mubr.f32.mxu0 0.0
      %3664 = vmatmul.mubr.f32.gmra.mxu0 %v3456
      %v3665 = vpop.f32.mrf.mxu0
      %v3666 = vadd.f32 %v3382, %v3665
      %v3667 = vpop.f32.mrf.mxu0
      %3668 = vmatprep.mubr.f32.mxu0 0.0
      %3669 = vmatmul.mubr.f32.gmra.mxu0 %v3459
      %v3670 = vpop.f32.mrf.mxu0
      %v3671 = vadd.f32 %v3382, %v3670
      %v3672 = vpop.f32.mrf.mxu0
      %3673 = vmatprep.mubr.f32.mxu0 0.0
      %3674 = vmatmul.mubr.f32.gmra.mxu0 %v3462
      %v3675 = vpop.f32.mrf.mxu0
      %v3676 = vadd.f32 %v3382, %v3675
      %v3677 = vpop.f32.mrf.mxu0
      %3678 = vmatprep.mubr.f32.mxu0 0.0
      %3679 = vmatmul.mubr.f32.gmra.mxu0 %v3465
      %v3680 = vpop.f32.mrf.mxu0
      %v3681 = vadd.f32 %v3382, %v3680
      %v3682 = vpop.f32.mrf.mxu0
      %3683 = vmatprep.mubr.f32.mxu0 0.0
      %3684 = vmatmul.mubr.f32.gmra.mxu0 %v3468
      %v3685 = vpop.f32.mrf.mxu0
      %v3686 = vadd.f32 %v3382, %v3685
      %v3687 = vpop.f32.mrf.mxu0
      %3688 = vmatprep.mubr.f32.mxu0 0.0
      %3689 = vmatmul.mubr.f32.gmra.mxu0 %v3471
      %v3690 = vpop.f32.mrf.mxu0
      %v3691 = vadd.f32 %v3382, %v3690
      %v3692 = vpop.f32.mrf.mxu0
      %3693 = vmatprep.mubr.f32.mxu0 0.0
      %3694 = vmatmul.mubr.f32.gmra.mxu0 %v3474
      %v3695 = vpop.f32.mrf.mxu0
      %v3696 = vadd.f32 %v3382, %v3695
      %v3697 = vpop.f32.mrf.mxu0
      %3698 = vmatprep.mubr.f32.mxu0 0.0
      %3699 = vmatmul.mubr.f32.gmra.mxu0 %v3477
      %v3700 = vpop.f32.mrf.mxu0
      %v3701 = vadd.f32 %v3382, %v3700
      %v3702 = vpop.f32.mrf.mxu0
      %3703 = vdwg.mxu0
      %v3704 = vmax.f32 %v3546, 0.0
      %v3705 = vmax.f32 %v3551, 0.0
      %v3706 = vmax.f32 %v3556, 0.0
      %v3707 = vmax.f32 %v3561, 0.0
      %v3708 = vmax.f32 %v3566, 0.0
      %v3709 = vmax.f32 %v3571, 0.0
      %v3710 = vmax.f32 %v3576, 0.0
      %v3711 = vmax.f32 %v3581, 0.0
      %v3712 = vmax.f32 %v3586, 0.0
      %v3713 = vmax.f32 %v3591, 0.0
      %v3714 = vmax.f32 %v3596, 0.0
      %v3715 = vmax.f32 %v3601, 0.0
      %v3716 = vmax.f32 %v3606, 0.0
      %v3717 = vmax.f32 %v3611, 0.0
      %v3718 = vmax.f32 %v3616, 0.0
      %v3719 = vmax.f32 %v3621, 0.0
      %v3720 = vmax.f32 %v3626, 0.0
      %v3721 = vmax.f32 %v3631, 0.0
      %v3722 = vmax.f32 %v3636, 0.0
      %v3723 = vmax.f32 %v3641, 0.0
      %v3724 = vmax.f32 %v3646, 0.0
      %v3725 = vmax.f32 %v3651, 0.0
      %v3726 = vmax.f32 %v3656, 0.0
      %v3727 = vmax.f32 %v3661, 0.0
      %v3728 = vmax.f32 %v3666, 0.0
      %v3729 = vmax.f32 %v3671, 0.0
      %v3730 = vmax.f32 %v3676, 0.0
      %v3731 = vmax.f32 %v3681, 0.0
      %v3732 = vmax.f32 %v3686, 0.0
      %v3733 = vmax.f32 %v3691, 0.0
      %v3734 = vmax.f32 %v3696, 0.0
      %v3735 = vmax.f32 %v3701, 0.0
      %v3736 = vld [vmem:[%s3 + $0x60] sm:$0xff]
      %v3737 = vld [vmem:[%s3 + $0x68] sm:$0xff]
      %v3738 = vld [vmem:[%s3 + $0x70] sm:$0xff]
      %v3739 = vld [vmem:[%s3 + $0x78] sm:$0xff]
      %v3740 = vld [vmem:[%s3 + $0x80] sm:$0x1]
      %v3741 = vlaneseq
      %v3742 = vshrl.u32 %v3741, 7
      %v3743 = vsub.s32 0, %v3742
      %v3744 = vrot.slane %v3740, %v3743
      %v3746 = vsel %vm1852, %v3704, 0
      %v3749 = vsel %vm1852, %v3705, 0
      %v3752 = vsel %vm1852, %v3706, 0
      %v3755 = vsel %vm1852, %v3707, 0
      %v3758 = vsel %vm1852, %v3708, 0
      %v3761 = vsel %vm1852, %v3709, 0
      %v3764 = vsel %vm1852, %v3710, 0
      %v3767 = vsel %vm1852, %v3711, 0
      %v3770 = vsel %vm1852, %v3712, 0
      %v3773 = vsel %vm1852, %v3713, 0
      %v3776 = vsel %vm1852, %v3714, 0
      %v3779 = vsel %vm1852, %v3715, 0
      %v3782 = vsel %vm1852, %v3716, 0
      %v3785 = vsel %vm1852, %v3717, 0
      %v3788 = vsel %vm1852, %v3718, 0
      %v3791 = vsel %vm1852, %v3719, 0
      %v3794 = vsel %vm1852, %v3720, 0
      %v3797 = vsel %vm1852, %v3721, 0
      %v3800 = vsel %vm1852, %v3722, 0
      %v3803 = vsel %vm1852, %v3723, 0
      %v3806 = vsel %vm1852, %v3724, 0
      %v3809 = vsel %vm1852, %v3725, 0
      %v3812 = vsel %vm1852, %v3726, 0
      %v3815 = vsel %vm1852, %v3727, 0
      %v3818 = vsel %vm1852, %v3728, 0
      %v3821 = vsel %vm1852, %v3729, 0
      %v3824 = vsel %vm1852, %v3730, 0
      %v3827 = vsel %vm1852, %v3731, 0
      %v3830 = vsel %vm1852, %v3732, 0
      %v3833 = vsel %vm1852, %v3733, 0
      %v3836 = vsel %vm1852, %v3734, 0
      %v3839 = vsel %vm1852, %v3735, 0
      %3841 = vmatprep.subr.mxu0 0.0
      %3842 = vmatpush1.msra.mxu0 0.0
      %3843 = vmatprep.subr.mxu0 0.0
      %3844 = vmatpush1.msra.mxu0 0.0
      %3845 = vmatprep.subr.mxu0 0.0
      %3846 = vmatpush1.msra.mxu0 0.0
      %3847 = vmatprep.subr.mxu0 0.0
      %3848 = vmatpush1.msra.mxu0 0.0
      %3849 = vmatprep.subr.mxu0 0.0
      %3850 = vmatpush1.msra.mxu0 0.0
      %3851 = vmatprep.subr.mxu0 0.0
      %3852 = vmatpush1.msra.mxu0 0.0
      %3853 = vmatprep.subr.mxu0 0.0
      %3854 = vmatpush1.msra.mxu0 0.0
      %3855 = vmatprep.subr.mxu0 0.0
      %3856 = vmatpush1.msra.mxu0 0.0
      %3857 = vmatprep.subr.mxu0 0.0
      %3858 = vmatpush1.msra.mxu0 0.0
      %3859 = vmatprep.subr.mxu0 0.0
      %3860 = vmatpush1.msra.mxu0 0.0
      %3861 = vmatprep.subr.mxu0 0.0
      %3862 = vmatpush1.msra.mxu0 0.0
      %3863 = vmatprep.subr.mxu0 0.0
      %3864 = vmatpush1.msra.mxu0 0.0
      %3865 = vmatprep.subr.mxu0 0.0
      %3866 = vmatpush1.msra.mxu0 %v3739
      %3867 = vmatprep.subr.mxu0 0.0
      %3868 = vmatpush1.msra.mxu0 %v3738
      %3869 = vmatprep.subr.mxu0 0.0
      %3870 = vmatpush1.msra.mxu0 %v3737
      %3871 = vmatprep.subr.mxu0 0.0
      %3872 = vmatpush1.msra.mxu0 %v3736
      %3873 = vmatprep.subr.mxu0 0.0
      %3874 = vmatpush2.msra.mxu0 0.0
      %3875 = vmatprep.subr.mxu0 0.0
      %3876 = vmatpush2.msra.mxu0 0.0
      %3877 = vmatprep.subr.mxu0 0.0
      %3878 = vmatpush2.msra.mxu0 0.0
      %3879 = vmatprep.subr.mxu0 0.0
      %3880 = vmatpush2.msra.mxu0 0.0
      %3881 = vmatprep.subr.mxu0 0.0
      %3882 = vmatpush2.msra.mxu0 0.0
      %3883 = vmatprep.subr.mxu0 0.0
      %3884 = vmatpush2.msra.mxu0 0.0
      %3885 = vmatprep.subr.mxu0 0.0
      %3886 = vmatpush2.msra.mxu0 0.0
      %3887 = vmatprep.subr.mxu0 0.0
      %3888 = vmatpush2.msra.mxu0 0.0
      %3889 = vmatprep.subr.mxu0 0.0
      %3890 = vmatpush2.msra.mxu0 0.0
      %3891 = vmatprep.subr.mxu0 0.0
      %3892 = vmatpush2.msra.mxu0 0.0
      %3893 = vmatprep.subr.mxu0 0.0
      %3894 = vmatpush2.msra.mxu0 0.0
      %3895 = vmatprep.subr.mxu0 0.0
      %3896 = vmatpush2.msra.mxu0 0.0
      %3897 = vmatprep.subr.mxu0 0.0
      %3898 = vmatpush2.msra.mxu0 0.0
      %3899 = vmatprep.subr.mxu0 0.0
      %3900 = vmatpush2.msra.mxu0 0.0
      %3901 = vmatprep.subr.mxu0 0.0
      %3902 = vmatpush2.msra.mxu0 0.0
      %3903 = vmatprep.subr.mxu0 0.0
      %3904 = vmatpush2.msra.mxu0 0.0
      %3905 = vmatprep.mubr.f32.mxu0 0.0
      %3906 = vmatmul.mubr.f32.gmra.mxu0 %v3746
      %v3907 = vpop.f32.mrf.mxu0
      %v3908 = vadd.f32 %v3744, %v3907
      %v3909 = vpop.f32.mrf.mxu0
      %3910 = vmatprep.mubr.f32.mxu0 0.0
      %3911 = vmatmul.mubr.f32.gmra.mxu0 %v3749
      %v3912 = vpop.f32.mrf.mxu0
      %v3913 = vadd.f32 %v3744, %v3912
      %v3914 = vpop.f32.mrf.mxu0
      %3915 = vmatprep.mubr.f32.mxu0 0.0
      %3916 = vmatmul.mubr.f32.gmra.mxu0 %v3752
      %v3917 = vpop.f32.mrf.mxu0
      %v3918 = vadd.f32 %v3744, %v3917
      %v3919 = vpop.f32.mrf.mxu0
      %3920 = vmatprep.mubr.f32.mxu0 0.0
      %3921 = vmatmul.mubr.f32.gmra.mxu0 %v3755
      %v3922 = vpop.f32.mrf.mxu0
      %v3923 = vadd.f32 %v3744, %v3922
      %v3924 = vpop.f32.mrf.mxu0
      %3925 = vmatprep.mubr.f32.mxu0 0.0
      %3926 = vmatmul.mubr.f32.gmra.mxu0 %v3758
      %v3927 = vpop.f32.mrf.mxu0
      %v3928 = vadd.f32 %v3744, %v3927
      %v3929 = vpop.f32.mrf.mxu0
      %3930 = vmatprep.mubr.f32.mxu0 0.0
      %3931 = vmatmul.mubr.f32.gmra.mxu0 %v3761
      %v3932 = vpop.f32.mrf.mxu0
      %v3933 = vadd.f32 %v3744, %v3932
      %v3934 = vpop.f32.mrf.mxu0
      %3935 = vmatprep.mubr.f32.mxu0 0.0
      %3936 = vmatmul.mubr.f32.gmra.mxu0 %v3764
      %v3937 = vpop.f32.mrf.mxu0
      %v3938 = vadd.f32 %v3744, %v3937
      %v3939 = vpop.f32.mrf.mxu0
      %3940 = vmatprep.mubr.f32.mxu0 0.0
      %3941 = vmatmul.mubr.f32.gmra.mxu0 %v3767
      %v3942 = vpop.f32.mrf.mxu0
      %v3943 = vadd.f32 %v3744, %v3942
      %v3944 = vpop.f32.mrf.mxu0
      %3945 = vmatprep.mubr.f32.mxu0 0.0
      %3946 = vmatmul.mubr.f32.gmra.mxu0 %v3770
      %v3947 = vpop.f32.mrf.mxu0
      %v3948 = vadd.f32 %v3744, %v3947
      %v3949 = vpop.f32.mrf.mxu0
      %3950 = vmatprep.mubr.f32.mxu0 0.0
      %3951 = vmatmul.mubr.f32.gmra.mxu0 %v3773
      %v3952 = vpop.f32.mrf.mxu0
      %v3953 = vadd.f32 %v3744, %v3952
      %v3954 = vpop.f32.mrf.mxu0
      %3955 = vmatprep.mubr.f32.mxu0 0.0
      %3956 = vmatmul.mubr.f32.gmra.mxu0 %v3776
      %v3957 = vpop.f32.mrf.mxu0
      %v3958 = vadd.f32 %v3744, %v3957
      %v3959 = vpop.f32.mrf.mxu0
      %3960 = vmatprep.mubr.f32.mxu0 0.0
      %3961 = vmatmul.mubr.f32.gmra.mxu0 %v3779
      %v3962 = vpop.f32.mrf.mxu0
      %v3963 = vadd.f32 %v3744, %v3962
      %v3964 = vpop.f32.mrf.mxu0
      %3965 = vmatprep.mubr.f32.mxu0 0.0
      %3966 = vmatmul.mubr.f32.gmra.mxu0 %v3782
      %v3967 = vpop.f32.mrf.mxu0
      %v3968 = vadd.f32 %v3744, %v3967
      %v3969 = vpop.f32.mrf.mxu0
      %3970 = vmatprep.mubr.f32.mxu0 0.0
      %3971 = vmatmul.mubr.f32.gmra.mxu0 %v3785
      %v3972 = vpop.f32.mrf.mxu0
      %v3973 = vadd.f32 %v3744, %v3972
      %v3974 = vpop.f32.mrf.mxu0
      %3975 = vmatprep.mubr.f32.mxu0 0.0
      %3976 = vmatmul.mubr.f32.gmra.mxu0 %v3788
      %v3977 = vpop.f32.mrf.mxu0
      %v3978 = vadd.f32 %v3744, %v3977
      %v3979 = vpop.f32.mrf.mxu0
      %3980 = vmatprep.mubr.f32.mxu0 0.0
      %3981 = vmatmul.mubr.f32.gmra.mxu0 %v3791
      %v3982 = vpop.f32.mrf.mxu0
      %v3983 = vadd.f32 %v3744, %v3982
      %v3984 = vpop.f32.mrf.mxu0
      %3985 = vmatprep.mubr.f32.mxu0 0.0
      %3986 = vmatmul.mubr.f32.gmra.mxu0 %v3794
      %v3987 = vpop.f32.mrf.mxu0
      %v3988 = vadd.f32 %v3744, %v3987
      %v3989 = vpop.f32.mrf.mxu0
      %3990 = vmatprep.mubr.f32.mxu0 0.0
      %3991 = vmatmul.mubr.f32.gmra.mxu0 %v3797
      %v3992 = vpop.f32.mrf.mxu0
      %v3993 = vadd.f32 %v3744, %v3992
      %v3994 = vpop.f32.mrf.mxu0
      %3995 = vmatprep.mubr.f32.mxu0 0.0
      %3996 = vmatmul.mubr.f32.gmra.mxu0 %v3800
      %v3997 = vpop.f32.mrf.mxu0
      %v3998 = vadd.f32 %v3744, %v3997
      %v3999 = vpop.f32.mrf.mxu0
      %4000 = vmatprep.mubr.f32.mxu0 0.0
      %4001 = vmatmul.mubr.f32.gmra.mxu0 %v3803
      %v4002 = vpop.f32.mrf.mxu0
      %v4003 = vadd.f32 %v3744, %v4002
      %v4004 = vpop.f32.mrf.mxu0
      %4005 = vmatprep.mubr.f32.mxu0 0.0
      %4006 = vmatmul.mubr.f32.gmra.mxu0 %v3806
      %v4007 = vpop.f32.mrf.mxu0
      %v4008 = vadd.f32 %v3744, %v4007
      %v4009 = vpop.f32.mrf.mxu0
      %4010 = vmatprep.mubr.f32.mxu0 0.0
      %4011 = vmatmul.mubr.f32.gmra.mxu0 %v3809
      %v4012 = vpop.f32.mrf.mxu0
      %v4013 = vadd.f32 %v3744, %v4012
      %v4014 = vpop.f32.mrf.mxu0
      %4015 = vmatprep.mubr.f32.mxu0 0.0
      %4016 = vmatmul.mubr.f32.gmra.mxu0 %v3812
      %v4017 = vpop.f32.mrf.mxu0
      %v4018 = vadd.f32 %v3744, %v4017
      %v4019 = vpop.f32.mrf.mxu0
      %4020 = vmatprep.mubr.f32.mxu0 0.0
      %4021 = vmatmul.mubr.f32.gmra.mxu0 %v3815
      %v4022 = vpop.f32.mrf.mxu0
      %v4023 = vadd.f32 %v3744, %v4022
      %v4024 = vpop.f32.mrf.mxu0
      %4025 = vmatprep.mubr.f32.mxu0 0.0
      %4026 = vmatmul.mubr.f32.gmra.mxu0 %v3818
      %v4027 = vpop.f32.mrf.mxu0
      %v4028 = vadd.f32 %v3744, %v4027
      %v4029 = vpop.f32.mrf.mxu0
      %4030 = vmatprep.mubr.f32.mxu0 0.0
      %4031 = vmatmul.mubr.f32.gmra.mxu0 %v3821
      %v4032 = vpop.f32.mrf.mxu0
      %v4033 = vadd.f32 %v3744, %v4032
      %v4034 = vpop.f32.mrf.mxu0
      %4035 = vmatprep.mubr.f32.mxu0 0.0
      %4036 = vmatmul.mubr.f32.gmra.mxu0 %v3824
      %v4037 = vpop.f32.mrf.mxu0
      %v4038 = vadd.f32 %v3744, %v4037
      %v4039 = vpop.f32.mrf.mxu0
      %4040 = vmatprep.mubr.f32.mxu0 0.0
      %4041 = vmatmul.mubr.f32.gmra.mxu0 %v3827
      %v4042 = vpop.f32.mrf.mxu0
      %v4043 = vadd.f32 %v3744, %v4042
      %v4044 = vpop.f32.mrf.mxu0
      %4045 = vmatprep.mubr.f32.mxu0 0.0
      %4046 = vmatmul.mubr.f32.gmra.mxu0 %v3830
      %v4047 = vpop.f32.mrf.mxu0
      %v4048 = vadd.f32 %v3744, %v4047
      %v4049 = vpop.f32.mrf.mxu0
      %4050 = vmatprep.mubr.f32.mxu0 0.0
      %4051 = vmatmul.mubr.f32.gmra.mxu0 %v3833
      %v4052 = vpop.f32.mrf.mxu0
      %v4053 = vadd.f32 %v3744, %v4052
      %v4054 = vpop.f32.mrf.mxu0
      %4055 = vmatprep.mubr.f32.mxu0 0.0
      %4056 = vmatmul.mubr.f32.gmra.mxu0 %v3836
      %v4057 = vpop.f32.mrf.mxu0
      %v4058 = vadd.f32 %v3744, %v4057
      %v4059 = vpop.f32.mrf.mxu0
      %4060 = vmatprep.mubr.f32.mxu0 0.0
      %4061 = vmatmul.mubr.f32.gmra.mxu0 %v3839
      %v4062 = vpop.f32.mrf.mxu0
      %v4063 = vadd.f32 %v3744, %v4062
      %v4064 = vpop.f32.mrf.mxu0
      %4065 = vdwg.mxu0
      %4066 = vmatprep.subr.mxu0 0.0
      %4067 = vmatpush1.msra.mxu0 0.0
      %4068 = vmatprep.subr.mxu0 0.0
      %4069 = vmatpush1.msra.mxu0 0.0
      %4070 = vmatprep.subr.mxu0 0.0
      %4071 = vmatpush1.msra.mxu0 0.0
      %4072 = vmatprep.subr.mxu0 0.0
      %4073 = vmatpush1.msra.mxu0 0.0
      %4074 = vmatprep.subr.mxu0 0.0
      %4075 = vmatpush1.msra.mxu0 0.0
      %4076 = vmatprep.subr.mxu0 0.0
      %4077 = vmatpush1.msra.mxu0 0.0
      %4078 = vmatprep.subr.mxu0 0.0
      %4079 = vmatpush1.msra.mxu0 0.0
      %4080 = vmatprep.subr.mxu0 0.0
      %4081 = vmatpush1.msra.mxu0 0.0
      %4082 = vmatprep.subr.mxu0 0.0
      %4083 = vmatpush1.msra.mxu0 0.0
      %4084 = vmatprep.subr.mxu0 0.0
      %4085 = vmatpush1.msra.mxu0 0.0
      %4086 = vmatprep.subr.mxu0 0.0
      %4087 = vmatpush1.msra.mxu0 0.0
      %4088 = vmatprep.subr.mxu0 0.0
      %4089 = vmatpush1.msra.mxu0 0.0
      %4090 = vmatprep.subr.mxu0 0.0
      %4091 = vmatpush1.msra.mxu0 0.0
      %4092 = vmatprep.subr.mxu0 0.0
      %4093 = vmatpush1.msra.mxu0 0.0
      %4094 = vmatprep.subr.mxu0 0.0
      %4095 = vmatpush1.msra.mxu0 %v3913
      %4096 = vmatprep.subr.mxu0 0.0
      %4097 = vmatpush1.msra.mxu0 %v3908
      %4098 = vmatprep.subr.mxu0 0.0
      %4099 = vmatpush2.msra.mxu0 0.0
      %4100 = vmatprep.subr.mxu0 0.0
      %4101 = vmatpush2.msra.mxu0 0.0
      %4102 = vmatprep.subr.mxu0 0.0
      %4103 = vmatpush2.msra.mxu0 0.0
      %4104 = vmatprep.subr.mxu0 0.0
      %4105 = vmatpush2.msra.mxu0 0.0
      %4106 = vmatprep.subr.mxu0 0.0
      %4107 = vmatpush2.msra.mxu0 0.0
      %4108 = vmatprep.subr.mxu0 0.0
      %4109 = vmatpush2.msra.mxu0 0.0
      %4110 = vmatprep.subr.mxu0 0.0
      %4111 = vmatpush2.msra.mxu0 0.0
      %4112 = vmatprep.subr.mxu0 0.0
      %4113 = vmatpush2.msra.mxu0 0.0
      %4114 = vmatprep.subr.mxu0 0.0
      %4115 = vmatpush2.msra.mxu0 0.0
      %4116 = vmatprep.subr.mxu0 0.0
      %4117 = vmatpush2.msra.mxu0 0.0
      %4118 = vmatprep.subr.mxu0 0.0
      %4119 = vmatpush2.msra.mxu0 0.0
      %4120 = vmatprep.subr.mxu0 0.0
      %4121 = vmatpush2.msra.mxu0 0.0
      %4122 = vmatprep.subr.mxu0 0.0
      %4123 = vmatpush2.msra.mxu0 0.0
      %4124 = vmatprep.subr.mxu0 0.0
      %4125 = vmatpush2.msra.mxu0 0.0
      %4126 = vmatprep.subr.mxu0 0.0
      %4127 = vmatpush2.msra.mxu0 0.0
      %4128 = vmatprep.subr.mxu0 0.0
      %4129 = vmatpush2.msra.mxu0 0.0
      %4130 = vmatprep.mubr.f32.mxu0 0.0
      %4131 = vmatmul.mubr.f32.gmra.mxu0 %v274
      %v4132 = vpop.f32.mrf.mxu0
      %v4133 = vadd.f32 0.0, %v4132
      %v4134 = vpop.f32.mrf.mxu0
      %4135 = vmatprep.mubr.f32.mxu0 0.0
      %4136 = vmatmul.mubr.f32.gmra.mxu0 %v277
      %v4137 = vpop.f32.mrf.mxu0
      %v4138 = vadd.f32 0.0, %v4137
      %v4139 = vpop.f32.mrf.mxu0
      %4140 = vdwg.mxu0
      %4141 = vmatprep.subr.mxu0 0.0
      %4142 = vmatpush1.msra.mxu0 0.0
      %4143 = vmatprep.subr.mxu0 0.0
      %4144 = vmatpush1.msra.mxu0 0.0
      %4145 = vmatprep.subr.mxu0 0.0
      %4146 = vmatpush1.msra.mxu0 0.0
      %4147 = vmatprep.subr.mxu0 0.0
      %4148 = vmatpush1.msra.mxu0 0.0
      %4149 = vmatprep.subr.mxu0 0.0
      %4150 = vmatpush1.msra.mxu0 0.0
      %4151 = vmatprep.subr.mxu0 0.0
      %4152 = vmatpush1.msra.mxu0 0.0
      %4153 = vmatprep.subr.mxu0 0.0
      %4154 = vmatpush1.msra.mxu0 0.0
      %4155 = vmatprep.subr.mxu0 0.0
      %4156 = vmatpush1.msra.mxu0 0.0
      %4157 = vmatprep.subr.mxu0 0.0
      %4158 = vmatpush1.msra.mxu0 0.0
      %4159 = vmatprep.subr.mxu0 0.0
      %4160 = vmatpush1.msra.mxu0 0.0
      %4161 = vmatprep.subr.mxu0 0.0
      %4162 = vmatpush1.msra.mxu0 0.0
      %4163 = vmatprep.subr.mxu0 0.0
      %4164 = vmatpush1.msra.mxu0 0.0
      %4165 = vmatprep.subr.mxu0 0.0
      %4166 = vmatpush1.msra.mxu0 0.0
      %4167 = vmatprep.subr.mxu0 0.0
      %4168 = vmatpush1.msra.mxu0 0.0
      %4169 = vmatprep.subr.mxu0 0.0
      %4170 = vmatpush1.msra.mxu0 %v3923
      %4171 = vmatprep.subr.mxu0 0.0
      %4172 = vmatpush1.msra.mxu0 %v3918
      %4173 = vmatprep.subr.mxu0 0.0
      %4174 = vmatpush2.msra.mxu0 0.0
      %4175 = vmatprep.subr.mxu0 0.0
      %4176 = vmatpush2.msra.mxu0 0.0
      %4177 = vmatprep.subr.mxu0 0.0
      %4178 = vmatpush2.msra.mxu0 0.0
      %4179 = vmatprep.subr.mxu0 0.0
      %4180 = vmatpush2.msra.mxu0 0.0
      %4181 = vmatprep.subr.mxu0 0.0
      %4182 = vmatpush2.msra.mxu0 0.0
      %4183 = vmatprep.subr.mxu0 0.0
      %4184 = vmatpush2.msra.mxu0 0.0
      %4185 = vmatprep.subr.mxu0 0.0
      %4186 = vmatpush2.msra.mxu0 0.0
      %4187 = vmatprep.subr.mxu0 0.0
      %4188 = vmatpush2.msra.mxu0 0.0
      %4189 = vmatprep.subr.mxu0 0.0
      %4190 = vmatpush2.msra.mxu0 0.0
      %4191 = vmatprep.subr.mxu0 0.0
      %4192 = vmatpush2.msra.mxu0 0.0
      %4193 = vmatprep.subr.mxu0 0.0
      %4194 = vmatpush2.msra.mxu0 0.0
      %4195 = vmatprep.subr.mxu0 0.0
      %4196 = vmatpush2.msra.mxu0 0.0
      %4197 = vmatprep.subr.mxu0 0.0
      %4198 = vmatpush2.msra.mxu0 0.0
      %4199 = vmatprep.subr.mxu0 0.0
      %4200 = vmatpush2.msra.mxu0 0.0
      %4201 = vmatprep.subr.mxu0 0.0
      %4202 = vmatpush2.msra.mxu0 0.0
      %4203 = vmatprep.subr.mxu0 0.0
      %4204 = vmatpush2.msra.mxu0 0.0
      %4205 = vmatprep.mubr.f32.mxu0 0.0
      %4206 = vmatmul.mubr.f32.gmra.mxu0 %v274
      %v4207 = vpop.f32.mrf.mxu0
      %v4208 = vadd.f32 0.0, %v4207
      %v4209 = vpop.f32.mrf.mxu0
      %4210 = vmatprep.mubr.f32.mxu0 0.0
      %4211 = vmatmul.mubr.f32.gmra.mxu0 %v277
      %v4212 = vpop.f32.mrf.mxu0
      %v4213 = vadd.f32 0.0, %v4212
      %v4214 = vpop.f32.mrf.mxu0
      %4215 = vdwg.mxu0
      %4216 = vmatprep.subr.mxu0 0.0
      %4217 = vmatpush1.msra.mxu0 0.0
      %4218 = vmatprep.subr.mxu0 0.0
      %4219 = vmatpush1.msra.mxu0 0.0
      %4220 = vmatprep.subr.mxu0 0.0
      %4221 = vmatpush1.msra.mxu0 0.0
      %4222 = vmatprep.subr.mxu0 0.0
      %4223 = vmatpush1.msra.mxu0 0.0
      %4224 = vmatprep.subr.mxu0 0.0
      %4225 = vmatpush1.msra.mxu0 0.0
      %4226 = vmatprep.subr.mxu0 0.0
      %4227 = vmatpush1.msra.mxu0 0.0
      %4228 = vmatprep.subr.mxu0 0.0
      %4229 = vmatpush1.msra.mxu0 0.0
      %4230 = vmatprep.subr.mxu0 0.0
      %4231 = vmatpush1.msra.mxu0 0.0
      %4232 = vmatprep.subr.mxu0 0.0
      %4233 = vmatpush1.msra.mxu0 0.0
      %4234 = vmatprep.subr.mxu0 0.0
      %4235 = vmatpush1.msra.mxu0 0.0
      %4236 = vmatprep.subr.mxu0 0.0
      %4237 = vmatpush1.msra.mxu0 0.0
      %4238 = vmatprep.subr.mxu0 0.0
      %4239 = vmatpush1.msra.mxu0 0.0
      %4240 = vmatprep.subr.mxu0 0.0
      %4241 = vmatpush1.msra.mxu0 0.0
      %4242 = vmatprep.subr.mxu0 0.0
      %4243 = vmatpush1.msra.mxu0 0.0
      %4244 = vmatprep.subr.mxu0 0.0
      %4245 = vmatpush1.msra.mxu0 %v3933
      %4246 = vmatprep.subr.mxu0 0.0
      %4247 = vmatpush1.msra.mxu0 %v3928
      %4248 = vmatprep.subr.mxu0 0.0
      %4249 = vmatpush2.msra.mxu0 0.0
      %4250 = vmatprep.subr.mxu0 0.0
      %4251 = vmatpush2.msra.mxu0 0.0
      %4252 = vmatprep.subr.mxu0 0.0
      %4253 = vmatpush2.msra.mxu0 0.0
      %4254 = vmatprep.subr.mxu0 0.0
      %4255 = vmatpush2.msra.mxu0 0.0
      %4256 = vmatprep.subr.mxu0 0.0
      %4257 = vmatpush2.msra.mxu0 0.0
      %4258 = vmatprep.subr.mxu0 0.0
      %4259 = vmatpush2.msra.mxu0 0.0
      %4260 = vmatprep.subr.mxu0 0.0
      %4261 = vmatpush2.msra.mxu0 0.0
      %4262 = vmatprep.subr.mxu0 0.0
      %4263 = vmatpush2.msra.mxu0 0.0
      %4264 = vmatprep.subr.mxu0 0.0
      %4265 = vmatpush2.msra.mxu0 0.0
      %4266 = vmatprep.subr.mxu0 0.0
      %4267 = vmatpush2.msra.mxu0 0.0
      %4268 = vmatprep.subr.mxu0 0.0
      %4269 = vmatpush2.msra.mxu0 0.0
      %4270 = vmatprep.subr.mxu0 0.0
      %4271 = vmatpush2.msra.mxu0 0.0
      %4272 = vmatprep.subr.mxu0 0.0
      %4273 = vmatpush2.msra.mxu0 0.0
      %4274 = vmatprep.subr.mxu0 0.0
      %4275 = vmatpush2.msra.mxu0 0.0
      %4276 = vmatprep.subr.mxu0 0.0
      %4277 = vmatpush2.msra.mxu0 0.0
      %4278 = vmatprep.subr.mxu0 0.0
      %4279 = vmatpush2.msra.mxu0 0.0
      %4280 = vmatprep.mubr.f32.mxu0 0.0
      %4281 = vmatmul.mubr.f32.gmra.mxu0 %v274
      %v4282 = vpop.f32.mrf.mxu0
      %v4283 = vadd.f32 0.0, %v4282
      %v4284 = vpop.f32.mrf.mxu0
      %4285 = vmatprep.mubr.f32.mxu0 0.0
      %4286 = vmatmul.mubr.f32.gmra.mxu0 %v277
      %v4287 = vpop.f32.mrf.mxu0
      %v4288 = vadd.f32 0.0, %v4287
      %v4289 = vpop.f32.mrf.mxu0
      %4290 = vdwg.mxu0
      %4291 = vmatprep.subr.mxu0 0.0
      %4292 = vmatpush1.msra.mxu0 0.0
      %4293 = vmatprep.subr.mxu0 0.0
      %4294 = vmatpush1.msra.mxu0 0.0
      %4295 = vmatprep.subr.mxu0 0.0
      %4296 = vmatpush1.msra.mxu0 0.0
      %4297 = vmatprep.subr.mxu0 0.0
      %4298 = vmatpush1.msra.mxu0 0.0
      %4299 = vmatprep.subr.mxu0 0.0
      %4300 = vmatpush1.msra.mxu0 0.0
      %4301 = vmatprep.subr.mxu0 0.0
      %4302 = vmatpush1.msra.mxu0 0.0
      %4303 = vmatprep.subr.mxu0 0.0
      %4304 = vmatpush1.msra.mxu0 0.0
      %4305 = vmatprep.subr.mxu0 0.0
      %4306 = vmatpush1.msra.mxu0 0.0
      %4307 = vmatprep.subr.mxu0 0.0
      %4308 = vmatpush1.msra.mxu0 0.0
      %4309 = vmatprep.subr.mxu0 0.0
      %4310 = vmatpush1.msra.mxu0 0.0
      %4311 = vmatprep.subr.mxu0 0.0
      %4312 = vmatpush1.msra.mxu0 0.0
      %4313 = vmatprep.subr.mxu0 0.0
      %4314 = vmatpush1.msra.mxu0 0.0
      %4315 = vmatprep.subr.mxu0 0.0
      %4316 = vmatpush1.msra.mxu0 0.0
      %4317 = vmatprep.subr.mxu0 0.0
      %4318 = vmatpush1.msra.mxu0 0.0
      %4319 = vmatprep.subr.mxu0 0.0
      %4320 = vmatpush1.msra.mxu0 %v3943
      %4321 = vmatprep.subr.mxu0 0.0
      %4322 = vmatpush1.msra.mxu0 %v3938
      %4323 = vmatprep.subr.mxu0 0.0
      %4324 = vmatpush2.msra.mxu0 0.0
      %4325 = vmatprep.subr.mxu0 0.0
      %4326 = vmatpush2.msra.mxu0 0.0
      %4327 = vmatprep.subr.mxu0 0.0
      %4328 = vmatpush2.msra.mxu0 0.0
      %4329 = vmatprep.subr.mxu0 0.0
      %4330 = vmatpush2.msra.mxu0 0.0
      %4331 = vmatprep.subr.mxu0 0.0
      %4332 = vmatpush2.msra.mxu0 0.0
      %4333 = vmatprep.subr.mxu0 0.0
      %4334 = vmatpush2.msra.mxu0 0.0
      %4335 = vmatprep.subr.mxu0 0.0
      %4336 = vmatpush2.msra.mxu0 0.0
      %4337 = vmatprep.subr.mxu0 0.0
      %4338 = vmatpush2.msra.mxu0 0.0
      %4339 = vmatprep.subr.mxu0 0.0
      %4340 = vmatpush2.msra.mxu0 0.0
      %4341 = vmatprep.subr.mxu0 0.0
      %4342 = vmatpush2.msra.mxu0 0.0
      %4343 = vmatprep.subr.mxu0 0.0
      %4344 = vmatpush2.msra.mxu0 0.0
      %4345 = vmatprep.subr.mxu0 0.0
      %4346 = vmatpush2.msra.mxu0 0.0
      %4347 = vmatprep.subr.mxu0 0.0
      %4348 = vmatpush2.msra.mxu0 0.0
      %4349 = vmatprep.subr.mxu0 0.0
      %4350 = vmatpush2.msra.mxu0 0.0
      %4351 = vmatprep.subr.mxu0 0.0
      %4352 = vmatpush2.msra.mxu0 0.0
      %4353 = vmatprep.subr.mxu0 0.0
      %4354 = vmatpush2.msra.mxu0 0.0
      %4355 = vmatprep.mubr.f32.mxu0 0.0
      %4356 = vmatmul.mubr.f32.gmra.mxu0 %v274
      %v4357 = vpop.f32.mrf.mxu0
      %v4358 = vadd.f32 0.0, %v4357
      %v4359 = vpop.f32.mrf.mxu0
      %4360 = vmatprep.mubr.f32.mxu0 0.0
      %4361 = vmatmul.mubr.f32.gmra.mxu0 %v277
      %v4362 = vpop.f32.mrf.mxu0
      %v4363 = vadd.f32 0.0, %v4362
      %v4364 = vpop.f32.mrf.mxu0
      %4365 = vdwg.mxu0
      %4366 = vmatprep.subr.mxu0 0.0
      %4367 = vmatpush1.msra.mxu0 0.0
      %4368 = vmatprep.subr.mxu0 0.0
      %4369 = vmatpush1.msra.mxu0 0.0
      %4370 = vmatprep.subr.mxu0 0.0
      %4371 = vmatpush1.msra.mxu0 0.0
      %4372 = vmatprep.subr.mxu0 0.0
      %4373 = vmatpush1.msra.mxu0 0.0
      %4374 = vmatprep.subr.mxu0 0.0
      %4375 = vmatpush1.msra.mxu0 0.0
      %4376 = vmatprep.subr.mxu0 0.0
      %4377 = vmatpush1.msra.mxu0 0.0
      %4378 = vmatprep.subr.mxu0 0.0
      %4379 = vmatpush1.msra.mxu0 0.0
      %4380 = vmatprep.subr.mxu0 0.0
      %4381 = vmatpush1.msra.mxu0 0.0
      %4382 = vmatprep.subr.mxu0 0.0
      %4383 = vmatpush1.msra.mxu0 0.0
      %4384 = vmatprep.subr.mxu0 0.0
      %4385 = vmatpush1.msra.mxu0 0.0
      %4386 = vmatprep.subr.mxu0 0.0
      %4387 = vmatpush1.msra.mxu0 0.0
      %4388 = vmatprep.subr.mxu0 0.0
      %4389 = vmatpush1.msra.mxu0 0.0
      %4390 = vmatprep.subr.mxu0 0.0
      %4391 = vmatpush1.msra.mxu0 0.0
      %4392 = vmatprep.subr.mxu0 0.0
      %4393 = vmatpush1.msra.mxu0 0.0
      %4394 = vmatprep.subr.mxu0 0.0
      %4395 = vmatpush1.msra.mxu0 %v3953
      %4396 = vmatprep.subr.mxu0 0.0
      %4397 = vmatpush1.msra.mxu0 %v3948
      %4398 = vmatprep.subr.mxu0 0.0
      %4399 = vmatpush2.msra.mxu0 0.0
      %4400 = vmatprep.subr.mxu0 0.0
      %4401 = vmatpush2.msra.mxu0 0.0
      %4402 = vmatprep.subr.mxu0 0.0
      %4403 = vmatpush2.msra.mxu0 0.0
      %4404 = vmatprep.subr.mxu0 0.0
      %4405 = vmatpush2.msra.mxu0 0.0
      %4406 = vmatprep.subr.mxu0 0.0
      %4407 = vmatpush2.msra.mxu0 0.0
      %4408 = vmatprep.subr.mxu0 0.0
      %4409 = vmatpush2.msra.mxu0 0.0
      %4410 = vmatprep.subr.mxu0 0.0
      %4411 = vmatpush2.msra.mxu0 0.0
      %4412 = vmatprep.subr.mxu0 0.0
      %4413 = vmatpush2.msra.mxu0 0.0
      %4414 = vmatprep.subr.mxu0 0.0
      %4415 = vmatpush2.msra.mxu0 0.0
      %4416 = vmatprep.subr.mxu0 0.0
      %4417 = vmatpush2.msra.mxu0 0.0
      %4418 = vmatprep.subr.mxu0 0.0
      %4419 = vmatpush2.msra.mxu0 0.0
      %4420 = vmatprep.subr.mxu0 0.0
      %4421 = vmatpush2.msra.mxu0 0.0
      %4422 = vmatprep.subr.mxu0 0.0
      %4423 = vmatpush2.msra.mxu0 0.0
      %4424 = vmatprep.subr.mxu0 0.0
      %4425 = vmatpush2.msra.mxu0 0.0
      %4426 = vmatprep.subr.mxu0 0.0
      %4427 = vmatpush2.msra.mxu0 0.0
      %4428 = vmatprep.subr.mxu0 0.0
      %4429 = vmatpush2.msra.mxu0 0.0
      %4430 = vmatprep.mubr.f32.mxu0 0.0
      %4431 = vmatmul.mubr.f32.gmra.mxu0 %v274
      %v4432 = vpop.f32.mrf.mxu0
      %v4433 = vadd.f32 0.0, %v4432
      %v4434 = vpop.f32.mrf.mxu0
      %4435 = vmatprep.mubr.f32.mxu0 0.0
      %4436 = vmatmul.mubr.f32.gmra.mxu0 %v277
      %v4437 = vpop.f32.mrf.mxu0
      %v4438 = vadd.f32 0.0, %v4437
      %v4439 = vpop.f32.mrf.mxu0
      %4440 = vdwg.mxu0
      %4441 = vmatprep.subr.mxu0 0.0
      %4442 = vmatpush1.msra.mxu0 0.0
      %4443 = vmatprep.subr.mxu0 0.0
      %4444 = vmatpush1.msra.mxu0 0.0
      %4445 = vmatprep.subr.mxu0 0.0
      %4446 = vmatpush1.msra.mxu0 0.0
      %4447 = vmatprep.subr.mxu0 0.0
      %4448 = vmatpush1.msra.mxu0 0.0
      %4449 = vmatprep.subr.mxu0 0.0
      %4450 = vmatpush1.msra.mxu0 0.0
      %4451 = vmatprep.subr.mxu0 0.0
      %4452 = vmatpush1.msra.mxu0 0.0
      %4453 = vmatprep.subr.mxu0 0.0
      %4454 = vmatpush1.msra.mxu0 0.0
      %4455 = vmatprep.subr.mxu0 0.0
      %4456 = vmatpush1.msra.mxu0 0.0
      %4457 = vmatprep.subr.mxu0 0.0
      %4458 = vmatpush1.msra.mxu0 0.0
      %4459 = vmatprep.subr.mxu0 0.0
      %4460 = vmatpush1.msra.mxu0 0.0
      %4461 = vmatprep.subr.mxu0 0.0
      %4462 = vmatpush1.msra.mxu0 0.0
      %4463 = vmatprep.subr.mxu0 0.0
      %4464 = vmatpush1.msra.mxu0 0.0
      %4465 = vmatprep.subr.mxu0 0.0
      %4466 = vmatpush1.msra.mxu0 0.0
      %4467 = vmatprep.subr.mxu0 0.0
      %4468 = vmatpush1.msra.mxu0 0.0
      %4469 = vmatprep.subr.mxu0 0.0
      %4470 = vmatpush1.msra.mxu0 %v3963
      %4471 = vmatprep.subr.mxu0 0.0
      %4472 = vmatpush1.msra.mxu0 %v3958
      %4473 = vmatprep.subr.mxu0 0.0
      %4474 = vmatpush2.msra.mxu0 0.0
      %4475 = vmatprep.subr.mxu0 0.0
      %4476 = vmatpush2.msra.mxu0 0.0
      %4477 = vmatprep.subr.mxu0 0.0
      %4478 = vmatpush2.msra.mxu0 0.0
      %4479 = vmatprep.subr.mxu0 0.0
      %4480 = vmatpush2.msra.mxu0 0.0
      %4481 = vmatprep.subr.mxu0 0.0
      %4482 = vmatpush2.msra.mxu0 0.0
      %4483 = vmatprep.subr.mxu0 0.0
      %4484 = vmatpush2.msra.mxu0 0.0
      %4485 = vmatprep.subr.mxu0 0.0
      %4486 = vmatpush2.msra.mxu0 0.0
      %4487 = vmatprep.subr.mxu0 0.0
      %4488 = vmatpush2.msra.mxu0 0.0
      %4489 = vmatprep.subr.mxu0 0.0
      %4490 = vmatpush2.msra.mxu0 0.0
      %4491 = vmatprep.subr.mxu0 0.0
      %4492 = vmatpush2.msra.mxu0 0.0
      %4493 = vmatprep.subr.mxu0 0.0
      %4494 = vmatpush2.msra.mxu0 0.0
      %4495 = vmatprep.subr.mxu0 0.0
      %4496 = vmatpush2.msra.mxu0 0.0
      %4497 = vmatprep.subr.mxu0 0.0
      %4498 = vmatpush2.msra.mxu0 0.0
      %4499 = vmatprep.subr.mxu0 0.0
      %4500 = vmatpush2.msra.mxu0 0.0
      %4501 = vmatprep.subr.mxu0 0.0
      %4502 = vmatpush2.msra.mxu0 0.0
      %4503 = vmatprep.subr.mxu0 0.0
      %4504 = vmatpush2.msra.mxu0 0.0
      %4505 = vmatprep.mubr.f32.mxu0 0.0
      %4506 = vmatmul.mubr.f32.gmra.mxu0 %v274
      %v4507 = vpop.f32.mrf.mxu0
      %v4508 = vadd.f32 0.0, %v4507
      %v4509 = vpop.f32.mrf.mxu0
      %4510 = vmatprep.mubr.f32.mxu0 0.0
      %4511 = vmatmul.mubr.f32.gmra.mxu0 %v277
      %v4512 = vpop.f32.mrf.mxu0
      %v4513 = vadd.f32 0.0, %v4512
      %v4514 = vpop.f32.mrf.mxu0
      %4515 = vdwg.mxu0
      %4516 = vmatprep.subr.mxu0 0.0
      %4517 = vmatpush1.msra.mxu0 0.0
      %4518 = vmatprep.subr.mxu0 0.0
      %4519 = vmatpush1.msra.mxu0 0.0
      %4520 = vmatprep.subr.mxu0 0.0
      %4521 = vmatpush1.msra.mxu0 0.0
      %4522 = vmatprep.subr.mxu0 0.0
      %4523 = vmatpush1.msra.mxu0 0.0
      %4524 = vmatprep.subr.mxu0 0.0
      %4525 = vmatpush1.msra.mxu0 0.0
      %4526 = vmatprep.subr.mxu0 0.0
      %4527 = vmatpush1.msra.mxu0 0.0
      %4528 = vmatprep.subr.mxu0 0.0
      %4529 = vmatpush1.msra.mxu0 0.0
      %4530 = vmatprep.subr.mxu0 0.0
      %4531 = vmatpush1.msra.mxu0 0.0
      %4532 = vmatprep.subr.mxu0 0.0
      %4533 = vmatpush1.msra.mxu0 0.0
      %4534 = vmatprep.subr.mxu0 0.0
      %4535 = vmatpush1.msra.mxu0 0.0
      %4536 = vmatprep.subr.mxu0 0.0
      %4537 = vmatpush1.msra.mxu0 0.0
      %4538 = vmatprep.subr.mxu0 0.0
      %4539 = vmatpush1.msra.mxu0 0.0
      %4540 = vmatprep.subr.mxu0 0.0
      %4541 = vmatpush1.msra.mxu0 0.0
      %4542 = vmatprep.subr.mxu0 0.0
      %4543 = vmatpush1.msra.mxu0 0.0
      %4544 = vmatprep.subr.mxu0 0.0
      %4545 = vmatpush1.msra.mxu0 %v3973
      %4546 = vmatprep.subr.mxu0 0.0
      %4547 = vmatpush1.msra.mxu0 %v3968
      %4548 = vmatprep.subr.mxu0 0.0
      %4549 = vmatpush2.msra.mxu0 0.0
      %4550 = vmatprep.subr.mxu0 0.0
      %4551 = vmatpush2.msra.mxu0 0.0
      %4552 = vmatprep.subr.mxu0 0.0
      %4553 = vmatpush2.msra.mxu0 0.0
      %4554 = vmatprep.subr.mxu0 0.0
      %4555 = vmatpush2.msra.mxu0 0.0
      %4556 = vmatprep.subr.mxu0 0.0
      %4557 = vmatpush2.msra.mxu0 0.0
      %4558 = vmatprep.subr.mxu0 0.0
      %4559 = vmatpush2.msra.mxu0 0.0
      %4560 = vmatprep.subr.mxu0 0.0
      %4561 = vmatpush2.msra.mxu0 0.0
      %4562 = vmatprep.subr.mxu0 0.0
      %4563 = vmatpush2.msra.mxu0 0.0
      %4564 = vmatprep.subr.mxu0 0.0
      %4565 = vmatpush2.msra.mxu0 0.0
      %4566 = vmatprep.subr.mxu0 0.0
      %4567 = vmatpush2.msra.mxu0 0.0
      %4568 = vmatprep.subr.mxu0 0.0
      %4569 = vmatpush2.msra.mxu0 0.0
      %4570 = vmatprep.subr.mxu0 0.0
      %4571 = vmatpush2.msra.mxu0 0.0
      %4572 = vmatprep.subr.mxu0 0.0
      %4573 = vmatpush2.msra.mxu0 0.0
      %4574 = vmatprep.subr.mxu0 0.0
      %4575 = vmatpush2.msra.mxu0 0.0
      %4576 = vmatprep.subr.mxu0 0.0
      %4577 = vmatpush2.msra.mxu0 0.0
      %4578 = vmatprep.subr.mxu0 0.0
      %4579 = vmatpush2.msra.mxu0 0.0
      %4580 = vmatprep.mubr.f32.mxu0 0.0
      %4581 = vmatmul.mubr.f32.gmra.mxu0 %v274
      %v4582 = vpop.f32.mrf.mxu0
      %v4583 = vadd.f32 0.0, %v4582
      %v4584 = vpop.f32.mrf.mxu0
      %4585 = vmatprep.mubr.f32.mxu0 0.0
      %4586 = vmatmul.mubr.f32.gmra.mxu0 %v277
      %v4587 = vpop.f32.mrf.mxu0
      %v4588 = vadd.f32 0.0, %v4587
      %v4589 = vpop.f32.mrf.mxu0
      %4590 = vdwg.mxu0
      %4591 = vmatprep.subr.mxu0 0.0
      %4592 = vmatpush1.msra.mxu0 0.0
      %4593 = vmatprep.subr.mxu0 0.0
      %4594 = vmatpush1.msra.mxu0 0.0
      %4595 = vmatprep.subr.mxu0 0.0
      %4596 = vmatpush1.msra.mxu0 0.0
      %4597 = vmatprep.subr.mxu0 0.0
      %4598 = vmatpush1.msra.mxu0 0.0
      %4599 = vmatprep.subr.mxu0 0.0
      %4600 = vmatpush1.msra.mxu0 0.0
      %4601 = vmatprep.subr.mxu0 0.0
      %4602 = vmatpush1.msra.mxu0 0.0
      %4603 = vmatprep.subr.mxu0 0.0
      %4604 = vmatpush1.msra.mxu0 0.0
      %4605 = vmatprep.subr.mxu0 0.0
      %4606 = vmatpush1.msra.mxu0 0.0
      %4607 = vmatprep.subr.mxu0 0.0
      %4608 = vmatpush1.msra.mxu0 0.0
      %4609 = vmatprep.subr.mxu0 0.0
      %4610 = vmatpush1.msra.mxu0 0.0
      %4611 = vmatprep.subr.mxu0 0.0
      %4612 = vmatpush1.msra.mxu0 0.0
      %4613 = vmatprep.subr.mxu0 0.0
      %4614 = vmatpush1.msra.mxu0 0.0
      %4615 = vmatprep.subr.mxu0 0.0
      %4616 = vmatpush1.msra.mxu0 0.0
      %4617 = vmatprep.subr.mxu0 0.0
      %4618 = vmatpush1.msra.mxu0 0.0
      %4619 = vmatprep.subr.mxu0 0.0
      %4620 = vmatpush1.msra.mxu0 %v3983
      %4621 = vmatprep.subr.mxu0 0.0
      %4622 = vmatpush1.msra.mxu0 %v3978
      %4623 = vmatprep.subr.mxu0 0.0
      %4624 = vmatpush2.msra.mxu0 0.0
      %4625 = vmatprep.subr.mxu0 0.0
      %4626 = vmatpush2.msra.mxu0 0.0
      %4627 = vmatprep.subr.mxu0 0.0
      %4628 = vmatpush2.msra.mxu0 0.0
      %4629 = vmatprep.subr.mxu0 0.0
      %4630 = vmatpush2.msra.mxu0 0.0
      %4631 = vmatprep.subr.mxu0 0.0
      %4632 = vmatpush2.msra.mxu0 0.0
      %4633 = vmatprep.subr.mxu0 0.0
      %4634 = vmatpush2.msra.mxu0 0.0
      %4635 = vmatprep.subr.mxu0 0.0
      %4636 = vmatpush2.msra.mxu0 0.0
      %4637 = vmatprep.subr.mxu0 0.0
      %4638 = vmatpush2.msra.mxu0 0.0
      %4639 = vmatprep.subr.mxu0 0.0
      %4640 = vmatpush2.msra.mxu0 0.0
      %4641 = vmatprep.subr.mxu0 0.0
      %4642 = vmatpush2.msra.mxu0 0.0
      %4643 = vmatprep.subr.mxu0 0.0
      %4644 = vmatpush2.msra.mxu0 0.0
      %4645 = vmatprep.subr.mxu0 0.0
      %4646 = vmatpush2.msra.mxu0 0.0
      %4647 = vmatprep.subr.mxu0 0.0
      %4648 = vmatpush2.msra.mxu0 0.0
      %4649 = vmatprep.subr.mxu0 0.0
      %4650 = vmatpush2.msra.mxu0 0.0
      %4651 = vmatprep.subr.mxu0 0.0
      %4652 = vmatpush2.msra.mxu0 0.0
      %4653 = vmatprep.subr.mxu0 0.0
      %4654 = vmatpush2.msra.mxu0 0.0
      %4655 = vmatprep.mubr.f32.mxu0 0.0
      %4656 = vmatmul.mubr.f32.gmra.mxu0 %v274
      %v4657 = vpop.f32.mrf.mxu0
      %v4658 = vadd.f32 0.0, %v4657
      %v4659 = vpop.f32.mrf.mxu0
      %4660 = vmatprep.mubr.f32.mxu0 0.0
      %4661 = vmatmul.mubr.f32.gmra.mxu0 %v277
      %v4662 = vpop.f32.mrf.mxu0
      %v4663 = vadd.f32 0.0, %v4662
      %v4664 = vpop.f32.mrf.mxu0
      %4665 = vdwg.mxu0
      %4666 = vmatprep.subr.mxu0 0.0
      %4667 = vmatpush1.msra.mxu0 0.0
      %4668 = vmatprep.subr.mxu0 0.0
      %4669 = vmatpush1.msra.mxu0 0.0
      %4670 = vmatprep.subr.mxu0 0.0
      %4671 = vmatpush1.msra.mxu0 0.0
      %4672 = vmatprep.subr.mxu0 0.0
      %4673 = vmatpush1.msra.mxu0 0.0
      %4674 = vmatprep.subr.mxu0 0.0
      %4675 = vmatpush1.msra.mxu0 0.0
      %4676 = vmatprep.subr.mxu0 0.0
      %4677 = vmatpush1.msra.mxu0 0.0
      %4678 = vmatprep.subr.mxu0 0.0
      %4679 = vmatpush1.msra.mxu0 0.0
      %4680 = vmatprep.subr.mxu0 0.0
      %4681 = vmatpush1.msra.mxu0 0.0
      %4682 = vmatprep.subr.mxu0 0.0
      %4683 = vmatpush1.msra.mxu0 0.0
      %4684 = vmatprep.subr.mxu0 0.0
      %4685 = vmatpush1.msra.mxu0 0.0
      %4686 = vmatprep.subr.mxu0 0.0
      %4687 = vmatpush1.msra.mxu0 0.0
      %4688 = vmatprep.subr.mxu0 0.0
      %4689 = vmatpush1.msra.mxu0 0.0
      %4690 = vmatprep.subr.mxu0 0.0
      %4691 = vmatpush1.msra.mxu0 0.0
      %4692 = vmatprep.subr.mxu0 0.0
      %4693 = vmatpush1.msra.mxu0 0.0
      %4694 = vmatprep.subr.mxu0 0.0
      %4695 = vmatpush1.msra.mxu0 %v3993
      %4696 = vmatprep.subr.mxu0 0.0
      %4697 = vmatpush1.msra.mxu0 %v3988
      %4698 = vmatprep.subr.mxu0 0.0
      %4699 = vmatpush2.msra.mxu0 0.0
      %4700 = vmatprep.subr.mxu0 0.0
      %4701 = vmatpush2.msra.mxu0 0.0
      %4702 = vmatprep.subr.mxu0 0.0
      %4703 = vmatpush2.msra.mxu0 0.0
      %4704 = vmatprep.subr.mxu0 0.0
      %4705 = vmatpush2.msra.mxu0 0.0
      %4706 = vmatprep.subr.mxu0 0.0
      %4707 = vmatpush2.msra.mxu0 0.0
      %4708 = vmatprep.subr.mxu0 0.0
      %4709 = vmatpush2.msra.mxu0 0.0
      %4710 = vmatprep.subr.mxu0 0.0
      %4711 = vmatpush2.msra.mxu0 0.0
      %4712 = vmatprep.subr.mxu0 0.0
      %4713 = vmatpush2.msra.mxu0 0.0
      %4714 = vmatprep.subr.mxu0 0.0
      %4715 = vmatpush2.msra.mxu0 0.0
      %4716 = vmatprep.subr.mxu0 0.0
      %4717 = vmatpush2.msra.mxu0 0.0
      %4718 = vmatprep.subr.mxu0 0.0
      %4719 = vmatpush2.msra.mxu0 0.0
      %4720 = vmatprep.subr.mxu0 0.0
      %4721 = vmatpush2.msra.mxu0 0.0
      %4722 = vmatprep.subr.mxu0 0.0
      %4723 = vmatpush2.msra.mxu0 0.0
      %4724 = vmatprep.subr.mxu0 0.0
      %4725 = vmatpush2.msra.mxu0 0.0
      %4726 = vmatprep.subr.mxu0 0.0
      %4727 = vmatpush2.msra.mxu0 0.0
      %4728 = vmatprep.subr.mxu0 0.0
      %4729 = vmatpush2.msra.mxu0 0.0
      %4730 = vmatprep.mubr.f32.mxu0 0.0
      %4731 = vmatmul.mubr.f32.gmra.mxu0 %v274
      %v4732 = vpop.f32.mrf.mxu0
      %v4733 = vadd.f32 0.0, %v4732
      %v4734 = vpop.f32.mrf.mxu0
      %4735 = vmatprep.mubr.f32.mxu0 0.0
      %4736 = vmatmul.mubr.f32.gmra.mxu0 %v277
      %v4737 = vpop.f32.mrf.mxu0
      %v4738 = vadd.f32 0.0, %v4737
      %v4739 = vpop.f32.mrf.mxu0
      %4740 = vdwg.mxu0
      %4741 = vmatprep.subr.mxu0 0.0
      %4742 = vmatpush1.msra.mxu0 0.0
      %4743 = vmatprep.subr.mxu0 0.0
      %4744 = vmatpush1.msra.mxu0 0.0
      %4745 = vmatprep.subr.mxu0 0.0
      %4746 = vmatpush1.msra.mxu0 0.0
      %4747 = vmatprep.subr.mxu0 0.0
      %4748 = vmatpush1.msra.mxu0 0.0
      %4749 = vmatprep.subr.mxu0 0.0
      %4750 = vmatpush1.msra.mxu0 0.0
      %4751 = vmatprep.subr.mxu0 0.0
      %4752 = vmatpush1.msra.mxu0 0.0
      %4753 = vmatprep.subr.mxu0 0.0
      %4754 = vmatpush1.msra.mxu0 0.0
      %4755 = vmatprep.subr.mxu0 0.0
      %4756 = vmatpush1.msra.mxu0 0.0
      %4757 = vmatprep.subr.mxu0 0.0
      %4758 = vmatpush1.msra.mxu0 0.0
      %4759 = vmatprep.subr.mxu0 0.0
      %4760 = vmatpush1.msra.mxu0 0.0
      %4761 = vmatprep.subr.mxu0 0.0
      %4762 = vmatpush1.msra.mxu0 0.0
      %4763 = vmatprep.subr.mxu0 0.0
      %4764 = vmatpush1.msra.mxu0 0.0
      %4765 = vmatprep.subr.mxu0 0.0
      %4766 = vmatpush1.msra.mxu0 0.0
      %4767 = vmatprep.subr.mxu0 0.0
      %4768 = vmatpush1.msra.mxu0 0.0
      %4769 = vmatprep.subr.mxu0 0.0
      %4770 = vmatpush1.msra.mxu0 %v4003
      %4771 = vmatprep.subr.mxu0 0.0
      %4772 = vmatpush1.msra.mxu0 %v3998
      %4773 = vmatprep.subr.mxu0 0.0
      %4774 = vmatpush2.msra.mxu0 0.0
      %4775 = vmatprep.subr.mxu0 0.0
      %4776 = vmatpush2.msra.mxu0 0.0
      %4777 = vmatprep.subr.mxu0 0.0
      %4778 = vmatpush2.msra.mxu0 0.0
      %4779 = vmatprep.subr.mxu0 0.0
      %4780 = vmatpush2.msra.mxu0 0.0
      %4781 = vmatprep.subr.mxu0 0.0
      %4782 = vmatpush2.msra.mxu0 0.0
      %4783 = vmatprep.subr.mxu0 0.0
      %4784 = vmatpush2.msra.mxu0 0.0
      %4785 = vmatprep.subr.mxu0 0.0
      %4786 = vmatpush2.msra.mxu0 0.0
      %4787 = vmatprep.subr.mxu0 0.0
      %4788 = vmatpush2.msra.mxu0 0.0
      %4789 = vmatprep.subr.mxu0 0.0
      %4790 = vmatpush2.msra.mxu0 0.0
      %4791 = vmatprep.subr.mxu0 0.0
      %4792 = vmatpush2.msra.mxu0 0.0
      %4793 = vmatprep.subr.mxu0 0.0
      %4794 = vmatpush2.msra.mxu0 0.0
      %4795 = vmatprep.subr.mxu0 0.0
      %4796 = vmatpush2.msra.mxu0 0.0
      %4797 = vmatprep.subr.mxu0 0.0
      %4798 = vmatpush2.msra.mxu0 0.0
      %4799 = vmatprep.subr.mxu0 0.0
      %4800 = vmatpush2.msra.mxu0 0.0
      %4801 = vmatprep.subr.mxu0 0.0
      %4802 = vmatpush2.msra.mxu0 0.0
      %4803 = vmatprep.subr.mxu0 0.0
      %4804 = vmatpush2.msra.mxu0 0.0
      %4805 = vmatprep.mubr.f32.mxu0 0.0
      %4806 = vmatmul.mubr.f32.gmra.mxu0 %v274
      %v4807 = vpop.f32.mrf.mxu0
      %v4808 = vadd.f32 0.0, %v4807
      %v4809 = vpop.f32.mrf.mxu0
      %4810 = vmatprep.mubr.f32.mxu0 0.0
      %4811 = vmatmul.mubr.f32.gmra.mxu0 %v277
      %v4812 = vpop.f32.mrf.mxu0
      %v4813 = vadd.f32 0.0, %v4812
      %v4814 = vpop.f32.mrf.mxu0
      %4815 = vdwg.mxu0
      %4816 = vmatprep.subr.mxu0 0.0
      %4817 = vmatpush1.msra.mxu0 0.0
      %4818 = vmatprep.subr.mxu0 0.0
      %4819 = vmatpush1.msra.mxu0 0.0
      %4820 = vmatprep.subr.mxu0 0.0
      %4821 = vmatpush1.msra.mxu0 0.0
      %4822 = vmatprep.subr.mxu0 0.0
      %4823 = vmatpush1.msra.mxu0 0.0
      %4824 = vmatprep.subr.mxu0 0.0
      %4825 = vmatpush1.msra.mxu0 0.0
      %4826 = vmatprep.subr.mxu0 0.0
      %4827 = vmatpush1.msra.mxu0 0.0
      %4828 = vmatprep.subr.mxu0 0.0
      %4829 = vmatpush1.msra.mxu0 0.0
      %4830 = vmatprep.subr.mxu0 0.0
      %4831 = vmatpush1.msra.mxu0 0.0
      %4832 = vmatprep.subr.mxu0 0.0
      %4833 = vmatpush1.msra.mxu0 0.0
      %4834 = vmatprep.subr.mxu0 0.0
      %4835 = vmatpush1.msra.mxu0 0.0
      %4836 = vmatprep.subr.mxu0 0.0
      %4837 = vmatpush1.msra.mxu0 0.0
      %4838 = vmatprep.subr.mxu0 0.0
      %4839 = vmatpush1.msra.mxu0 0.0
      %4840 = vmatprep.subr.mxu0 0.0
      %4841 = vmatpush1.msra.mxu0 0.0
      %4842 = vmatprep.subr.mxu0 0.0
      %4843 = vmatpush1.msra.mxu0 0.0
      %4844 = vmatprep.subr.mxu0 0.0
      %4845 = vmatpush1.msra.mxu0 %v4013
      %4846 = vmatprep.subr.mxu0 0.0
      %4847 = vmatpush1.msra.mxu0 %v4008
      %4848 = vmatprep.subr.mxu0 0.0
      %4849 = vmatpush2.msra.mxu0 0.0
      %4850 = vmatprep.subr.mxu0 0.0
      %4851 = vmatpush2.msra.mxu0 0.0
      %4852 = vmatprep.subr.mxu0 0.0
      %4853 = vmatpush2.msra.mxu0 0.0
      %4854 = vmatprep.subr.mxu0 0.0
      %4855 = vmatpush2.msra.mxu0 0.0
      %4856 = vmatprep.subr.mxu0 0.0
      %4857 = vmatpush2.msra.mxu0 0.0
      %4858 = vmatprep.subr.mxu0 0.0
      %4859 = vmatpush2.msra.mxu0 0.0
      %4860 = vmatprep.subr.mxu0 0.0
      %4861 = vmatpush2.msra.mxu0 0.0
      %4862 = vmatprep.subr.mxu0 0.0
      %4863 = vmatpush2.msra.mxu0 0.0
      %4864 = vmatprep.subr.mxu0 0.0
      %4865 = vmatpush2.msra.mxu0 0.0
      %4866 = vmatprep.subr.mxu0 0.0
      %4867 = vmatpush2.msra.mxu0 0.0
      %4868 = vmatprep.subr.mxu0 0.0
      %4869 = vmatpush2.msra.mxu0 0.0
      %4870 = vmatprep.subr.mxu0 0.0
      %4871 = vmatpush2.msra.mxu0 0.0
      %4872 = vmatprep.subr.mxu0 0.0
      %4873 = vmatpush2.msra.mxu0 0.0
      %4874 = vmatprep.subr.mxu0 0.0
      %4875 = vmatpush2.msra.mxu0 0.0
      %4876 = vmatprep.subr.mxu0 0.0
      %4877 = vmatpush2.msra.mxu0 0.0
      %4878 = vmatprep.subr.mxu0 0.0
      %4879 = vmatpush2.msra.mxu0 0.0
      %4880 = vmatprep.mubr.f32.mxu0 0.0
      %4881 = vmatmul.mubr.f32.gmra.mxu0 %v274
      %v4882 = vpop.f32.mrf.mxu0
      %v4883 = vadd.f32 0.0, %v4882
      %v4884 = vpop.f32.mrf.mxu0
      %4885 = vmatprep.mubr.f32.mxu0 0.0
      %4886 = vmatmul.mubr.f32.gmra.mxu0 %v277
      %v4887 = vpop.f32.mrf.mxu0
      %v4888 = vadd.f32 0.0, %v4887
      %v4889 = vpop.f32.mrf.mxu0
      %4890 = vdwg.mxu0
      %4891 = vmatprep.subr.mxu0 0.0
      %4892 = vmatpush1.msra.mxu0 0.0
      %4893 = vmatprep.subr.mxu0 0.0
      %4894 = vmatpush1.msra.mxu0 0.0
      %4895 = vmatprep.subr.mxu0 0.0
      %4896 = vmatpush1.msra.mxu0 0.0
      %4897 = vmatprep.subr.mxu0 0.0
      %4898 = vmatpush1.msra.mxu0 0.0
      %4899 = vmatprep.subr.mxu0 0.0
      %4900 = vmatpush1.msra.mxu0 0.0
      %4901 = vmatprep.subr.mxu0 0.0
      %4902 = vmatpush1.msra.mxu0 0.0
      %4903 = vmatprep.subr.mxu0 0.0
      %4904 = vmatpush1.msra.mxu0 0.0
      %4905 = vmatprep.subr.mxu0 0.0
      %4906 = vmatpush1.msra.mxu0 0.0
      %4907 = vmatprep.subr.mxu0 0.0
      %4908 = vmatpush1.msra.mxu0 0.0
      %4909 = vmatprep.subr.mxu0 0.0
      %4910 = vmatpush1.msra.mxu0 0.0
      %4911 = vmatprep.subr.mxu0 0.0
      %4912 = vmatpush1.msra.mxu0 0.0
      %4913 = vmatprep.subr.mxu0 0.0
      %4914 = vmatpush1.msra.mxu0 0.0
      %4915 = vmatprep.subr.mxu0 0.0
      %4916 = vmatpush1.msra.mxu0 0.0
      %4917 = vmatprep.subr.mxu0 0.0
      %4918 = vmatpush1.msra.mxu0 0.0
      %4919 = vmatprep.subr.mxu0 0.0
      %4920 = vmatpush1.msra.mxu0 %v4023
      %4921 = vmatprep.subr.mxu0 0.0
      %4922 = vmatpush1.msra.mxu0 %v4018
      %4923 = vmatprep.subr.mxu0 0.0
      %4924 = vmatpush2.msra.mxu0 0.0
      %4925 = vmatprep.subr.mxu0 0.0
      %4926 = vmatpush2.msra.mxu0 0.0
      %4927 = vmatprep.subr.mxu0 0.0
      %4928 = vmatpush2.msra.mxu0 0.0
      %4929 = vmatprep.subr.mxu0 0.0
      %4930 = vmatpush2.msra.mxu0 0.0
      %4931 = vmatprep.subr.mxu0 0.0
      %4932 = vmatpush2.msra.mxu0 0.0
      %4933 = vmatprep.subr.mxu0 0.0
      %4934 = vmatpush2.msra.mxu0 0.0
      %4935 = vmatprep.subr.mxu0 0.0
      %4936 = vmatpush2.msra.mxu0 0.0
      %4937 = vmatprep.subr.mxu0 0.0
      %4938 = vmatpush2.msra.mxu0 0.0
      %4939 = vmatprep.subr.mxu0 0.0
      %4940 = vmatpush2.msra.mxu0 0.0
      %4941 = vmatprep.subr.mxu0 0.0
      %4942 = vmatpush2.msra.mxu0 0.0
      %4943 = vmatprep.subr.mxu0 0.0
      %4944 = vmatpush2.msra.mxu0 0.0
      %4945 = vmatprep.subr.mxu0 0.0
      %4946 = vmatpush2.msra.mxu0 0.0
      %4947 = vmatprep.subr.mxu0 0.0
      %4948 = vmatpush2.msra.mxu0 0.0
      %4949 = vmatprep.subr.mxu0 0.0
      %4950 = vmatpush2.msra.mxu0 0.0
      %4951 = vmatprep.subr.mxu0 0.0
      %4952 = vmatpush2.msra.mxu0 0.0
      %4953 = vmatprep.subr.mxu0 0.0
      %4954 = vmatpush2.msra.mxu0 0.0
      %4955 = vmatprep.mubr.f32.mxu0 0.0
      %4956 = vmatmul.mubr.f32.gmra.mxu0 %v274
      %v4957 = vpop.f32.mrf.mxu0
      %v4958 = vadd.f32 0.0, %v4957
      %v4959 = vpop.f32.mrf.mxu0
      %4960 = vmatprep.mubr.f32.mxu0 0.0
      %4961 = vmatmul.mubr.f32.gmra.mxu0 %v277
      %v4962 = vpop.f32.mrf.mxu0
      %v4963 = vadd.f32 0.0, %v4962
      %v4964 = vpop.f32.mrf.mxu0
      %4965 = vdwg.mxu0
      %4966 = vmatprep.subr.mxu0 0.0
      %4967 = vmatpush1.msra.mxu0 0.0
      %4968 = vmatprep.subr.mxu0 0.0
      %4969 = vmatpush1.msra.mxu0 0.0
      %4970 = vmatprep.subr.mxu0 0.0
      %4971 = vmatpush1.msra.mxu0 0.0
      %4972 = vmatprep.subr.mxu0 0.0
      %4973 = vmatpush1.msra.mxu0 0.0
      %4974 = vmatprep.subr.mxu0 0.0
      %4975 = vmatpush1.msra.mxu0 0.0
      %4976 = vmatprep.subr.mxu0 0.0
      %4977 = vmatpush1.msra.mxu0 0.0
      %4978 = vmatprep.subr.mxu0 0.0
      %4979 = vmatpush1.msra.mxu0 0.0
      %4980 = vmatprep.subr.mxu0 0.0
      %4981 = vmatpush1.msra.mxu0 0.0
      %4982 = vmatprep.subr.mxu0 0.0
      %4983 = vmatpush1.msra.mxu0 0.0
      %4984 = vmatprep.subr.mxu0 0.0
      %4985 = vmatpush1.msra.mxu0 0.0
      %4986 = vmatprep.subr.mxu0 0.0
      %4987 = vmatpush1.msra.mxu0 0.0
      %4988 = vmatprep.subr.mxu0 0.0
      %4989 = vmatpush1.msra.mxu0 0.0
      %4990 = vmatprep.subr.mxu0 0.0
      %4991 = vmatpush1.msra.mxu0 0.0
      %4992 = vmatprep.subr.mxu0 0.0
      %4993 = vmatpush1.msra.mxu0 0.0
      %4994 = vmatprep.subr.mxu0 0.0
      %4995 = vmatpush1.msra.mxu0 %v4033
      %4996 = vmatprep.subr.mxu0 0.0
      %4997 = vmatpush1.msra.mxu0 %v4028
      %4998 = vmatprep.subr.mxu0 0.0
      %4999 = vmatpush2.msra.mxu0 0.0
      %5000 = vmatprep.subr.mxu0 0.0
      %5001 = vmatpush2.msra.mxu0 0.0
      %5002 = vmatprep.subr.mxu0 0.0
      %5003 = vmatpush2.msra.mxu0 0.0
      %5004 = vmatprep.subr.mxu0 0.0
      %5005 = vmatpush2.msra.mxu0 0.0
      %5006 = vmatprep.subr.mxu0 0.0
      %5007 = vmatpush2.msra.mxu0 0.0
      %5008 = vmatprep.subr.mxu0 0.0
      %5009 = vmatpush2.msra.mxu0 0.0
      %5010 = vmatprep.subr.mxu0 0.0
      %5011 = vmatpush2.msra.mxu0 0.0
      %5012 = vmatprep.subr.mxu0 0.0
      %5013 = vmatpush2.msra.mxu0 0.0
      %5014 = vmatprep.subr.mxu0 0.0
      %5015 = vmatpush2.msra.mxu0 0.0
      %5016 = vmatprep.subr.mxu0 0.0
      %5017 = vmatpush2.msra.mxu0 0.0
      %5018 = vmatprep.subr.mxu0 0.0
      %5019 = vmatpush2.msra.mxu0 0.0
      %5020 = vmatprep.subr.mxu0 0.0
      %5021 = vmatpush2.msra.mxu0 0.0
      %5022 = vmatprep.subr.mxu0 0.0
      %5023 = vmatpush2.msra.mxu0 0.0
      %5024 = vmatprep.subr.mxu0 0.0
      %5025 = vmatpush2.msra.mxu0 0.0
      %5026 = vmatprep.subr.mxu0 0.0
      %5027 = vmatpush2.msra.mxu0 0.0
      %5028 = vmatprep.subr.mxu0 0.0
      %5029 = vmatpush2.msra.mxu0 0.0
      %5030 = vmatprep.mubr.f32.mxu0 0.0
      %5031 = vmatmul.mubr.f32.gmra.mxu0 %v274
      %v5032 = vpop.f32.mrf.mxu0
      %v5033 = vadd.f32 0.0, %v5032
      %v5034 = vpop.f32.mrf.mxu0
      %5035 = vmatprep.mubr.f32.mxu0 0.0
      %5036 = vmatmul.mubr.f32.gmra.mxu0 %v277
      %v5037 = vpop.f32.mrf.mxu0
      %v5038 = vadd.f32 0.0, %v5037
      %v5039 = vpop.f32.mrf.mxu0
      %5040 = vdwg.mxu0
      %5041 = vmatprep.subr.mxu0 0.0
      %5042 = vmatpush1.msra.mxu0 0.0
      %5043 = vmatprep.subr.mxu0 0.0
      %5044 = vmatpush1.msra.mxu0 0.0
      %5045 = vmatprep.subr.mxu0 0.0
      %5046 = vmatpush1.msra.mxu0 0.0
      %5047 = vmatprep.subr.mxu0 0.0
      %5048 = vmatpush1.msra.mxu0 0.0
      %5049 = vmatprep.subr.mxu0 0.0
      %5050 = vmatpush1.msra.mxu0 0.0
      %5051 = vmatprep.subr.mxu0 0.0
      %5052 = vmatpush1.msra.mxu0 0.0
      %5053 = vmatprep.subr.mxu0 0.0
      %5054 = vmatpush1.msra.mxu0 0.0
      %5055 = vmatprep.subr.mxu0 0.0
      %5056 = vmatpush1.msra.mxu0 0.0
      %5057 = vmatprep.subr.mxu0 0.0
      %5058 = vmatpush1.msra.mxu0 0.0
      %5059 = vmatprep.subr.mxu0 0.0
      %5060 = vmatpush1.msra.mxu0 0.0
      %5061 = vmatprep.subr.mxu0 0.0
      %5062 = vmatpush1.msra.mxu0 0.0
      %5063 = vmatprep.subr.mxu0 0.0
      %5064 = vmatpush1.msra.mxu0 0.0
      %5065 = vmatprep.subr.mxu0 0.0
      %5066 = vmatpush1.msra.mxu0 0.0
      %5067 = vmatprep.subr.mxu0 0.0
      %5068 = vmatpush1.msra.mxu0 0.0
      %5069 = vmatprep.subr.mxu0 0.0
      %5070 = vmatpush1.msra.mxu0 %v4043
      %5071 = vmatprep.subr.mxu0 0.0
      %5072 = vmatpush1.msra.mxu0 %v4038
      %5073 = vmatprep.subr.mxu0 0.0
      %5074 = vmatpush2.msra.mxu0 0.0
      %5075 = vmatprep.subr.mxu0 0.0
      %5076 = vmatpush2.msra.mxu0 0.0
      %5077 = vmatprep.subr.mxu0 0.0
      %5078 = vmatpush2.msra.mxu0 0.0
      %5079 = vmatprep.subr.mxu0 0.0
      %5080 = vmatpush2.msra.mxu0 0.0
      %5081 = vmatprep.subr.mxu0 0.0
      %5082 = vmatpush2.msra.mxu0 0.0
      %5083 = vmatprep.subr.mxu0 0.0
      %5084 = vmatpush2.msra.mxu0 0.0
      %5085 = vmatprep.subr.mxu0 0.0
      %5086 = vmatpush2.msra.mxu0 0.0
      %5087 = vmatprep.subr.mxu0 0.0
      %5088 = vmatpush2.msra.mxu0 0.0
      %5089 = vmatprep.subr.mxu0 0.0
      %5090 = vmatpush2.msra.mxu0 0.0
      %5091 = vmatprep.subr.mxu0 0.0
      %5092 = vmatpush2.msra.mxu0 0.0
      %5093 = vmatprep.subr.mxu0 0.0
      %5094 = vmatpush2.msra.mxu0 0.0
      %5095 = vmatprep.subr.mxu0 0.0
      %5096 = vmatpush2.msra.mxu0 0.0
      %5097 = vmatprep.subr.mxu0 0.0
      %5098 = vmatpush2.msra.mxu0 0.0
      %5099 = vmatprep.subr.mxu0 0.0
      %5100 = vmatpush2.msra.mxu0 0.0
      %5101 = vmatprep.subr.mxu0 0.0
      %5102 = vmatpush2.msra.mxu0 0.0
      %5103 = vmatprep.subr.mxu0 0.0
      %5104 = vmatpush2.msra.mxu0 0.0
      %5105 = vmatprep.mubr.f32.mxu0 0.0
      %5106 = vmatmul.mubr.f32.gmra.mxu0 %v274
      %v5107 = vpop.f32.mrf.mxu0
      %v5108 = vadd.f32 0.0, %v5107
      %v5109 = vpop.f32.mrf.mxu0
      %5110 = vmatprep.mubr.f32.mxu0 0.0
      %5111 = vmatmul.mubr.f32.gmra.mxu0 %v277
      %v5112 = vpop.f32.mrf.mxu0
      %v5113 = vadd.f32 0.0, %v5112
      %v5114 = vpop.f32.mrf.mxu0
      %5115 = vdwg.mxu0
      %5116 = vmatprep.subr.mxu0 0.0
      %5117 = vmatpush1.msra.mxu0 0.0
      %5118 = vmatprep.subr.mxu0 0.0
      %5119 = vmatpush1.msra.mxu0 0.0
      %5120 = vmatprep.subr.mxu0 0.0
      %5121 = vmatpush1.msra.mxu0 0.0
      %5122 = vmatprep.subr.mxu0 0.0
      %5123 = vmatpush1.msra.mxu0 0.0
      %5124 = vmatprep.subr.mxu0 0.0
      %5125 = vmatpush1.msra.mxu0 0.0
      %5126 = vmatprep.subr.mxu0 0.0
      %5127 = vmatpush1.msra.mxu0 0.0
      %5128 = vmatprep.subr.mxu0 0.0
      %5129 = vmatpush1.msra.mxu0 0.0
      %5130 = vmatprep.subr.mxu0 0.0
      %5131 = vmatpush1.msra.mxu0 0.0
      %5132 = vmatprep.subr.mxu0 0.0
      %5133 = vmatpush1.msra.mxu0 0.0
      %5134 = vmatprep.subr.mxu0 0.0
      %5135 = vmatpush1.msra.mxu0 0.0
      %5136 = vmatprep.subr.mxu0 0.0
      %5137 = vmatpush1.msra.mxu0 0.0
      %5138 = vmatprep.subr.mxu0 0.0
      %5139 = vmatpush1.msra.mxu0 0.0
      %5140 = vmatprep.subr.mxu0 0.0
      %5141 = vmatpush1.msra.mxu0 0.0
      %5142 = vmatprep.subr.mxu0 0.0
      %5143 = vmatpush1.msra.mxu0 0.0
      %5144 = vmatprep.subr.mxu0 0.0
      %5145 = vmatpush1.msra.mxu0 %v4053
      %5146 = vmatprep.subr.mxu0 0.0
      %5147 = vmatpush1.msra.mxu0 %v4048
      %5148 = vmatprep.subr.mxu0 0.0
      %5149 = vmatpush2.msra.mxu0 0.0
      %5150 = vmatprep.subr.mxu0 0.0
      %5151 = vmatpush2.msra.mxu0 0.0
      %5152 = vmatprep.subr.mxu0 0.0
      %5153 = vmatpush2.msra.mxu0 0.0
      %5154 = vmatprep.subr.mxu0 0.0
      %5155 = vmatpush2.msra.mxu0 0.0
      %5156 = vmatprep.subr.mxu0 0.0
      %5157 = vmatpush2.msra.mxu0 0.0
      %5158 = vmatprep.subr.mxu0 0.0
      %5159 = vmatpush2.msra.mxu0 0.0
      %5160 = vmatprep.subr.mxu0 0.0
      %5161 = vmatpush2.msra.mxu0 0.0
      %5162 = vmatprep.subr.mxu0 0.0
      %5163 = vmatpush2.msra.mxu0 0.0
      %5164 = vmatprep.subr.mxu0 0.0
      %5165 = vmatpush2.msra.mxu0 0.0
      %5166 = vmatprep.subr.mxu0 0.0
      %5167 = vmatpush2.msra.mxu0 0.0
      %5168 = vmatprep.subr.mxu0 0.0
      %5169 = vmatpush2.msra.mxu0 0.0
      %5170 = vmatprep.subr.mxu0 0.0
      %5171 = vmatpush2.msra.mxu0 0.0
      %5172 = vmatprep.subr.mxu0 0.0
      %5173 = vmatpush2.msra.mxu0 0.0
      %5174 = vmatprep.subr.mxu0 0.0
      %5175 = vmatpush2.msra.mxu0 0.0
      %5176 = vmatprep.subr.mxu0 0.0
      %5177 = vmatpush2.msra.mxu0 0.0
      %5178 = vmatprep.subr.mxu0 0.0
      %5179 = vmatpush2.msra.mxu0 0.0
      %5180 = vmatprep.mubr.f32.mxu0 0.0
      %5181 = vmatmul.mubr.f32.gmra.mxu0 %v274
      %v5182 = vpop.f32.mrf.mxu0
      %v5183 = vadd.f32 0.0, %v5182
      %v5184 = vpop.f32.mrf.mxu0
      %5185 = vmatprep.mubr.f32.mxu0 0.0
      %5186 = vmatmul.mubr.f32.gmra.mxu0 %v277
      %v5187 = vpop.f32.mrf.mxu0
      %v5188 = vadd.f32 0.0, %v5187
      %v5189 = vpop.f32.mrf.mxu0
      %5190 = vdwg.mxu0
      %5191 = vmatprep.subr.mxu0 0.0
      %5192 = vmatpush1.msra.mxu0 0.0
      %5193 = vmatprep.subr.mxu0 0.0
      %5194 = vmatpush1.msra.mxu0 0.0
      %5195 = vmatprep.subr.mxu0 0.0
      %5196 = vmatpush1.msra.mxu0 0.0
      %5197 = vmatprep.subr.mxu0 0.0
      %5198 = vmatpush1.msra.mxu0 0.0
      %5199 = vmatprep.subr.mxu0 0.0
      %5200 = vmatpush1.msra.mxu0 0.0
      %5201 = vmatprep.subr.mxu0 0.0
      %5202 = vmatpush1.msra.mxu0 0.0
      %5203 = vmatprep.subr.mxu0 0.0
      %5204 = vmatpush1.msra.mxu0 0.0
      %5205 = vmatprep.subr.mxu0 0.0
      %5206 = vmatpush1.msra.mxu0 0.0
      %5207 = vmatprep.subr.mxu0 0.0
      %5208 = vmatpush1.msra.mxu0 0.0
      %5209 = vmatprep.subr.mxu0 0.0
      %5210 = vmatpush1.msra.mxu0 0.0
      %5211 = vmatprep.subr.mxu0 0.0
      %5212 = vmatpush1.msra.mxu0 0.0
      %5213 = vmatprep.subr.mxu0 0.0
      %5214 = vmatpush1.msra.mxu0 0.0
      %5215 = vmatprep.subr.mxu0 0.0
      %5216 = vmatpush1.msra.mxu0 0.0
      %5217 = vmatprep.subr.mxu0 0.0
      %5218 = vmatpush1.msra.mxu0 0.0
      %5219 = vmatprep.subr.mxu0 0.0
      %5220 = vmatpush1.msra.mxu0 %v4063
      %5221 = vmatprep.subr.mxu0 0.0
      %5222 = vmatpush1.msra.mxu0 %v4058
      %5223 = vmatprep.subr.mxu0 0.0
      %5224 = vmatpush2.msra.mxu0 0.0
      %5225 = vmatprep.subr.mxu0 0.0
      %5226 = vmatpush2.msra.mxu0 0.0
      %5227 = vmatprep.subr.mxu0 0.0
      %5228 = vmatpush2.msra.mxu0 0.0
      %5229 = vmatprep.subr.mxu0 0.0
      %5230 = vmatpush2.msra.mxu0 0.0
      %5231 = vmatprep.subr.mxu0 0.0
      %5232 = vmatpush2.msra.mxu0 0.0
      %5233 = vmatprep.subr.mxu0 0.0
      %5234 = vmatpush2.msra.mxu0 0.0
      %5235 = vmatprep.subr.mxu0 0.0
      %5236 = vmatpush2.msra.mxu0 0.0
      %5237 = vmatprep.subr.mxu0 0.0
      %5238 = vmatpush2.msra.mxu0 0.0
      %5239 = vmatprep.subr.mxu0 0.0
      %5240 = vmatpush2.msra.mxu0 0.0
      %5241 = vmatprep.subr.mxu0 0.0
      %5242 = vmatpush2.msra.mxu0 0.0
      %5243 = vmatprep.subr.mxu0 0.0
      %5244 = vmatpush2.msra.mxu0 0.0
      %5245 = vmatprep.subr.mxu0 0.0
      %5246 = vmatpush2.msra.mxu0 0.0
      %5247 = vmatprep.subr.mxu0 0.0
      %5248 = vmatpush2.msra.mxu0 0.0
      %5249 = vmatprep.subr.mxu0 0.0
      %5250 = vmatpush2.msra.mxu0 0.0
      %5251 = vmatprep.subr.mxu0 0.0
      %5252 = vmatpush2.msra.mxu0 0.0
      %5253 = vmatprep.subr.mxu0 0.0
      %5254 = vmatpush2.msra.mxu0 0.0
      %5255 = vmatprep.mubr.f32.mxu0 0.0
      %5256 = vmatmul.mubr.f32.gmra.mxu0 %v274
      %v5257 = vpop.f32.mrf.mxu0
      %v5258 = vadd.f32 0.0, %v5257
      %v5259 = vpop.f32.mrf.mxu0
      %5260 = vmatprep.mubr.f32.mxu0 0.0
      %5261 = vmatmul.mubr.f32.gmra.mxu0 %v277
      %v5262 = vpop.f32.mrf.mxu0
      %v5263 = vadd.f32 0.0, %v5262
      %v5264 = vpop.f32.mrf.mxu0
      %5265 = vdwg.mxu0
      %v5266 = vld [vmem:[%s3 + $0x88] sm:$0xff]
      %v5267 = vld [vmem:[%s3 + $0x90] sm:$0xff]
      %v5268 = vld [vmem:[%s3 + $0x98] sm:$0xff]
      %v5269 = vld [vmem:[%s3 + $0xa0] sm:$0xff]
      %v5270 = vld [vmem:[%s3 + $0xa8] sm:$0x1]
      %v5271 = vlaneseq
      %v5272 = vshrl.u32 %v5271, 7
      %v5273 = vsub.s32 0, %v5272
      %v5274 = vrot.slane %v5270, %v5273
      %v5276 = vsel %vm1852, %v4133, 0
      %v5279 = vsel %vm1852, %v4138, 0
      %v5282 = vsel %vm1852, %v4208, 0
      %v5285 = vsel %vm1852, %v4213, 0
      %v5288 = vsel %vm1852, %v4283, 0
      %v5291 = vsel %vm1852, %v4288, 0
      %v5294 = vsel %vm1852, %v4358, 0
      %v5297 = vsel %vm1852, %v4363, 0
      %v5300 = vsel %vm1852, %v4433, 0
      %v5303 = vsel %vm1852, %v4438, 0
      %v5306 = vsel %vm1852, %v4508, 0
      %v5309 = vsel %vm1852, %v4513, 0
      %v5312 = vsel %vm1852, %v4583, 0
      %v5315 = vsel %vm1852, %v4588, 0
      %v5318 = vsel %vm1852, %v4658, 0
      %v5321 = vsel %vm1852, %v4663, 0
      %v5324 = vsel %vm1852, %v4733, 0
      %v5327 = vsel %vm1852, %v4738, 0
      %v5330 = vsel %vm1852, %v4808, 0
      %v5333 = vsel %vm1852, %v4813, 0
      %v5336 = vsel %vm1852, %v4883, 0
      %v5339 = vsel %vm1852, %v4888, 0
      %v5342 = vsel %vm1852, %v4958, 0
      %v5345 = vsel %vm1852, %v4963, 0
      %v5348 = vsel %vm1852, %v5033, 0
      %v5351 = vsel %vm1852, %v5038, 0
      %v5354 = vsel %vm1852, %v5108, 0
      %v5357 = vsel %vm1852, %v5113, 0
      %v5360 = vsel %vm1852, %v5183, 0
      %v5363 = vsel %vm1852, %v5188, 0
      %v5366 = vsel %vm1852, %v5258, 0
      %v5369 = vsel %vm1852, %v5263, 0
      %5371 = vmatprep.subr.mxu0 0.0
      %5372 = vmatpush1.msra.mxu0 0.0
      %5373 = vmatprep.subr.mxu0 0.0
      %5374 = vmatpush1.msra.mxu0 0.0
      %5375 = vmatprep.subr.mxu0 0.0
      %5376 = vmatpush1.msra.mxu0 0.0
      %5377 = vmatprep.subr.mxu0 0.0
      %5378 = vmatpush1.msra.mxu0 0.0
      %5379 = vmatprep.subr.mxu0 0.0
      %5380 = vmatpush1.msra.mxu0 0.0
      %5381 = vmatprep.subr.mxu0 0.0
      %5382 = vmatpush1.msra.mxu0 0.0
      %5383 = vmatprep.subr.mxu0 0.0
      %5384 = vmatpush1.msra.mxu0 0.0
      %5385 = vmatprep.subr.mxu0 0.0
      %5386 = vmatpush1.msra.mxu0 0.0
      %5387 = vmatprep.subr.mxu0 0.0
      %5388 = vmatpush1.msra.mxu0 0.0
      %5389 = vmatprep.subr.mxu0 0.0
      %5390 = vmatpush1.msra.mxu0 0.0
      %5391 = vmatprep.subr.mxu0 0.0
      %5392 = vmatpush1.msra.mxu0 0.0
      %5393 = vmatprep.subr.mxu0 0.0
      %5394 = vmatpush1.msra.mxu0 0.0
      %5395 = vmatprep.subr.mxu0 0.0
      %5396 = vmatpush1.msra.mxu0 %v5269
      %5397 = vmatprep.subr.mxu0 0.0
      %5398 = vmatpush1.msra.mxu0 %v5268
      %5399 = vmatprep.subr.mxu0 0.0
      %5400 = vmatpush1.msra.mxu0 %v5267
      %5401 = vmatprep.subr.mxu0 0.0
      %5402 = vmatpush1.msra.mxu0 %v5266
      %5403 = vmatprep.subr.mxu0 0.0
      %5404 = vmatpush2.msra.mxu0 0.0
      %5405 = vmatprep.subr.mxu0 0.0
      %5406 = vmatpush2.msra.mxu0 0.0
      %5407 = vmatprep.subr.mxu0 0.0
      %5408 = vmatpush2.msra.mxu0 0.0
      %5409 = vmatprep.subr.mxu0 0.0
      %5410 = vmatpush2.msra.mxu0 0.0
      %5411 = vmatprep.subr.mxu0 0.0
      %5412 = vmatpush2.msra.mxu0 0.0
      %5413 = vmatprep.subr.mxu0 0.0
      %5414 = vmatpush2.msra.mxu0 0.0
      %5415 = vmatprep.subr.mxu0 0.0
      %5416 = vmatpush2.msra.mxu0 0.0
      %5417 = vmatprep.subr.mxu0 0.0
      %5418 = vmatpush2.msra.mxu0 0.0
      %5419 = vmatprep.subr.mxu0 0.0
      %5420 = vmatpush2.msra.mxu0 0.0
      %5421 = vmatprep.subr.mxu0 0.0
      %5422 = vmatpush2.msra.mxu0 0.0
      %5423 = vmatprep.subr.mxu0 0.0
      %5424 = vmatpush2.msra.mxu0 0.0
      %5425 = vmatprep.subr.mxu0 0.0
      %5426 = vmatpush2.msra.mxu0 0.0
      %5427 = vmatprep.subr.mxu0 0.0
      %5428 = vmatpush2.msra.mxu0 0.0
      %5429 = vmatprep.subr.mxu0 0.0
      %5430 = vmatpush2.msra.mxu0 0.0
      %5431 = vmatprep.subr.mxu0 0.0
      %5432 = vmatpush2.msra.mxu0 0.0
      %5433 = vmatprep.subr.mxu0 0.0
      %5434 = vmatpush2.msra.mxu0 0.0
      %5435 = vmatprep.mubr.f32.mxu0 0.0
      %5436 = vmatmul.mubr.f32.gmra.mxu0 %v5276
      %v5437 = vpop.f32.mrf.mxu0
      %v5438 = vadd.f32 %v5274, %v5437
      %v5439 = vpop.f32.mrf.mxu0
      %5440 = vmatprep.mubr.f32.mxu0 0.0
      %5441 = vmatmul.mubr.f32.gmra.mxu0 %v5279
      %v5442 = vpop.f32.mrf.mxu0
      %v5443 = vadd.f32 %v5274, %v5442
      %v5444 = vpop.f32.mrf.mxu0
      %5445 = vmatprep.mubr.f32.mxu0 0.0
      %5446 = vmatmul.mubr.f32.gmra.mxu0 %v5282
      %v5447 = vpop.f32.mrf.mxu0
      %v5448 = vadd.f32 %v5274, %v5447
      %v5449 = vpop.f32.mrf.mxu0
      %5450 = vmatprep.mubr.f32.mxu0 0.0
      %5451 = vmatmul.mubr.f32.gmra.mxu0 %v5285
      %v5452 = vpop.f32.mrf.mxu0
      %v5453 = vadd.f32 %v5274, %v5452
      %v5454 = vpop.f32.mrf.mxu0
      %5455 = vmatprep.mubr.f32.mxu0 0.0
      %5456 = vmatmul.mubr.f32.gmra.mxu0 %v5288
      %v5457 = vpop.f32.mrf.mxu0
      %v5458 = vadd.f32 %v5274, %v5457
      %v5459 = vpop.f32.mrf.mxu0
      %5460 = vmatprep.mubr.f32.mxu0 0.0
      %5461 = vmatmul.mubr.f32.gmra.mxu0 %v5291
      %v5462 = vpop.f32.mrf.mxu0
      %v5463 = vadd.f32 %v5274, %v5462
      %v5464 = vpop.f32.mrf.mxu0
      %5465 = vmatprep.mubr.f32.mxu0 0.0
      %5466 = vmatmul.mubr.f32.gmra.mxu0 %v5294
      %v5467 = vpop.f32.mrf.mxu0
      %v5468 = vadd.f32 %v5274, %v5467
      %v5469 = vpop.f32.mrf.mxu0
      %5470 = vmatprep.mubr.f32.mxu0 0.0
      %5471 = vmatmul.mubr.f32.gmra.mxu0 %v5297
      %v5472 = vpop.f32.mrf.mxu0
      %v5473 = vadd.f32 %v5274, %v5472
      %v5474 = vpop.f32.mrf.mxu0
      %5475 = vmatprep.mubr.f32.mxu0 0.0
      %5476 = vmatmul.mubr.f32.gmra.mxu0 %v5300
      %v5477 = vpop.f32.mrf.mxu0
      %v5478 = vadd.f32 %v5274, %v5477
      %v5479 = vpop.f32.mrf.mxu0
      %5480 = vmatprep.mubr.f32.mxu0 0.0
      %5481 = vmatmul.mubr.f32.gmra.mxu0 %v5303
      %v5482 = vpop.f32.mrf.mxu0
      %v5483 = vadd.f32 %v5274, %v5482
      %v5484 = vpop.f32.mrf.mxu0
      %5485 = vmatprep.mubr.f32.mxu0 0.0
      %5486 = vmatmul.mubr.f32.gmra.mxu0 %v5306
      %v5487 = vpop.f32.mrf.mxu0
      %v5488 = vadd.f32 %v5274, %v5487
      %v5489 = vpop.f32.mrf.mxu0
      %5490 = vmatprep.mubr.f32.mxu0 0.0
      %5491 = vmatmul.mubr.f32.gmra.mxu0 %v5309
      %v5492 = vpop.f32.mrf.mxu0
      %v5493 = vadd.f32 %v5274, %v5492
      %v5494 = vpop.f32.mrf.mxu0
      %5495 = vmatprep.mubr.f32.mxu0 0.0
      %5496 = vmatmul.mubr.f32.gmra.mxu0 %v5312
      %v5497 = vpop.f32.mrf.mxu0
      %v5498 = vadd.f32 %v5274, %v5497
      %v5499 = vpop.f32.mrf.mxu0
      %5500 = vmatprep.mubr.f32.mxu0 0.0
      %5501 = vmatmul.mubr.f32.gmra.mxu0 %v5315
      %v5502 = vpop.f32.mrf.mxu0
      %v5503 = vadd.f32 %v5274, %v5502
      %v5504 = vpop.f32.mrf.mxu0
      %5505 = vmatprep.mubr.f32.mxu0 0.0
      %5506 = vmatmul.mubr.f32.gmra.mxu0 %v5318
      %v5507 = vpop.f32.mrf.mxu0
      %v5508 = vadd.f32 %v5274, %v5507
      %v5509 = vpop.f32.mrf.mxu0
      %5510 = vmatprep.mubr.f32.mxu0 0.0
      %5511 = vmatmul.mubr.f32.gmra.mxu0 %v5321
      %v5512 = vpop.f32.mrf.mxu0
      %v5513 = vadd.f32 %v5274, %v5512
      %v5514 = vpop.f32.mrf.mxu0
      %5515 = vmatprep.mubr.f32.mxu0 0.0
      %5516 = vmatmul.mubr.f32.gmra.mxu0 %v5324
      %v5517 = vpop.f32.mrf.mxu0
      %v5518 = vadd.f32 %v5274, %v5517
      %v5519 = vpop.f32.mrf.mxu0
      %5520 = vmatprep.mubr.f32.mxu0 0.0
      %5521 = vmatmul.mubr.f32.gmra.mxu0 %v5327
      %v5522 = vpop.f32.mrf.mxu0
      %v5523 = vadd.f32 %v5274, %v5522
      %v5524 = vpop.f32.mrf.mxu0
      %5525 = vmatprep.mubr.f32.mxu0 0.0
      %5526 = vmatmul.mubr.f32.gmra.mxu0 %v5330
      %v5527 = vpop.f32.mrf.mxu0
      %v5528 = vadd.f32 %v5274, %v5527
      %v5529 = vpop.f32.mrf.mxu0
      %5530 = vmatprep.mubr.f32.mxu0 0.0
      %5531 = vmatmul.mubr.f32.gmra.mxu0 %v5333
      %v5532 = vpop.f32.mrf.mxu0
      %v5533 = vadd.f32 %v5274, %v5532
      %v5534 = vpop.f32.mrf.mxu0
      %5535 = vmatprep.mubr.f32.mxu0 0.0
      %5536 = vmatmul.mubr.f32.gmra.mxu0 %v5336
      %v5537 = vpop.f32.mrf.mxu0
      %v5538 = vadd.f32 %v5274, %v5537
      %v5539 = vpop.f32.mrf.mxu0
      %5540 = vmatprep.mubr.f32.mxu0 0.0
      %5541 = vmatmul.mubr.f32.gmra.mxu0 %v5339
      %v5542 = vpop.f32.mrf.mxu0
      %v5543 = vadd.f32 %v5274, %v5542
      %v5544 = vpop.f32.mrf.mxu0
      %5545 = vmatprep.mubr.f32.mxu0 0.0
      %5546 = vmatmul.mubr.f32.gmra.mxu0 %v5342
      %v5547 = vpop.f32.mrf.mxu0
      %v5548 = vadd.f32 %v5274, %v5547
      %v5549 = vpop.f32.mrf.mxu0
      %5550 = vmatprep.mubr.f32.mxu0 0.0
      %5551 = vmatmul.mubr.f32.gmra.mxu0 %v5345
      %v5552 = vpop.f32.mrf.mxu0
      %v5553 = vadd.f32 %v5274, %v5552
      %v5554 = vpop.f32.mrf.mxu0
      %5555 = vmatprep.mubr.f32.mxu0 0.0
      %5556 = vmatmul.mubr.f32.gmra.mxu0 %v5348
      %v5557 = vpop.f32.mrf.mxu0
      %v5558 = vadd.f32 %v5274, %v5557
      %v5559 = vpop.f32.mrf.mxu0
      %5560 = vmatprep.mubr.f32.mxu0 0.0
      %5561 = vmatmul.mubr.f32.gmra.mxu0 %v5351
      %v5562 = vpop.f32.mrf.mxu0
      %v5563 = vadd.f32 %v5274, %v5562
      %v5564 = vpop.f32.mrf.mxu0
      %5565 = vmatprep.mubr.f32.mxu0 0.0
      %5566 = vmatmul.mubr.f32.gmra.mxu0 %v5354
      %v5567 = vpop.f32.mrf.mxu0
      %v5568 = vadd.f32 %v5274, %v5567
      %v5569 = vpop.f32.mrf.mxu0
      %5570 = vmatprep.mubr.f32.mxu0 0.0
      %5571 = vmatmul.mubr.f32.gmra.mxu0 %v5357
      %v5572 = vpop.f32.mrf.mxu0
      %v5573 = vadd.f32 %v5274, %v5572
      %v5574 = vpop.f32.mrf.mxu0
      %5575 = vmatprep.mubr.f32.mxu0 0.0
      %5576 = vmatmul.mubr.f32.gmra.mxu0 %v5360
      %v5577 = vpop.f32.mrf.mxu0
      %v5578 = vadd.f32 %v5274, %v5577
      %v5579 = vpop.f32.mrf.mxu0
      %5580 = vmatprep.mubr.f32.mxu0 0.0
      %5581 = vmatmul.mubr.f32.gmra.mxu0 %v5363
      %v5582 = vpop.f32.mrf.mxu0
      %v5583 = vadd.f32 %v5274, %v5582
      %v5584 = vpop.f32.mrf.mxu0
      %5585 = vmatprep.mubr.f32.mxu0 0.0
      %5586 = vmatmul.mubr.f32.gmra.mxu0 %v5366
      %v5587 = vpop.f32.mrf.mxu0
      %v5588 = vadd.f32 %v5274, %v5587
      %v5589 = vpop.f32.mrf.mxu0
      %5590 = vmatprep.mubr.f32.mxu0 0.0
      %5591 = vmatmul.mubr.f32.gmra.mxu0 %v5369
      %v5592 = vpop.f32.mrf.mxu0
      %v5593 = vadd.f32 %v5274, %v5592
      %v5594 = vpop.f32.mrf.mxu0
      %5595 = vdwg.mxu0
      %v5596 = vmax.f32 %v5438, 0.0
      %v5597 = vmax.f32 %v5443, 0.0
      %v5598 = vmax.f32 %v5448, 0.0
      %v5599 = vmax.f32 %v5453, 0.0
      %v5600 = vmax.f32 %v5458, 0.0
      %v5601 = vmax.f32 %v5463, 0.0
      %v5602 = vmax.f32 %v5468, 0.0
      %v5603 = vmax.f32 %v5473, 0.0
      %v5604 = vmax.f32 %v5478, 0.0
      %v5605 = vmax.f32 %v5483, 0.0
      %v5606 = vmax.f32 %v5488, 0.0
      %v5607 = vmax.f32 %v5493, 0.0
      %v5608 = vmax.f32 %v5498, 0.0
      %v5609 = vmax.f32 %v5503, 0.0
      %v5610 = vmax.f32 %v5508, 0.0
      %v5611 = vmax.f32 %v5513, 0.0
      %v5612 = vmax.f32 %v5518, 0.0
      %v5613 = vmax.f32 %v5523, 0.0
      %v5614 = vmax.f32 %v5528, 0.0
      %v5615 = vmax.f32 %v5533, 0.0
      %v5616 = vmax.f32 %v5538, 0.0
      %v5617 = vmax.f32 %v5543, 0.0
      %v5618 = vmax.f32 %v5548, 0.0
      %v5619 = vmax.f32 %v5553, 0.0
      %v5620 = vmax.f32 %v5558, 0.0
      %v5621 = vmax.f32 %v5563, 0.0
      %v5622 = vmax.f32 %v5568, 0.0
      %v5623 = vmax.f32 %v5573, 0.0
      %v5624 = vmax.f32 %v5578, 0.0
      %v5625 = vmax.f32 %v5583, 0.0
      %v5626 = vmax.f32 %v5588, 0.0
      %v5627 = vmax.f32 %v5593, 0.0
      %v5628 = vld [vmem:[%s3 + $0xb0] sm:$0xff]
      %v5629 = vld [vmem:[%s3 + $0xb8] sm:$0xff]
      %v5630 = vld [vmem:[%s3 + $0xc0] sm:$0xff]
      %v5631 = vld [vmem:[%s3 + $0xc8] sm:$0xff]
      %v5632 = vld [vmem:[%s3 + $0xd0] sm:$0x1]
      %v5633 = vlaneseq
      %v5634 = vshrl.u32 %v5633, 7
      %v5635 = vsub.s32 0, %v5634
      %v5636 = vrot.slane %v5632, %v5635
      %v5638 = vsel %vm1852, %v5596, 0
      %v5641 = vsel %vm1852, %v5597, 0
      %v5644 = vsel %vm1852, %v5598, 0
      %v5647 = vsel %vm1852, %v5599, 0
      %v5650 = vsel %vm1852, %v5600, 0
      %v5653 = vsel %vm1852, %v5601, 0
      %v5656 = vsel %vm1852, %v5602, 0
      %v5659 = vsel %vm1852, %v5603, 0
      %v5662 = vsel %vm1852, %v5604, 0
      %v5665 = vsel %vm1852, %v5605, 0
      %v5668 = vsel %vm1852, %v5606, 0
      %v5671 = vsel %vm1852, %v5607, 0
      %v5674 = vsel %vm1852, %v5608, 0
      %v5677 = vsel %vm1852, %v5609, 0
      %v5680 = vsel %vm1852, %v5610, 0
      %v5683 = vsel %vm1852, %v5611, 0
      %v5686 = vsel %vm1852, %v5612, 0
      %v5689 = vsel %vm1852, %v5613, 0
      %v5692 = vsel %vm1852, %v5614, 0
      %v5695 = vsel %vm1852, %v5615, 0
      %v5698 = vsel %vm1852, %v5616, 0
      %v5701 = vsel %vm1852, %v5617, 0
      %v5704 = vsel %vm1852, %v5618, 0
      %v5707 = vsel %vm1852, %v5619, 0
      %v5710 = vsel %vm1852, %v5620, 0
      %v5713 = vsel %vm1852, %v5621, 0
      %v5716 = vsel %vm1852, %v5622, 0
      %v5719 = vsel %vm1852, %v5623, 0
      %v5722 = vsel %vm1852, %v5624, 0
      %v5725 = vsel %vm1852, %v5625, 0
      %v5728 = vsel %vm1852, %v5626, 0
      %v5731 = vsel %vm1852, %v5627, 0
      %5733 = vmatprep.subr.mxu0 0.0
      %5734 = vmatpush1.msra.mxu0 0.0
      %5735 = vmatprep.subr.mxu0 0.0
      %5736 = vmatpush1.msra.mxu0 0.0
      %5737 = vmatprep.subr.mxu0 0.0
      %5738 = vmatpush1.msra.mxu0 0.0
      %5739 = vmatprep.subr.mxu0 0.0
      %5740 = vmatpush1.msra.mxu0 0.0
      %5741 = vmatprep.subr.mxu0 0.0
      %5742 = vmatpush1.msra.mxu0 0.0
      %5743 = vmatprep.subr.mxu0 0.0
      %5744 = vmatpush1.msra.mxu0 0.0
      %5745 = vmatprep.subr.mxu0 0.0
      %5746 = vmatpush1.msra.mxu0 0.0
      %5747 = vmatprep.subr.mxu0 0.0
      %5748 = vmatpush1.msra.mxu0 0.0
      %5749 = vmatprep.subr.mxu0 0.0
      %5750 = vmatpush1.msra.mxu0 0.0
      %5751 = vmatprep.subr.mxu0 0.0
      %5752 = vmatpush1.msra.mxu0 0.0
      %5753 = vmatprep.subr.mxu0 0.0
      %5754 = vmatpush1.msra.mxu0 0.0
      %5755 = vmatprep.subr.mxu0 0.0
      %5756 = vmatpush1.msra.mxu0 0.0
      %5757 = vmatprep.subr.mxu0 0.0
      %5758 = vmatpush1.msra.mxu0 %v5631
      %5759 = vmatprep.subr.mxu0 0.0
      %5760 = vmatpush1.msra.mxu0 %v5630
      %5761 = vmatprep.subr.mxu0 0.0
      %5762 = vmatpush1.msra.mxu0 %v5629
      %5763 = vmatprep.subr.mxu0 0.0
      %5764 = vmatpush1.msra.mxu0 %v5628
      %5765 = vmatprep.subr.mxu0 0.0
      %5766 = vmatpush2.msra.mxu0 0.0
      %5767 = vmatprep.subr.mxu0 0.0
      %5768 = vmatpush2.msra.mxu0 0.0
      %5769 = vmatprep.subr.mxu0 0.0
      %5770 = vmatpush2.msra.mxu0 0.0
      %5771 = vmatprep.subr.mxu0 0.0
      %5772 = vmatpush2.msra.mxu0 0.0
      %5773 = vmatprep.subr.mxu0 0.0
      %5774 = vmatpush2.msra.mxu0 0.0
      %5775 = vmatprep.subr.mxu0 0.0
      %5776 = vmatpush2.msra.mxu0 0.0
      %5777 = vmatprep.subr.mxu0 0.0
      %5778 = vmatpush2.msra.mxu0 0.0
      %5779 = vmatprep.subr.mxu0 0.0
      %5780 = vmatpush2.msra.mxu0 0.0
      %5781 = vmatprep.subr.mxu0 0.0
      %5782 = vmatpush2.msra.mxu0 0.0
      %5783 = vmatprep.subr.mxu0 0.0
      %5784 = vmatpush2.msra.mxu0 0.0
      %5785 = vmatprep.subr.mxu0 0.0
      %5786 = vmatpush2.msra.mxu0 0.0
      %5787 = vmatprep.subr.mxu0 0.0
      %5788 = vmatpush2.msra.mxu0 0.0
      %5789 = vmatprep.subr.mxu0 0.0
      %5790 = vmatpush2.msra.mxu0 0.0
      %5791 = vmatprep.subr.mxu0 0.0
      %5792 = vmatpush2.msra.mxu0 0.0
      %5793 = vmatprep.subr.mxu0 0.0
      %5794 = vmatpush2.msra.mxu0 0.0
      %5795 = vmatprep.subr.mxu0 0.0
      %5796 = vmatpush2.msra.mxu0 0.0
      %5797 = vmatprep.mubr.f32.mxu0 0.0
      %5798 = vmatmul.mubr.f32.gmra.mxu0 %v5638
      %v5799 = vpop.f32.mrf.mxu0
      %v5800 = vadd.f32 %v5636, %v5799
      %v5801 = vpop.f32.mrf.mxu0
      %5802 = vmatprep.mubr.f32.mxu0 0.0
      %5803 = vmatmul.mubr.f32.gmra.mxu0 %v5641
      %v5804 = vpop.f32.mrf.mxu0
      %v5805 = vadd.f32 %v5636, %v5804
      %v5806 = vpop.f32.mrf.mxu0
      %5807 = vmatprep.mubr.f32.mxu0 0.0
      %5808 = vmatmul.mubr.f32.gmra.mxu0 %v5644
      %v5809 = vpop.f32.mrf.mxu0
      %v5810 = vadd.f32 %v5636, %v5809
      %v5811 = vpop.f32.mrf.mxu0
      %5812 = vmatprep.mubr.f32.mxu0 0.0
      %5813 = vmatmul.mubr.f32.gmra.mxu0 %v5647
      %v5814 = vpop.f32.mrf.mxu0
      %v5815 = vadd.f32 %v5636, %v5814
      %v5816 = vpop.f32.mrf.mxu0
      %5817 = vmatprep.mubr.f32.mxu0 0.0
      %5818 = vmatmul.mubr.f32.gmra.mxu0 %v5650
      %v5819 = vpop.f32.mrf.mxu0
      %v5820 = vadd.f32 %v5636, %v5819
      %v5821 = vpop.f32.mrf.mxu0
      %5822 = vmatprep.mubr.f32.mxu0 0.0
      %5823 = vmatmul.mubr.f32.gmra.mxu0 %v5653
      %v5824 = vpop.f32.mrf.mxu0
      %v5825 = vadd.f32 %v5636, %v5824
      %v5826 = vpop.f32.mrf.mxu0
      %5827 = vmatprep.mubr.f32.mxu0 0.0
      %5828 = vmatmul.mubr.f32.gmra.mxu0 %v5656
      %v5829 = vpop.f32.mrf.mxu0
      %v5830 = vadd.f32 %v5636, %v5829
      %v5831 = vpop.f32.mrf.mxu0
      %5832 = vmatprep.mubr.f32.mxu0 0.0
      %5833 = vmatmul.mubr.f32.gmra.mxu0 %v5659
      %v5834 = vpop.f32.mrf.mxu0
      %v5835 = vadd.f32 %v5636, %v5834
      %v5836 = vpop.f32.mrf.mxu0
      %5837 = vmatprep.mubr.f32.mxu0 0.0
      %5838 = vmatmul.mubr.f32.gmra.mxu0 %v5662
      %v5839 = vpop.f32.mrf.mxu0
      %v5840 = vadd.f32 %v5636, %v5839
      %v5841 = vpop.f32.mrf.mxu0
      %5842 = vmatprep.mubr.f32.mxu0 0.0
      %5843 = vmatmul.mubr.f32.gmra.mxu0 %v5665
      %v5844 = vpop.f32.mrf.mxu0
      %v5845 = vadd.f32 %v5636, %v5844
      %v5846 = vpop.f32.mrf.mxu0
      %5847 = vmatprep.mubr.f32.mxu0 0.0
      %5848 = vmatmul.mubr.f32.gmra.mxu0 %v5668
      %v5849 = vpop.f32.mrf.mxu0
      %v5850 = vadd.f32 %v5636, %v5849
      %v5851 = vpop.f32.mrf.mxu0
      %5852 = vmatprep.mubr.f32.mxu0 0.0
      %5853 = vmatmul.mubr.f32.gmra.mxu0 %v5671
      %v5854 = vpop.f32.mrf.mxu0
      %v5855 = vadd.f32 %v5636, %v5854
      %v5856 = vpop.f32.mrf.mxu0
      %5857 = vmatprep.mubr.f32.mxu0 0.0
      %5858 = vmatmul.mubr.f32.gmra.mxu0 %v5674
      %v5859 = vpop.f32.mrf.mxu0
      %v5860 = vadd.f32 %v5636, %v5859
      %v5861 = vpop.f32.mrf.mxu0
      %5862 = vmatprep.mubr.f32.mxu0 0.0
      %5863 = vmatmul.mubr.f32.gmra.mxu0 %v5677
      %v5864 = vpop.f32.mrf.mxu0
      %v5865 = vadd.f32 %v5636, %v5864
      %v5866 = vpop.f32.mrf.mxu0
      %5867 = vmatprep.mubr.f32.mxu0 0.0
      %5868 = vmatmul.mubr.f32.gmra.mxu0 %v5680
      %v5869 = vpop.f32.mrf.mxu0
      %v5870 = vadd.f32 %v5636, %v5869
      %v5871 = vpop.f32.mrf.mxu0
      %5872 = vmatprep.mubr.f32.mxu0 0.0
      %5873 = vmatmul.mubr.f32.gmra.mxu0 %v5683
      %v5874 = vpop.f32.mrf.mxu0
      %v5875 = vadd.f32 %v5636, %v5874
      %v5876 = vpop.f32.mrf.mxu0
      %5877 = vmatprep.mubr.f32.mxu0 0.0
      %5878 = vmatmul.mubr.f32.gmra.mxu0 %v5686
      %v5879 = vpop.f32.mrf.mxu0
      %v5880 = vadd.f32 %v5636, %v5879
      %v5881 = vpop.f32.mrf.mxu0
      %5882 = vmatprep.mubr.f32.mxu0 0.0
      %5883 = vmatmul.mubr.f32.gmra.mxu0 %v5689
      %v5884 = vpop.f32.mrf.mxu0
      %v5885 = vadd.f32 %v5636, %v5884
      %v5886 = vpop.f32.mrf.mxu0
      %5887 = vmatprep.mubr.f32.mxu0 0.0
      %5888 = vmatmul.mubr.f32.gmra.mxu0 %v5692
      %v5889 = vpop.f32.mrf.mxu0
      %v5890 = vadd.f32 %v5636, %v5889
      %v5891 = vpop.f32.mrf.mxu0
      %5892 = vmatprep.mubr.f32.mxu0 0.0
      %5893 = vmatmul.mubr.f32.gmra.mxu0 %v5695
      %v5894 = vpop.f32.mrf.mxu0
      %v5895 = vadd.f32 %v5636, %v5894
      %v5896 = vpop.f32.mrf.mxu0
      %5897 = vmatprep.mubr.f32.mxu0 0.0
      %5898 = vmatmul.mubr.f32.gmra.mxu0 %v5698
      %v5899 = vpop.f32.mrf.mxu0
      %v5900 = vadd.f32 %v5636, %v5899
      %v5901 = vpop.f32.mrf.mxu0
      %5902 = vmatprep.mubr.f32.mxu0 0.0
      %5903 = vmatmul.mubr.f32.gmra.mxu0 %v5701
      %v5904 = vpop.f32.mrf.mxu0
      %v5905 = vadd.f32 %v5636, %v5904
      %v5906 = vpop.f32.mrf.mxu0
      %5907 = vmatprep.mubr.f32.mxu0 0.0
      %5908 = vmatmul.mubr.f32.gmra.mxu0 %v5704
      %v5909 = vpop.f32.mrf.mxu0
      %v5910 = vadd.f32 %v5636, %v5909
      %v5911 = vpop.f32.mrf.mxu0
      %5912 = vmatprep.mubr.f32.mxu0 0.0
      %5913 = vmatmul.mubr.f32.gmra.mxu0 %v5707
      %v5914 = vpop.f32.mrf.mxu0
      %v5915 = vadd.f32 %v5636, %v5914
      %v5916 = vpop.f32.mrf.mxu0
      %5917 = vmatprep.mubr.f32.mxu0 0.0
      %5918 = vmatmul.mubr.f32.gmra.mxu0 %v5710
      %v5919 = vpop.f32.mrf.mxu0
      %v5920 = vadd.f32 %v5636, %v5919
      %v5921 = vpop.f32.mrf.mxu0
      %5922 = vmatprep.mubr.f32.mxu0 0.0
      %5923 = vmatmul.mubr.f32.gmra.mxu0 %v5713
      %v5924 = vpop.f32.mrf.mxu0
      %v5925 = vadd.f32 %v5636, %v5924
      %v5926 = vpop.f32.mrf.mxu0
      %5927 = vmatprep.mubr.f32.mxu0 0.0
      %5928 = vmatmul.mubr.f32.gmra.mxu0 %v5716
      %v5929 = vpop.f32.mrf.mxu0
      %v5930 = vadd.f32 %v5636, %v5929
      %v5931 = vpop.f32.mrf.mxu0
      %5932 = vmatprep.mubr.f32.mxu0 0.0
      %5933 = vmatmul.mubr.f32.gmra.mxu0 %v5719
      %v5934 = vpop.f32.mrf.mxu0
      %v5935 = vadd.f32 %v5636, %v5934
      %v5936 = vpop.f32.mrf.mxu0
      %5937 = vmatprep.mubr.f32.mxu0 0.0
      %5938 = vmatmul.mubr.f32.gmra.mxu0 %v5722
      %v5939 = vpop.f32.mrf.mxu0
      %v5940 = vadd.f32 %v5636, %v5939
      %v5941 = vpop.f32.mrf.mxu0
      %5942 = vmatprep.mubr.f32.mxu0 0.0
      %5943 = vmatmul.mubr.f32.gmra.mxu0 %v5725
      %v5944 = vpop.f32.mrf.mxu0
      %v5945 = vadd.f32 %v5636, %v5944
      %v5946 = vpop.f32.mrf.mxu0
      %5947 = vmatprep.mubr.f32.mxu0 0.0
      %5948 = vmatmul.mubr.f32.gmra.mxu0 %v5728
      %v5949 = vpop.f32.mrf.mxu0
      %v5950 = vadd.f32 %v5636, %v5949
      %v5951 = vpop.f32.mrf.mxu0
      %5952 = vmatprep.mubr.f32.mxu0 0.0
      %5953 = vmatmul.mubr.f32.gmra.mxu0 %v5731
      %v5954 = vpop.f32.mrf.mxu0
      %v5955 = vadd.f32 %v5636, %v5954
      %v5956 = vpop.f32.mrf.mxu0
      %5957 = vdwg.mxu0
      %v5958 = vld [vmem:[%s232] sm:$0xff]
      %v5959 = vld [vmem:[%s232 + $0x8] sm:$0xff]
      %vm5960 = vcmp.gt.s32.totalorder %v5958, 0
      %vm5961 = vcmp.gt.s32.totalorder %v5959, 0
      %vm5962 = vcmp.gt.s32.totalorder %v5958, 1
      %vm5963 = vcmp.gt.s32.totalorder %v5959, 1
      %vm5964 = vcmp.gt.s32.totalorder %v5958, 2
      %vm5965 = vcmp.gt.s32.totalorder %v5959, 2
      %vm5966 = vcmp.gt.s32.totalorder %v5958, 3
      %vm5967 = vcmp.gt.s32.totalorder %v5959, 3
      %vm5968 = vcmp.gt.s32.totalorder %v5958, 4
      %vm5969 = vcmp.gt.s32.totalorder %v5959, 4
      %vm5970 = vcmp.gt.s32.totalorder %v5958, 5
      %vm5971 = vcmp.gt.s32.totalorder %v5959, 5
      %vm5972 = vcmp.gt.s32.totalorder %v5958, 6
      %vm5973 = vcmp.gt.s32.totalorder %v5959, 6
      %vm5974 = vcmp.gt.s32.totalorder %v5958, 7
      %vm5975 = vcmp.gt.s32.totalorder %v5959, 7
      %v5976 = vsel %vm5960, 1, 0
      %v5977 = vsel %vm5961, 1, 0
      %v5978 = vsel %vm5962, 1, 0
      %v5979 = vsel %vm5963, 1, 0
      %v5980 = vsel %vm5964, 1, 0
      %v5981 = vsel %vm5965, 1, 0
      %v5982 = vsel %vm5966, 1, 0
      %v5983 = vsel %vm5967, 1, 0
      %v5984 = vsel %vm5968, 1, 0
      %v5985 = vsel %vm5969, 1, 0
      %v5986 = vsel %vm5970, 1, 0
      %v5987 = vsel %vm5971, 1, 0
      %v5988 = vsel %vm5972, 1, 0
      %v5989 = vsel %vm5973, 1, 0
      %v5990 = vsel %vm5974, 1, 0
      %v5991 = vsel %vm5975, 1, 0
      %v5992 = vcvt.s32.f32 %v5976
      %v5993 = vcvt.s32.f32 %v5977
      %v5994 = vcvt.s32.f32 %v5978
      %v5995 = vcvt.s32.f32 %v5979
      %v5996 = vcvt.s32.f32 %v5980
      %v5997 = vcvt.s32.f32 %v5981
      %v5998 = vcvt.s32.f32 %v5982
      %v5999 = vcvt.s32.f32 %v5983
      %v6000 = vcvt.s32.f32 %v5984
      %v6001 = vcvt.s32.f32 %v5985
      %v6002 = vcvt.s32.f32 %v5986
      %v6003 = vcvt.s32.f32 %v5987
      %v6004 = vcvt.s32.f32 %v5988
      %v6005 = vcvt.s32.f32 %v5989
      %v6006 = vcvt.s32.f32 %v5990
      %v6007 = vcvt.s32.f32 %v5991
      %6009 = vset.pattern.permute.xlu0 0
      %6010 = vperm.xlu0 %6009, %v5992
      %v6011 = vpop.permute.xlu0 %6010
      %6014 = vset.pattern.permute.xlu0 0
      %6015 = vperm.xlu0 %6014, %v5993
      %v6016 = vpop.permute.xlu0 %6015
      %6019 = vset.pattern.permute.xlu0 0
      %6020 = vperm.xlu0 %6019, %v5994
      %v6021 = vpop.permute.xlu0 %6020
      %6024 = vset.pattern.permute.xlu0 0
      %6025 = vperm.xlu0 %6024, %v5995
      %v6026 = vpop.permute.xlu0 %6025
      %6029 = vset.pattern.permute.xlu0 0
      %6030 = vperm.xlu0 %6029, %v5996
      %v6031 = vpop.permute.xlu0 %6030
      %6034 = vset.pattern.permute.xlu0 0
      %6035 = vperm.xlu0 %6034, %v5997
      %v6036 = vpop.permute.xlu0 %6035
      %6039 = vset.pattern.permute.xlu0 0
      %6040 = vperm.xlu0 %6039, %v5998
      %v6041 = vpop.permute.xlu0 %6040
      %6044 = vset.pattern.permute.xlu0 0
      %6045 = vperm.xlu0 %6044, %v5999
      %v6046 = vpop.permute.xlu0 %6045
      %6049 = vset.pattern.permute.xlu0 0
      %6050 = vperm.xlu0 %6049, %v6000
      %v6051 = vpop.permute.xlu0 %6050
      %6054 = vset.pattern.permute.xlu0 0
      %6055 = vperm.xlu0 %6054, %v6001
      %v6056 = vpop.permute.xlu0 %6055
      %6059 = vset.pattern.permute.xlu0 0
      %6060 = vperm.xlu0 %6059, %v6002
      %v6061 = vpop.permute.xlu0 %6060
      %6064 = vset.pattern.permute.xlu0 0
      %6065 = vperm.xlu0 %6064, %v6003
      %v6066 = vpop.permute.xlu0 %6065
      %6069 = vset.pattern.permute.xlu0 0
      %6070 = vperm.xlu0 %6069, %v6004
      %v6071 = vpop.permute.xlu0 %6070
      %6074 = vset.pattern.permute.xlu0 0
      %6075 = vperm.xlu0 %6074, %v6005
      %v6076 = vpop.permute.xlu0 %6075
      %6079 = vset.pattern.permute.xlu0 0
      %6080 = vperm.xlu0 %6079, %v6006
      %v6081 = vpop.permute.xlu0 %6080
      %6084 = vset.pattern.permute.xlu0 0
      %6085 = vperm.xlu0 %6084, %v6007
      %v6086 = vpop.permute.xlu0 %6085
      %v6088 = vmul.f32 %v5800, %v6011
      %v6089 = vmul.f32 %v5805, %v6016
      %v6090 = vmul.f32 %v5810, %v6021
      %v6091 = vmul.f32 %v5815, %v6026
      %v6092 = vmul.f32 %v5820, %v6031
      %v6093 = vmul.f32 %v5825, %v6036
      %v6094 = vmul.f32 %v5830, %v6041
      %v6095 = vmul.f32 %v5835, %v6046
      %v6096 = vmul.f32 %v5840, %v6051
      %v6097 = vmul.f32 %v5845, %v6056
      %v6098 = vmul.f32 %v5850, %v6061
      %v6099 = vmul.f32 %v5855, %v6066
      %v6100 = vmul.f32 %v5860, %v6071
      %v6101 = vmul.f32 %v5865, %v6076
      %v6102 = vmul.f32 %v5870, %v6081
      %v6103 = vmul.f32 %v5875, %v6086
      %v6104 = vmul.f32 %v5880, %v6011
      %v6105 = vmul.f32 %v5885, %v6016
      %v6106 = vmul.f32 %v5890, %v6021
      %v6107 = vmul.f32 %v5895, %v6026
      %v6108 = vmul.f32 %v5900, %v6031
      %v6109 = vmul.f32 %v5905, %v6036
      %v6110 = vmul.f32 %v5910, %v6041
      %v6111 = vmul.f32 %v5915, %v6046
      %v6112 = vmul.f32 %v5920, %v6051
      %v6113 = vmul.f32 %v5925, %v6056
      %v6114 = vmul.f32 %v5930, %v6061
      %v6115 = vmul.f32 %v5935, %v6066
      %v6116 = vmul.f32 %v5940, %v6071
      %v6117 = vmul.f32 %v5945, %v6076
      %v6118 = vmul.f32 %v5950, %v6081
      %v6119 = vmul.f32 %v5955, %v6086
      %v6120 = vsel %vm272, %v6088, 0.0
      %v6121 = vsel %vm272, %v6090, 0.0
      %v6122 = vadd.f32 %v6120, %v6121
      %v6123 = vsel %vm272, %v6092, 0.0
      %v6124 = vadd.f32 %v6122, %v6123
      %v6125 = vsel %vm272, %v6094, 0.0
      %v6126 = vadd.f32 %v6124, %v6125
      %v6127 = vsel %vm272, %v6096, 0.0
      %v6128 = vadd.f32 %v6126, %v6127
      %v6129 = vsel %vm272, %v6098, 0.0
      %v6130 = vadd.f32 %v6128, %v6129
      %v6131 = vsel %vm272, %v6100, 0.0
      %v6132 = vadd.f32 %v6130, %v6131
      %v6133 = vsel %vm272, %v6102, 0.0
      %v6134 = vadd.f32 %v6132, %v6133
      %v6135 = vsel %vm272, %v6104, 0.0
      %v6136 = vadd.f32 %v6134, %v6135
      %v6137 = vsel %vm272, %v6106, 0.0
      %v6138 = vadd.f32 %v6136, %v6137
      %v6139 = vsel %vm272, %v6108, 0.0
      %v6140 = vadd.f32 %v6138, %v6139
      %v6141 = vsel %vm272, %v6110, 0.0
      %v6142 = vadd.f32 %v6140, %v6141
      %v6143 = vsel %vm272, %v6112, 0.0
      %v6144 = vadd.f32 %v6142, %v6143
      %v6145 = vsel %vm272, %v6114, 0.0
      %v6146 = vadd.f32 %v6144, %v6145
      %v6147 = vsel %vm272, %v6116, 0.0
      %v6148 = vadd.f32 %v6146, %v6147
      %v6149 = vsel %vm272, %v6118, 0.0
      %v6150 = vadd.f32 %v6148, %v6149
      %v6151 = vsel %vm272, %v6089, 0.0
      %v6152 = vsel %vm272, %v6091, 0.0
      %v6153 = vadd.f32 %v6151, %v6152
      %v6154 = vsel %vm272, %v6093, 0.0
      %v6155 = vadd.f32 %v6153, %v6154
      %v6156 = vsel %vm272, %v6095, 0.0
      %v6157 = vadd.f32 %v6155, %v6156
      %v6158 = vsel %vm272, %v6097, 0.0
      %v6159 = vadd.f32 %v6157, %v6158
      %v6160 = vsel %vm272, %v6099, 0.0
      %v6161 = vadd.f32 %v6159, %v6160
      %v6162 = vsel %vm272, %v6101, 0.0
      %v6163 = vadd.f32 %v6161, %v6162
      %v6164 = vsel %vm272, %v6103, 0.0
      %v6165 = vadd.f32 %v6163, %v6164
      %v6166 = vsel %vm272, %v6105, 0.0
      %v6167 = vadd.f32 %v6165, %v6166
      %v6168 = vsel %vm272, %v6107, 0.0
      %v6169 = vadd.f32 %v6167, %v6168
      %v6170 = vsel %vm272, %v6109, 0.0
      %v6171 = vadd.f32 %v6169, %v6170
      %v6172 = vsel %vm272, %v6111, 0.0
      %v6173 = vadd.f32 %v6171, %v6172
      %v6174 = vsel %vm272, %v6113, 0.0
      %v6175 = vadd.f32 %v6173, %v6174
      %v6176 = vsel %vm272, %v6115, 0.0
      %v6177 = vadd.f32 %v6175, %v6176
      %v6178 = vsel %vm272, %v6117, 0.0
      %v6179 = vadd.f32 %v6177, %v6178
      %v6180 = vsel %vm272, %v6119, 0.0
      %v6181 = vadd.f32 %v6179, %v6180
      %v6182 = vld [vmem:[%s3 + $0xd8] sm:$0xff]
      %v6183 = vld [vmem:[%s3 + $0xe0] sm:$0xff]
      %v6184 = vld [vmem:[%s3 + $0xe8] sm:$0x1]
      %v6185 = vlaneseq
      %v6186 = vshrl.u32 %v6185, 7
      %v6187 = vsub.s32 0, %v6186
      %v6188 = vrot.slane %v6184, %v6187
      %v6190 = vsel %vm272, %v6150, 0
      %v6193 = vsel %vm272, %v6181, 0
      %6195 = vmatprep.subr.mxu0 0.0
      %6196 = vmatpush1.msra.mxu0 0.0
      %6197 = vmatprep.subr.mxu0 0.0
      %6198 = vmatpush1.msra.mxu0 0.0
      %6199 = vmatprep.subr.mxu0 0.0
      %6200 = vmatpush1.msra.mxu0 0.0
      %6201 = vmatprep.subr.mxu0 0.0
      %6202 = vmatpush1.msra.mxu0 0.0
      %6203 = vmatprep.subr.mxu0 0.0
      %6204 = vmatpush1.msra.mxu0 0.0
      %6205 = vmatprep.subr.mxu0 0.0
      %6206 = vmatpush1.msra.mxu0 0.0
      %6207 = vmatprep.subr.mxu0 0.0
      %6208 = vmatpush1.msra.mxu0 0.0
      %6209 = vmatprep.subr.mxu0 0.0
      %6210 = vmatpush1.msra.mxu0 0.0
      %6211 = vmatprep.subr.mxu0 0.0
      %6212 = vmatpush1.msra.mxu0 0.0
      %6213 = vmatprep.subr.mxu0 0.0
      %6214 = vmatpush1.msra.mxu0 0.0
      %6215 = vmatprep.subr.mxu0 0.0
      %6216 = vmatpush1.msra.mxu0 0.0
      %6217 = vmatprep.subr.mxu0 0.0
      %6218 = vmatpush1.msra.mxu0 0.0
      %6219 = vmatprep.subr.mxu0 0.0
      %6220 = vmatpush1.msra.mxu0 0.0
      %6221 = vmatprep.subr.mxu0 0.0
      %6222 = vmatpush1.msra.mxu0 0.0
      %6223 = vmatprep.subr.mxu0 0.0
      %6224 = vmatpush1.msra.mxu0 %v6183
      %6225 = vmatprep.subr.mxu0 0.0
      %6226 = vmatpush1.msra.mxu0 %v6182
      %6227 = vmatprep.subr.mxu0 0.0
      %6228 = vmatpush2.msra.mxu0 0.0
      %6229 = vmatprep.subr.mxu0 0.0
      %6230 = vmatpush2.msra.mxu0 0.0
      %6231 = vmatprep.subr.mxu0 0.0
      %6232 = vmatpush2.msra.mxu0 0.0
      %6233 = vmatprep.subr.mxu0 0.0
      %6234 = vmatpush2.msra.mxu0 0.0
      %6235 = vmatprep.subr.mxu0 0.0
      %6236 = vmatpush2.msra.mxu0 0.0
      %6237 = vmatprep.subr.mxu0 0.0
      %6238 = vmatpush2.msra.mxu0 0.0
      %6239 = vmatprep.subr.mxu0 0.0
      %6240 = vmatpush2.msra.mxu0 0.0
      %6241 = vmatprep.subr.mxu0 0.0
      %6242 = vmatpush2.msra.mxu0 0.0
      %6243 = vmatprep.subr.mxu0 0.0
      %6244 = vmatpush2.msra.mxu0 0.0
      %6245 = vmatprep.subr.mxu0 0.0
      %6246 = vmatpush2.msra.mxu0 0.0
      %6247 = vmatprep.subr.mxu0 0.0
      %6248 = vmatpush2.msra.mxu0 0.0
      %6249 = vmatprep.subr.mxu0 0.0
      %6250 = vmatpush2.msra.mxu0 0.0
      %6251 = vmatprep.subr.mxu0 0.0
      %6252 = vmatpush2.msra.mxu0 0.0
      %6253 = vmatprep.subr.mxu0 0.0
      %6254 = vmatpush2.msra.mxu0 0.0
      %6255 = vmatprep.subr.mxu0 0.0
      %6256 = vmatpush2.msra.mxu0 0.0
      %6257 = vmatprep.subr.mxu0 0.0
      %6258 = vmatpush2.msra.mxu0 0.0
      %6259 = vmatprep.mubr.f32.mxu0 0.0
      %6260 = vmatmul.mubr.f32.gmra.mxu0 %v6190
      %v6261 = vpop.f32.mrf.mxu0
      %v6262 = vadd.f32 %v6188, %v6261
      %v6263 = vpop.f32.mrf.mxu0
      %6264 = vmatprep.mubr.f32.mxu0 0.0
      %6265 = vmatmul.mubr.f32.gmra.mxu0 %v6193
      %v6266 = vpop.f32.mrf.mxu0
      %v6267 = vadd.f32 %v6188, %v6266
      %v6268 = vpop.f32.mrf.mxu0
      %6269 = vdwg.mxu0
      %v6270 = vmax.f32 %v6262, 0.0
      %v6271 = vmax.f32 %v6267, 0.0
      %v6272 = vld [vmem:[%s3 + $0xf0] sm:$0xff]
      %v6273 = vld [vmem:[%s3 + $0xf8] sm:$0xff]
      %v6274 = vld [vmem:[%s3 + $0x100] sm:$0xff]
      %v6275 = vld [vmem:[%s3 + $0x108] sm:$0xff]
      %v6276 = vld [vmem:[%s3 + $0x110] sm:$0x1]
      %v6277 = vlaneseq
      %v6278 = vshrl.u32 %v6277, 7
      %v6279 = vsub.s32 0, %v6278
      %v6280 = vrot.slane %v6276, %v6279
      %v6282 = vsel %vm1852, %v6270, 0
      %v6285 = vsel %vm1852, %v6271, 0
      %6287 = vmatprep.subr.mxu0 0.0
      %6288 = vmatpush1.msra.mxu0 0.0
      %6289 = vmatprep.subr.mxu0 0.0
      %6290 = vmatpush1.msra.mxu0 0.0
      %6291 = vmatprep.subr.mxu0 0.0
      %6292 = vmatpush1.msra.mxu0 0.0
      %6293 = vmatprep.subr.mxu0 0.0
      %6294 = vmatpush1.msra.mxu0 0.0
      %6295 = vmatprep.subr.mxu0 0.0
      %6296 = vmatpush1.msra.mxu0 0.0
      %6297 = vmatprep.subr.mxu0 0.0
      %6298 = vmatpush1.msra.mxu0 0.0
      %6299 = vmatprep.subr.mxu0 0.0
      %6300 = vmatpush1.msra.mxu0 0.0
      %6301 = vmatprep.subr.mxu0 0.0
      %6302 = vmatpush1.msra.mxu0 0.0
      %6303 = vmatprep.subr.mxu0 0.0
      %6304 = vmatpush1.msra.mxu0 0.0
      %6305 = vmatprep.subr.mxu0 0.0
      %6306 = vmatpush1.msra.mxu0 0.0
      %6307 = vmatprep.subr.mxu0 0.0
      %6308 = vmatpush1.msra.mxu0 0.0
      %6309 = vmatprep.subr.mxu0 0.0
      %6310 = vmatpush1.msra.mxu0 0.0
      %6311 = vmatprep.subr.mxu0 0.0
      %6312 = vmatpush1.msra.mxu0 %v6275
      %6313 = vmatprep.subr.mxu0 0.0
      %6314 = vmatpush1.msra.mxu0 %v6274
      %6315 = vmatprep.subr.mxu0 0.0
      %6316 = vmatpush1.msra.mxu0 %v6273
      %6317 = vmatprep.subr.mxu0 0.0
      %6318 = vmatpush1.msra.mxu0 %v6272
      %6319 = vmatprep.subr.mxu0 0.0
      %6320 = vmatpush2.msra.mxu0 0.0
      %6321 = vmatprep.subr.mxu0 0.0
      %6322 = vmatpush2.msra.mxu0 0.0
      %6323 = vmatprep.subr.mxu0 0.0
      %6324 = vmatpush2.msra.mxu0 0.0
      %6325 = vmatprep.subr.mxu0 0.0
      %6326 = vmatpush2.msra.mxu0 0.0
      %6327 = vmatprep.subr.mxu0 0.0
      %6328 = vmatpush2.msra.mxu0 0.0
      %6329 = vmatprep.subr.mxu0 0.0
      %6330 = vmatpush2.msra.mxu0 0.0
      %6331 = vmatprep.subr.mxu0 0.0
      %6332 = vmatpush2.msra.mxu0 0.0
      %6333 = vmatprep.subr.mxu0 0.0
      %6334 = vmatpush2.msra.mxu0 0.0
      %6335 = vmatprep.subr.mxu0 0.0
      %6336 = vmatpush2.msra.mxu0 0.0
      %6337 = vmatprep.subr.mxu0 0.0
      %6338 = vmatpush2.msra.mxu0 0.0
      %6339 = vmatprep.subr.mxu0 0.0
      %6340 = vmatpush2.msra.mxu0 0.0
      %6341 = vmatprep.subr.mxu0 0.0
      %6342 = vmatpush2.msra.mxu0 0.0
      %6343 = vmatprep.subr.mxu0 0.0
      %6344 = vmatpush2.msra.mxu0 0.0
      %6345 = vmatprep.subr.mxu0 0.0
      %6346 = vmatpush2.msra.mxu0 0.0
      %6347 = vmatprep.subr.mxu0 0.0
      %6348 = vmatpush2.msra.mxu0 0.0
      %6349 = vmatprep.subr.mxu0 0.0
      %6350 = vmatpush2.msra.mxu0 0.0
      %6351 = vmatprep.mubr.f32.mxu0 0.0
      %6352 = vmatmul.mubr.f32.gmra.mxu0 %v6282
      %v6353 = vpop.f32.mrf.mxu0
      %v6354 = vadd.f32 %v6280, %v6353
      %v6355 = vpop.f32.mrf.mxu0
      %6356 = vmatprep.mubr.f32.mxu0 0.0
      %6357 = vmatmul.mubr.f32.gmra.mxu0 %v6285
      %v6358 = vpop.f32.mrf.mxu0
      %v6359 = vadd.f32 %v6280, %v6358
      %v6360 = vpop.f32.mrf.mxu0
      %6361 = vdwg.mxu0
      %6362 = vst [vmem:[%s237] sm:$0xff] %v6354
      %6363 = vst [vmem:[%s237 + $0x8] sm:$0xff] %v6359
      %p6364 = scmp.lt.s32.totalorder %s15, 3
      %s6365 = scalar_select %p6364, %s15, 3
      %s6366 = smul.addr %s6365, 2
      %s6367 = smul.addr %s6366, 8
      %s6368 = scalar_lea.vmem %s4, %s6367
      // Predicated region
      $region37: #{forward.1} parent=35 // pred_check
        %p6369 = pneg %p132
      $region38: #{forward.1} parent=35 // pred_check_branch
        %6371 = sbr.rel (%p6369) target = $region40
      $region39: #{forward.1} parent=35 // pred_region
        _
      $region40: #{forward.1} parent=35 // pred_fallthru
        _
    $region36: #{forward.1} parent=5 // pred_fallthru
      _
    %p6372 = scmp.le.s32.totalorder 2, %s10
    // Predicated region
    $region41: #{forward.1} parent=5 // pred_check
      %p6373 = pneg %p6372
    $region42: #{forward.1} parent=5 // pred_check_branch
      %6375 = sbr.rel (%p6373) target = $region44
    $region43: #{forward.1} parent=5 // pred_region
      %s6376 = ssub.s32 %s10, 2
      // Predicated region
      $region45: #{forward.1} parent=43 // pred_check
        %p6377 = pneg %p138
      $region46: #{forward.1} parent=43 // pred_check_branch
        %6379 = sbr.rel (%p6377) target = $region48
      $region47: #{forward.1} parent=43 // pred_region
        %p6380 = scmp.lt.s32.totalorder %s16, 3
        %s6381 = scalar_select %p6380, %s16, 3
        %s6382 = smul.addr %s6381, 2
        %s6383 = smul.addr %s6382, 8
        %s6384 = scalar_lea.vmem %s4, %s6383
      $region48: #{forward.1} parent=43 // pred_fallthru
        _
    $region44: #{forward.1} parent=5 // pred_fallthru
      _
  $region6: #{forward.1} parent=0 // loop_footer
    %s14 = sadd.s32 1, %s10
  $region7: #{forward.1} parent=0 // loop_footer_branch
    %9 = sbr.rel target = $region3
  $region8: #{forward.1} parent=0 // loop_exit
    _

</llo_original>
